<compile_context>
chip_gen: v6e
topology: v6e:2x2x1
jax: 0.10.0
libtpu: 0.0.40
codegen_flags: <defaults>
</compile_context>

<pallas_src>
import functools

import jax
import jax.numpy as jnp
from jax.experimental import pallas as pl
from jax.experimental.pallas import tpu as pltpu


def value_flow_path_kernel(x_ref, adj_ref, mask_ref, enc_ref, head_ref,
                           out_ref, fwd_sc, bwd_sc,
                           *, enc_off, head_off,
                           num_stmts, num_nodes, hidden_dim, length):
    """Fused: batched GCN encoder -> masked mean||max pool -> fc -> BiGRU -> attention."""
    S, N, H = num_stmts, num_nodes, hidden_dim
    L = length
    f32 = jnp.float32

    def enc(name):
        r, nr, nc = enc_off[name]
        return enc_ref[r:r + nr, 0:nc]

    def head(name):
        r, nr, nc = head_off[name]
        return head_ref[r:r + nr, 0:nc]

    # ---------------- statement encoder: 2-layer GCN over all statements --------
    x = x_ref[...]                                    # (S*N, F)
    adj = adj_ref[...]                                # (S, N, N) normalized adjacency
    m3 = mask_ref[...]                                # (S, N, 1) 1.0 for real nodes

    w1, b1 = enc("w1"), enc("b1")
    w2, b2 = enc("w2"), enc("b2")

    # GCN layer 1: relu(Ahat @ (X W1) + b1), batched over statements
    h = jnp.dot(x, w1, preferred_element_type=f32).reshape(S, N, H)
    h = jnp.einsum('sij,sjh->sih', adj, h, preferred_element_type=f32)
    h = jnp.maximum(h + b1.reshape(1, 1, H), 0.0)
    # GCN layer 2
    h = jnp.dot(h.reshape(S * N, H), w2, preferred_element_type=f32).reshape(S, N, H)
    h = jnp.einsum('sij,sjh->sih', adj, h, preferred_element_type=f32)
    h = jnp.maximum(h + b2.reshape(1, 1, H), 0.0)     # (S, N, H)

    # masked global_mean_pool / global_max_pool over each statement's real nodes
    counts = jnp.maximum(jnp.sum(m3, axis=1), 1.0)    # (S, 1) guard empty statements
    mean_p = jnp.sum(h * m3, axis=1) * pl.reciprocal(counts, approx=True)   # (S, H)
    max_p = jnp.max(jnp.where(m3 > 0.0, h, -1e30), axis=1)                  # (S, H)

    # dropout(0.5) is identity at inference time.
    # TODO(synk): reference fc is nn.Linear(hidden_dim, output_dim) but is fed the
    # (1, 2*hidden_dim) mean||max vector; we keep the shape-consistent (2H, O)
    # weight, split into mean/max halves to avoid the (S, 2H) lane concat.
    encoded = (jnp.dot(mean_p, head("wfc_mean"), preferred_element_type=f32)
               + jnp.dot(max_p, head("wfc_max"), preferred_element_type=f32)
               + head("bfc"))                         # (S, O)

    # ---------------- BiGRU over first `length` statements (batch = 1) ----------
    seq = encoded[:L]                                 # (L, O)
    # hoisted input-to-hidden projections for both directions (gate order r,z,n)
    gi = jnp.dot(seq, head("wih"), preferred_element_type=f32) + head("bih")  # (L, 6H)
    gi_f = gi[:, 0:3 * H]                             # sliced once, outside the loop
    gi_b = gi[:, 3 * H:6 * H]

    whh_f, bhh_f = head("whh_f"), head("bhh_f")       # (H, 3H), (1, 3H)
    whh_b, bhh_b = head("whh_b"), head("bhh_b")

    def gru_cell(gi_row, gh, hp):                     # (1,3H), (1,3H), (1,H) -> (1,H)
        pre = gi_row + gh
        r = jax.nn.sigmoid(pre[:, 0:H])
        z = jax.nn.sigmoid(pre[:, H:2 * H])
        n = jnp.tanh(gi_row[:, 2 * H:3 * H] + r * gh[:, 2 * H:3 * H])
        return (1.0 - z) * n + z * hp

    h_f = jnp.zeros((1, H), f32)
    h_b = jnp.zeros((1, H), f32)
    for i in range(L):                                # static unroll (L is small)
        j = L - 1 - i
        gh_f = jnp.dot(h_f, whh_f, preferred_element_type=f32) + bhh_f
        gh_b = jnp.dot(h_b, whh_b, preferred_element_type=f32) + bhh_b
        h_f = gru_cell(gi_f[i:i + 1, :], gh_f, h_f)
        h_b = gru_cell(gi_b[j:j + 1, :], gh_b, h_b)
        fwd_sc[i:i + 1, :] = h_f                      # cheap sublane row store
        bwd_sc[j:j + 1, :] = h_b                      # backward output at its timestep

    f_seq = fwd_sc[0:L, :]                            # (L, H)
    b_seq = bwd_sc[0:L, :]                            # (L, H)

    # ---------------- attention: softmax over time of Linear(2H -> 1) -----------
    scores = (jnp.dot(f_seq, head("watt_f"), preferred_element_type=f32)
              + jnp.dot(b_seq, head("watt_b"), preferred_element_type=f32)
              + head("batt"))                         # (L, 1)
    scores = scores - jnp.max(scores, axis=0, keepdims=True)
    e = jnp.exp(scores)
    attn = e * pl.reciprocal(jnp.sum(e, axis=0, keepdims=True), approx=True)
    out_f = jnp.sum(attn * f_seq, axis=0, keepdims=True)     # (1, H)
    out_b = jnp.sum(attn * b_seq, axis=0, keepdims=True)     # (1, H)
    out_ref[...] = jnp.concatenate([out_f, out_b], axis=1)   # (1, 2H), one final concat


def _pack_blocks(entries, width):
    """Pack small 2-D params into one (rows, width) slab; rows padded to x8."""
    bufs, offsets, r = [], {}, 0
    for name, a in entries:
        a = jnp.asarray(a, jnp.float32)
        nr, nc = a.shape
        pr = ((nr + 7) // 8) * 8
        buf = jnp.zeros((pr, width), jnp.float32).at[:nr, :nc].set(a)
        bufs.append(buf)
        offsets[name] = (r, nr, nc)
        r += pr
    return jnp.concatenate(bufs, axis=0), offsets


def value_flow_path_encoder(x, norm_adj, node_mask, length, params):
    """x: (S, N, F); norm_adj: (S, N, N) GCN-normalized; node_mask: (S, N); length: python int."""
    S, N, F = x.shape
    H = params["gcn_b1"].shape[1]

    x_flat = x.reshape(S * N, F).astype(jnp.float32)
    mask3 = node_mask.reshape(S, N, 1).astype(jnp.float32)
    adj = norm_adj.astype(jnp.float32)                # stays batched (S, N, N)

    # ---- glue: pack the 15 tiny weight/bias operands into 2 slabs (2 DMAs) ----
    enc_pack, enc_off = _pack_blocks(
        [("w1", params["gcn_w1"]), ("b1", params["gcn_b1"]),
         ("w2", params["gcn_w2"]), ("b2", params["gcn_b2"])], H)

    wih = jnp.concatenate([params["gru_wih_f"], params["gru_wih_b"]], axis=1)   # (O, 6H)
    bih = jnp.concatenate([params["gru_bih_f"], params["gru_bih_b"]], axis=1)   # (1, 6H)
    head_pack, head_off = _pack_blocks(
        [("wfc_mean", params["fc_w"][:H]), ("wfc_max", params["fc_w"][H:]),
         ("bfc", params["fc_b"]),
         ("wih", wih), ("bih", bih),
         ("whh_f", params["gru_whh_f"]), ("bhh_f", params["gru_bhh_f"]),
         ("whh_b", params["gru_whh_b"]), ("bhh_b", params["gru_bhh_b"]),
         ("watt_f", params["att_w"][:H]), ("watt_b", params["att_w"][H:]),
         ("batt", params["att_b"])], 6 * H)

    kernel = functools.partial(
        value_flow_path_kernel, enc_off=enc_off, head_off=head_off,
        num_stmts=S, num_nodes=N, hidden_dim=H, length=int(length))

    vmem = pl.BlockSpec(memory_space=pltpu.MemorySpace.VMEM)
    out = pl.pallas_call(
        kernel,
        out_shape=jax.ShapeDtypeStruct((1, 2 * H), jnp.float32),
        in_specs=[vmem] * 5,
        out_specs=vmem,
        scratch_shapes=[pltpu.VMEM((S, H), jnp.float32),    # fwd GRU outputs
                        pltpu.VMEM((S, H), jnp.float32)],   # bwd GRU outputs
    )(x_flat, adj, mask3, enc_pack, head_pack)
    return out


if __name__ == "__main__":
    key = jax.random.PRNGKey(0)
    F, H, O = 8, 32, 16      # num_node_features, hidden_dim, output_dim
    S, N = 8, 8              # statements (seq len), padded nodes per statement
    length = S               # lengths = [S] for the single packed batch element

    keys = jax.random.split(key, 18)

    def init(k, shape, scale=0.1):
        return (scale * jax.random.normal(k, shape)).astype(jnp.float32)

    params = {
        "gcn_w1": init(keys[0], (F, H)),
        "gcn_b1": init(keys[1], (1, H)),
        "gcn_w2": init(keys[2], (H, H)),
        "gcn_b2": init(keys[3], (1, H)),
        # TODO(synk): reference fc is nn.Linear(hidden_dim, output_dim) but is fed a
        # (1, 2*hidden_dim) vector; we use the shape-consistent (2H, O) weight.
        "fc_w": init(keys[4], (2 * H, O)),
        "fc_b": init(keys[5], (1, O)),
        # GRU weights stored transposed for right-multiplication: (in, 3H), (H, 3H)
        "gru_wih_f": init(keys[6], (O, 3 * H)),
        "gru_whh_f": init(keys[7], (H, 3 * H)),
        "gru_bih_f": init(keys[8], (1, 3 * H)),
        "gru_bhh_f": init(keys[9], (1, 3 * H)),
        "gru_wih_b": init(keys[10], (O, 3 * H)),
        "gru_whh_b": init(keys[11], (H, 3 * H)),
        "gru_bih_b": init(keys[12], (1, 3 * H)),
        "gru_bhh_b": init(keys[13], (1, 3 * H)),
        # attention Linear(2H -> 1), weight transposed to (2H, 1)
        "att_w": init(keys[14], (2 * H, 1)),
        "att_b": jnp.zeros((1, 1), jnp.float32),
    }

    kx, ka, kn = keys[15], keys[16], keys[17]

    # per-statement real node counts (exercises pad-node masking in the pooling)
    counts = jax.random.randint(kn, (S,), minval=4, maxval=N + 1)
    node_mask = (jnp.arange(N)[None, :] < counts[:, None]).astype(jnp.float32)  # (S, N)

    x = jax.random.normal(kx, (S, N, F), jnp.float32) * node_mask[:, :, None]

    # random undirected graphs over real nodes -> GCN-normalized adjacency w/ self loops
    a = (jax.random.uniform(ka, (S, N, N)) < 0.3).astype(jnp.float32)
    a = jnp.maximum(a, jnp.transpose(a, (0, 2, 1)))
    a = a * node_mask[:, :, None] * node_mask[:, None, :]
    a = a * (1.0 - jnp.eye(N, dtype=jnp.float32)[None])             # clear any random diag
    a = a + jnp.eye(N, dtype=jnp.float32)[None] * node_mask[:, :, None]   # A + I (real nodes)
    deg = jnp.sum(a, axis=-1)
    dinv = jnp.where(deg > 0, 1.0 / jnp.sqrt(jnp.maximum(deg, 1e-12)), 0.0)
    norm_adj = a * dinv[:, :, None] * dinv[:, None, :]               # D^-1/2 (A+I) D^-1/2

    out = value_flow_path_encoder(x, norm_adj, node_mask, length, params)
    out = jax.block_until_ready(out)
    assert out.shape == (1, 2 * H) and out.dtype == jnp.float32
    assert bool(jnp.all(jnp.isfinite(out)))
    print("KERNEL_OK")
</pallas_src>

<mosaic_0001>
module attributes {stable_mosaic.version = 11 : i64} {
  func.func @value_flow_path_kernel(%arg0: memref<64x8xf32, #tpu.memory_space<vmem>>, %arg1: memref<8x8x8xf32, #tpu.memory_space<vmem>>, %arg2: memref<8x8x1xf32, #tpu.memory_space<vmem>>, %arg3: memref<56x32xf32, #tpu.memory_space<vmem>>, %arg4: memref<248x192xf32, #tpu.memory_space<vmem>>, %arg5: memref<1x64xf32, #tpu.memory_space<vmem>>, %arg6: memref<8x32xf32, #tpu.memory_space<vmem>>, %arg7: memref<8x32xf32, #tpu.memory_space<vmem>>) attributes {dimension_semantics = [], scalar_prefetch = 0 : i64, scratch_operands = 2 : i64, tpu.core_type = #tpu.core_type<tc>} {
    %c0 = arith.constant 0 : index
    %c0_0 = arith.constant 0 : index
    %0 = vector.load %arg0[%c0, %c0_0] : memref<64x8xf32, #tpu.memory_space<vmem>>, vector<64x8xf32>
    %c0_1 = arith.constant 0 : index
    %c0_2 = arith.constant 0 : index
    %c0_3 = arith.constant 0 : index
    %1 = vector.load %arg1[%c0_1, %c0_2, %c0_3] : memref<8x8x8xf32, #tpu.memory_space<vmem>>, vector<8x8x8xf32>
    %c0_4 = arith.constant 0 : index
    %c0_5 = arith.constant 0 : index
    %c0_6 = arith.constant 0 : index
    %2 = vector.load %arg2[%c0_4, %c0_5, %c0_6] : memref<8x8x1xf32, #tpu.memory_space<vmem>>, vector<8x8x1xf32>
    %c0_7 = arith.constant 0 : index
    %c0_8 = arith.constant 0 : index
    %3 = vector.load %arg3[%c0_7, %c0_8] : memref<56x32xf32, #tpu.memory_space<vmem>>, vector<8x32xf32>
    %c8 = arith.constant 8 : index
    %c0_9 = arith.constant 0 : index
    %4 = vector.load %arg3[%c8, %c0_9] : memref<56x32xf32, #tpu.memory_space<vmem>>, vector<1x32xf32>
    %c16 = arith.constant 16 : index
    %c0_10 = arith.constant 0 : index
    %5 = vector.load %arg3[%c16, %c0_10] : memref<56x32xf32, #tpu.memory_space<vmem>>, vector<32x32xf32>
    %c48 = arith.constant 48 : index
    %c0_11 = arith.constant 0 : index
    %6 = vector.load %arg3[%c48, %c0_11] : memref<56x32xf32, #tpu.memory_space<vmem>>, vector<1x32xf32>
    %cst = arith.constant dense<0.000000e+00> : vector<64x32xf32>
    %7 = tpu.matmul %0, %3, %cst {dimension_numbers = #tpu.dot_dimension_numbers<[1], [0], [0], [1], [0, 0, 1, 1], [], []>} : vector<64x8xf32>, vector<8x32xf32>, vector<64x32xf32> -> vector<64x32xf32>
    %8 = vector.shape_cast %7 : vector<64x32xf32> to vector<8x8x32xf32>
    "tpu.trace_start"() <{level = 10 : i32, message = "sij,sjh->sih"}> : () -> ()
    %cst_12 = arith.constant dense<0.000000e+00> : vector<8x8x32xf32>
    %9 = tpu.matmul %1, %8, %cst_12 {dimension_numbers = #tpu.dot_dimension_numbers<[2], [1], [1], [2], [0, 0, 0, 1, 1, 2], [0], [0]>} : vector<8x8x8xf32>, vector<8x8x32xf32>, vector<8x8x32xf32> -> vector<8x8x32xf32>
    "tpu.trace_stop"() : () -> ()
    %10 = vector.shape_cast %4 : vector<1x32xf32> to vector<1x1x32xf32>
    %11 = vector.broadcast %10 : vector<1x1x32xf32> to vector<8x8x32xf32>
    %12 = arith.addf %9, %11 : vector<8x8x32xf32>
    %cst_13 = arith.constant 0.000000e+00 : f32
    %13 = vector.broadcast %cst_13 : f32 to vector<8x8x32xf32>
    %14 = arith.maximumf %12, %13 : vector<8x8x32xf32>
    %15 = vector.shape_cast %14 : vector<8x8x32xf32> to vector<64x32xf32>
    %cst_14 = arith.constant dense<0.000000e+00> : vector<64x32xf32>
    %16 = tpu.matmul %15, %5, %cst_14 {dimension_numbers = #tpu.dot_dimension_numbers<[1], [0], [0], [1], [0, 0, 1, 1], [], []>} : vector<64x32xf32>, vector<32x32xf32>, vector<64x32xf32> -> vector<64x32xf32>
    %17 = vector.shape_cast %16 : vector<64x32xf32> to vector<8x8x32xf32>
    "tpu.trace_start"() <{level = 10 : i32, message = "sij,sjh->sih"}> : () -> ()
    %cst_15 = arith.constant dense<0.000000e+00> : vector<8x8x32xf32>
    %18 = tpu.matmul %1, %17, %cst_15 {dimension_numbers = #tpu.dot_dimension_numbers<[2], [1], [1], [2], [0, 0, 0, 1, 1, 2], [0], [0]>} : vector<8x8x8xf32>, vector<8x8x32xf32>, vector<8x8x32xf32> -> vector<8x8x32xf32>
    "tpu.trace_stop"() : () -> ()
    %19 = vector.shape_cast %6 : vector<1x32xf32> to vector<1x1x32xf32>
    %20 = vector.broadcast %19 : vector<1x1x32xf32> to vector<8x8x32xf32>
    %21 = arith.addf %18, %20 : vector<8x8x32xf32>
    %cst_16 = arith.constant 0.000000e+00 : f32
    %22 = vector.broadcast %cst_16 : f32 to vector<8x8x32xf32>
    %23 = arith.maximumf %21, %22 : vector<8x8x32xf32>
    %cst_17 = arith.constant dense<0.000000e+00> : vector<8x1xf32>
    %24 = vector.multi_reduction <add>, %2, %cst_17 [1] : vector<8x8x1xf32> to vector<8x1xf32>
    %cst_18 = arith.constant 1.000000e+00 : f32
    %25 = vector.broadcast %cst_18 : f32 to vector<8x1xf32>
    %26 = arith.maximumf %24, %25 : vector<8x1xf32>
    %27 = vector.broadcast %2 : vector<8x8x1xf32> to vector<8x8x32xf32>
    %28 = arith.mulf %23, %27 : vector<8x8x32xf32>
    %cst_19 = arith.constant dense<0.000000e+00> : vector<8x32xf32>
    %29 = vector.multi_reduction <add>, %28, %cst_19 [1] : vector<8x8x32xf32> to vector<8x32xf32>
    %30 = tpu.reciprocal %26 {approx = true} : vector<8x1xf32> -> vector<8x1xf32>
    %31 = vector.broadcast %30 : vector<8x1xf32> to vector<8x32xf32>
    %32 = arith.mulf %29, %31 : vector<8x32xf32>
    %cst_20 = arith.constant 0.000000e+00 : f32
    %33 = vector.broadcast %cst_20 : f32 to vector<8x8x1xf32>
    %34 = arith.cmpf ogt, %2, %33 : vector<8x8x1xf32>
    %cst_21 = arith.constant -1.000000e+30 : f32
    %35 = vector.shape_cast %34 : vector<8x8x1xi1> to vector<8x8x1xi1>
    %36 = vector.broadcast %35 : vector<8x8x1xi1> to vector<8x8x32xi1>
    %37 = vector.broadcast %cst_21 : f32 to vector<8x8x32xf32>
    %38 = arith.select %36, %23, %37 : vector<8x8x32xi1>, vector<8x8x32xf32>
    %cst_22 = arith.constant dense<0xFF800000> : vector<8x32xf32>
    %39 = vector.multi_reduction <maximumf>, %38, %cst_22 [1] : vector<8x8x32xf32> to vector<8x32xf32>
    %c0_23 = arith.constant 0 : index
    %c0_24 = arith.constant 0 : index
    %40 = vector.load %arg4[%c0_23, %c0_24] : memref<248x192xf32, #tpu.memory_space<vmem>>, vector<32x16xf32>
    %cst_25 = arith.constant dense<0.000000e+00> : vector<8x16xf32>
    %41 = tpu.matmul %32, %40, %cst_25 {dimension_numbers = #tpu.dot_dimension_numbers<[1], [0], [0], [1], [0, 0, 1, 1], [], []>} : vector<8x32xf32>, vector<32x16xf32>, vector<8x16xf32> -> vector<8x16xf32>
    %c32 = arith.constant 32 : index
    %c0_26 = arith.constant 0 : index
    %42 = vector.load %arg4[%c32, %c0_26] : memref<248x192xf32, #tpu.memory_space<vmem>>, vector<32x16xf32>
    %cst_27 = arith.constant dense<0.000000e+00> : vector<8x16xf32>
    %43 = tpu.matmul %39, %42, %cst_27 {dimension_numbers = #tpu.dot_dimension_numbers<[1], [0], [0], [1], [0, 0, 1, 1], [], []>} : vector<8x32xf32>, vector<32x16xf32>, vector<8x16xf32> -> vector<8x16xf32>
    %44 = arith.addf %41, %43 : vector<8x16xf32>
    %c64 = arith.constant 64 : index
    %c0_28 = arith.constant 0 : index
    %45 = vector.load %arg4[%c64, %c0_28] : memref<248x192xf32, #tpu.memory_space<vmem>>, vector<1x16xf32>
    %46 = vector.broadcast %45 : vector<1x16xf32> to vector<8x16xf32>
    %47 = arith.addf %44, %46 : vector<8x16xf32>
    %c72 = arith.constant 72 : index
    %c0_29 = arith.constant 0 : index
    %48 = vector.load %arg4[%c72, %c0_29] : memref<248x192xf32, #tpu.memory_space<vmem>>, vector<16x192xf32>
    %cst_30 = arith.constant dense<0.000000e+00> : vector<8x192xf32>
    %49 = tpu.matmul %47, %48, %cst_30 {dimension_numbers = #tpu.dot_dimension_numbers<[1], [0], [0], [1], [0, 0, 1, 1], [], []>} : vector<8x16xf32>, vector<16x192xf32>, vector<8x192xf32> -> vector<8x192xf32>
    %c88 = arith.constant 88 : index
    %c0_31 = arith.constant 0 : index
    %50 = vector.load %arg4[%c88, %c0_31] : memref<248x192xf32, #tpu.memory_space<vmem>>, vector<1x192xf32>
    %51 = vector.broadcast %50 : vector<1x192xf32> to vector<8x192xf32>
    %52 = arith.addf %49, %51 : vector<8x192xf32>
    %53 = vector.extract_strided_slice %52 {offsets = [0, 0], sizes = [8, 96], strides = [1, 1]} : vector<8x192xf32> to vector<8x96xf32>
    %54 = vector.extract_strided_slice %52 {offsets = [0, 96], sizes = [8, 96], strides = [1, 1]} : vector<8x192xf32> to vector<8x96xf32>
    %c96 = arith.constant 96 : index
    %c0_32 = arith.constant 0 : index
    %55 = vector.load %arg4[%c96, %c0_32] : memref<248x192xf32, #tpu.memory_space<vmem>>, vector<32x96xf32>
    %c128 = arith.constant 128 : index
    %c0_33 = arith.constant 0 : index
    %56 = vector.load %arg4[%c128, %c0_33] : memref<248x192xf32, #tpu.memory_space<vmem>>, vector<1x96xf32>
    %c136 = arith.constant 136 : index
    %c0_34 = arith.constant 0 : index
    %57 = vector.load %arg4[%c136, %c0_34] : memref<248x192xf32, #tpu.memory_space<vmem>>, vector<32x96xf32>
    %c168 = arith.constant 168 : index
    %c0_35 = arith.constant 0 : index
    %58 = vector.load %arg4[%c168, %c0_35] : memref<248x192xf32, #tpu.memory_space<vmem>>, vector<1x96xf32>
    %cst_36 = arith.constant 0.000000e+00 : f32
    %59 = vector.broadcast %cst_36 : f32 to vector<1x32xf32>
    %cst_37 = arith.constant 0.000000e+00 : f32
    %60 = vector.broadcast %cst_37 : f32 to vector<1x32xf32>
    %cst_38 = arith.constant dense<0.000000e+00> : vector<1x96xf32>
    %61 = tpu.matmul %59, %55, %cst_38 {dimension_numbers = #tpu.dot_dimension_numbers<[1], [0], [0], [1], [0, 0, 1, 1], [], []>} : vector<1x32xf32>, vector<32x96xf32>, vector<1x96xf32> -> vector<1x96xf32>
    %62 = arith.addf %61, %56 : vector<1x96xf32>
    %cst_39 = arith.constant dense<0.000000e+00> : vector<1x96xf32>
    %63 = tpu.matmul %60, %57, %cst_39 {dimension_numbers = #tpu.dot_dimension_numbers<[1], [0], [0], [1], [0, 0, 1, 1], [], []>} : vector<1x32xf32>, vector<32x96xf32>, vector<1x96xf32> -> vector<1x96xf32>
    %64 = arith.addf %63, %58 : vector<1x96xf32>
    %65 = vector.extract_strided_slice %53 {offsets = [0, 0], sizes = [1, 96], strides = [1, 1]} : vector<8x96xf32> to vector<1x96xf32>
    %66 = arith.addf %65, %62 : vector<1x96xf32>
    %67 = vector.extract_strided_slice %66 {offsets = [0, 0], sizes = [1, 32], strides = [1, 1]} : vector<1x96xf32> to vector<1x32xf32>
    %68 = arith.negf %67 : vector<1x32xf32>
    %69 = math.exp %68 : vector<1x32xf32>
    %cst_40 = arith.constant 1.000000e+00 : f32
    %70 = vector.broadcast %cst_40 : f32 to vector<1x32xf32>
    %71 = arith.addf %70, %69 : vector<1x32xf32>
    %72 = arith.divf %70, %71 : vector<1x32xf32>
    %73 = vector.extract_strided_slice %66 {offsets = [0, 32], sizes = [1, 32], strides = [1, 1]} : vector<1x96xf32> to vector<1x32xf32>
    %74 = arith.negf %73 : vector<1x32xf32>
    %75 = math.exp %74 : vector<1x32xf32>
    %cst_41 = arith.constant 1.000000e+00 : f32
    %76 = vector.broadcast %cst_41 : f32 to vector<1x32xf32>
    %77 = arith.addf %76, %75 : vector<1x32xf32>
    %78 = arith.divf %76, %77 : vector<1x32xf32>
    %79 = vector.extract_strided_slice %65 {offsets = [0, 64], sizes = [1, 32], strides = [1, 1]} : vector<1x96xf32> to vector<1x32xf32>
    %80 = vector.extract_strided_slice %62 {offsets = [0, 64], sizes = [1, 32], strides = [1, 1]} : vector<1x96xf32> to vector<1x32xf32>
    %81 = arith.mulf %72, %80 : vector<1x32xf32>
    %82 = arith.addf %79, %81 : vector<1x32xf32>
    %83 = math.tanh %82 : vector<1x32xf32>
    %cst_42 = arith.constant 1.000000e+00 : f32
    %84 = vector.broadcast %cst_42 : f32 to vector<1x32xf32>
    %85 = arith.subf %84, %78 : vector<1x32xf32>
    %86 = arith.mulf %85, %83 : vector<1x32xf32>
    %87 = arith.mulf %78, %59 : vector<1x32xf32>
    %88 = arith.addf %86, %87 : vector<1x32xf32>
    %89 = vector.extract_strided_slice %54 {offsets = [7, 0], sizes = [1, 96], strides = [1, 1]} : vector<8x96xf32> to vector<1x96xf32>
    %90 = arith.addf %89, %64 : vector<1x96xf32>
    %91 = vector.extract_strided_slice %90 {offsets = [0, 0], sizes = [1, 32], strides = [1, 1]} : vector<1x96xf32> to vector<1x32xf32>
    %92 = arith.negf %91 : vector<1x32xf32>
    %93 = math.exp %92 : vector<1x32xf32>
    %cst_43 = arith.constant 1.000000e+00 : f32
    %94 = vector.broadcast %cst_43 : f32 to vector<1x32xf32>
    %95 = arith.addf %94, %93 : vector<1x32xf32>
    %96 = arith.divf %94, %95 : vector<1x32xf32>
    %97 = vector.extract_strided_slice %90 {offsets = [0, 32], sizes = [1, 32], strides = [1, 1]} : vector<1x96xf32> to vector<1x32xf32>
    %98 = arith.negf %97 : vector<1x32xf32>
    %99 = math.exp %98 : vector<1x32xf32>
    %cst_44 = arith.constant 1.000000e+00 : f32
    %100 = vector.broadcast %cst_44 : f32 to vector<1x32xf32>
    %101 = arith.addf %100, %99 : vector<1x32xf32>
    %102 = arith.divf %100, %101 : vector<1x32xf32>
    %103 = vector.extract_strided_slice %89 {offsets = [0, 64], sizes = [1, 32], strides = [1, 1]} : vector<1x96xf32> to vector<1x32xf32>
    %104 = vector.extract_strided_slice %64 {offsets = [0, 64], sizes = [1, 32], strides = [1, 1]} : vector<1x96xf32> to vector<1x32xf32>
    %105 = arith.mulf %96, %104 : vector<1x32xf32>
    %106 = arith.addf %103, %105 : vector<1x32xf32>
    %107 = math.tanh %106 : vector<1x32xf32>
    %cst_45 = arith.constant 1.000000e+00 : f32
    %108 = vector.broadcast %cst_45 : f32 to vector<1x32xf32>
    %109 = arith.subf %108, %102 : vector<1x32xf32>
    %110 = arith.mulf %109, %107 : vector<1x32xf32>
    %111 = arith.mulf %102, %60 : vector<1x32xf32>
    %112 = arith.addf %110, %111 : vector<1x32xf32>
    %c0_46 = arith.constant 0 : index
    %c0_47 = arith.constant 0 : index
    %113 = vector.load %arg6[%c0_46, %c0_47] : memref<8x32xf32, #tpu.memory_space<vmem>>, vector<1x32xf32>
    tpu.vector_store %arg6[%c0_46, %c0_47], %88 {strides = array<i32>} : memref<8x32xf32, #tpu.memory_space<vmem>>, vector<1x32xf32>,
    %c7 = arith.constant 7 : index
    %c0_48 = arith.constant 0 : index
    %114 = vector.load %arg7[%c7, %c0_48] : memref<8x32xf32, #tpu.memory_space<vmem>>, vector<1x32xf32>
    tpu.vector_store %arg7[%c7, %c0_48], %112 {strides = array<i32>} : memref<8x32xf32, #tpu.memory_space<vmem>>, vector<1x32xf32>,
    %cst_49 = arith.constant dense<0.000000e+00> : vector<1x96xf32>
    %115 = tpu.matmul %88, %55, %cst_49 {dimension_numbers = #tpu.dot_dimension_numbers<[1], [0], [0], [1], [0, 0, 1, 1], [], []>} : vector<1x32xf32>, vector<32x96xf32>, vector<1x96xf32> -> vector<1x96xf32>
    %116 = arith.addf %115, %56 : vector<1x96xf32>
    %cst_50 = arith.constant dense<0.000000e+00> : vector<1x96xf32>
    %117 = tpu.matmul %112, %57, %cst_50 {dimension_numbers = #tpu.dot_dimension_numbers<[1], [0], [0], [1], [0, 0, 1, 1], [], []>} : vector<1x32xf32>, vector<32x96xf32>, vector<1x96xf32> -> vector<1x96xf32>
    %118 = arith.addf %117, %58 : vector<1x96xf32>
    %119 = vector.extract_strided_slice %53 {offsets = [1, 0], sizes = [1, 96], strides = [1, 1]} : vector<8x96xf32> to vector<1x96xf32>
    %120 = arith.addf %119, %116 : vector<1x96xf32>
    %121 = vector.extract_strided_slice %120 {offsets = [0, 0], sizes = [1, 32], strides = [1, 1]} : vector<1x96xf32> to vector<1x32xf32>
    %122 = arith.negf %121 : vector<1x32xf32>
    %123 = math.exp %122 : vector<1x32xf32>
    %cst_51 = arith.constant 1.000000e+00 : f32
    %124 = vector.broadcast %cst_51 : f32 to vector<1x32xf32>
    %125 = arith.addf %124, %123 : vector<1x32xf32>
    %126 = arith.divf %124, %125 : vector<1x32xf32>
    %127 = vector.extract_strided_slice %120 {offsets = [0, 32], sizes = [1, 32], strides = [1, 1]} : vector<1x96xf32> to vector<1x32xf32>
    %128 = arith.negf %127 : vector<1x32xf32>
    %129 = math.exp %128 : vector<1x32xf32>
    %cst_52 = arith.constant 1.000000e+00 : f32
    %130 = vector.broadcast %cst_52 : f32 to vector<1x32xf32>
    %131 = arith.addf %130, %129 : vector<1x32xf32>
    %132 = arith.divf %130, %131 : vector<1x32xf32>
    %133 = vector.extract_strided_slice %119 {offsets = [0, 64], sizes = [1, 32], strides = [1, 1]} : vector<1x96xf32> to vector<1x32xf32>
    %134 = vector.extract_strided_slice %116 {offsets = [0, 64], sizes = [1, 32], strides = [1, 1]} : vector<1x96xf32> to vector<1x32xf32>
    %135 = arith.mulf %126, %134 : vector<1x32xf32>
    %136 = arith.addf %133, %135 : vector<1x32xf32>
    %137 = math.tanh %136 : vector<1x32xf32>
    %cst_53 = arith.constant 1.000000e+00 : f32
    %138 = vector.broadcast %cst_53 : f32 to vector<1x32xf32>
    %139 = arith.subf %138, %132 : vector<1x32xf32>
    %140 = arith.mulf %139, %137 : vector<1x32xf32>
    %141 = arith.mulf %132, %88 : vector<1x32xf32>
    %142 = arith.addf %140, %141 : vector<1x32xf32>
    %143 = vector.extract_strided_slice %54 {offsets = [6, 0], sizes = [1, 96], strides = [1, 1]} : vector<8x96xf32> to vector<1x96xf32>
    %144 = arith.addf %143, %118 : vector<1x96xf32>
    %145 = vector.extract_strided_slice %144 {offsets = [0, 0], sizes = [1, 32], strides = [1, 1]} : vector<1x96xf32> to vector<1x32xf32>
    %146 = arith.negf %145 : vector<1x32xf32>
    %147 = math.exp %146 : vector<1x32xf32>
    %cst_54 = arith.constant 1.000000e+00 : f32
    %148 = vector.broadcast %cst_54 : f32 to vector<1x32xf32>
    %149 = arith.addf %148, %147 : vector<1x32xf32>
    %150 = arith.divf %148, %149 : vector<1x32xf32>
    %151 = vector.extract_strided_slice %144 {offsets = [0, 32], sizes = [1, 32], strides = [1, 1]} : vector<1x96xf32> to vector<1x32xf32>
    %152 = arith.negf %151 : vector<1x32xf32>
    %153 = math.exp %152 : vector<1x32xf32>
    %cst_55 = arith.constant 1.000000e+00 : f32
    %154 = vector.broadcast %cst_55 : f32 to vector<1x32xf32>
    %155 = arith.addf %154, %153 : vector<1x32xf32>
    %156 = arith.divf %154, %155 : vector<1x32xf32>
    %157 = vector.extract_strided_slice %143 {offsets = [0, 64], sizes = [1, 32], strides = [1, 1]} : vector<1x96xf32> to vector<1x32xf32>
    %158 = vector.extract_strided_slice %118 {offsets = [0, 64], sizes = [1, 32], strides = [1, 1]} : vector<1x96xf32> to vector<1x32xf32>
    %159 = arith.mulf %150, %158 : vector<1x32xf32>
    %160 = arith.addf %157, %159 : vector<1x32xf32>
    %161 = math.tanh %160 : vector<1x32xf32>
    %cst_56 = arith.constant 1.000000e+00 : f32
    %162 = vector.broadcast %cst_56 : f32 to vector<1x32xf32>
    %163 = arith.subf %162, %156 : vector<1x32xf32>
    %164 = arith.mulf %163, %161 : vector<1x32xf32>
    %165 = arith.mulf %156, %112 : vector<1x32xf32>
    %166 = arith.addf %164, %165 : vector<1x32xf32>
    %c1 = arith.constant 1 : index
    %c0_57 = arith.constant 0 : index
    %167 = vector.load %arg6[%c1, %c0_57] : memref<8x32xf32, #tpu.memory_space<vmem>>, vector<1x32xf32>
    tpu.vector_store %arg6[%c1, %c0_57], %142 {strides = array<i32>} : memref<8x32xf32, #tpu.memory_space<vmem>>, vector<1x32xf32>,
    %c6 = arith.constant 6 : index
    %c0_58 = arith.constant 0 : index
    %168 = vector.load %arg7[%c6, %c0_58] : memref<8x32xf32, #tpu.memory_space<vmem>>, vector<1x32xf32>
    tpu.vector_store %arg7[%c6, %c0_58], %166 {strides = array<i32>} : memref<8x32xf32, #tpu.memory_space<vmem>>, vector<1x32xf32>,
    %cst_59 = arith.constant dense<0.000000e+00> : vector<1x96xf32>
    %169 = tpu.matmul %142, %55, %cst_59 {dimension_numbers = #tpu.dot_dimension_numbers<[1], [0], [0], [1], [0, 0, 1, 1], [], []>} : vector<1x32xf32>, vector<32x96xf32>, vector<1x96xf32> -> vector<1x96xf32>
    %170 = arith.addf %169, %56 : vector<1x96xf32>
    %cst_60 = arith.constant dense<0.000000e+00> : vector<1x96xf32>
    %171 = tpu.matmul %166, %57, %cst_60 {dimension_numbers = #tpu.dot_dimension_numbers<[1], [0], [0], [1], [0, 0, 1, 1], [], []>} : vector<1x32xf32>, vector<32x96xf32>, vector<1x96xf32> -> vector<1x96xf32>
    %172 = arith.addf %171, %58 : vector<1x96xf32>
    %173 = vector.extract_strided_slice %53 {offsets = [2, 0], sizes = [1, 96], strides = [1, 1]} : vector<8x96xf32> to vector<1x96xf32>
    %174 = arith.addf %173, %170 : vector<1x96xf32>
    %175 = vector.extract_strided_slice %174 {offsets = [0, 0], sizes = [1, 32], strides = [1, 1]} : vector<1x96xf32> to vector<1x32xf32>
    %176 = arith.negf %175 : vector<1x32xf32>
    %177 = math.exp %176 : vector<1x32xf32>
    %cst_61 = arith.constant 1.000000e+00 : f32
    %178 = vector.broadcast %cst_61 : f32 to vector<1x32xf32>
    %179 = arith.addf %178, %177 : vector<1x32xf32>
    %180 = arith.divf %178, %179 : vector<1x32xf32>
    %181 = vector.extract_strided_slice %174 {offsets = [0, 32], sizes = [1, 32], strides = [1, 1]} : vector<1x96xf32> to vector<1x32xf32>
    %182 = arith.negf %181 : vector<1x32xf32>
    %183 = math.exp %182 : vector<1x32xf32>
    %cst_62 = arith.constant 1.000000e+00 : f32
    %184 = vector.broadcast %cst_62 : f32 to vector<1x32xf32>
    %185 = arith.addf %184, %183 : vector<1x32xf32>
    %186 = arith.divf %184, %185 : vector<1x32xf32>
    %187 = vector.extract_strided_slice %173 {offsets = [0, 64], sizes = [1, 32], strides = [1, 1]} : vector<1x96xf32> to vector<1x32xf32>
    %188 = vector.extract_strided_slice %170 {offsets = [0, 64], sizes = [1, 32], strides = [1, 1]} : vector<1x96xf32> to vector<1x32xf32>
    %189 = arith.mulf %180, %188 : vector<1x32xf32>
    %190 = arith.addf %187, %189 : vector<1x32xf32>
    %191 = math.tanh %190 : vector<1x32xf32>
    %cst_63 = arith.constant 1.000000e+00 : f32
    %192 = vector.broadcast %cst_63 : f32 to vector<1x32xf32>
    %193 = arith.subf %192, %186 : vector<1x32xf32>
    %194 = arith.mulf %193, %191 : vector<1x32xf32>
    %195 = arith.mulf %186, %142 : vector<1x32xf32>
    %196 = arith.addf %194, %195 : vector<1x32xf32>
    %197 = vector.extract_strided_slice %54 {offsets = [5, 0], sizes = [1, 96], strides = [1, 1]} : vector<8x96xf32> to vector<1x96xf32>
    %198 = arith.addf %197, %172 : vector<1x96xf32>
    %199 = vector.extract_strided_slice %198 {offsets = [0, 0], sizes = [1, 32], strides = [1, 1]} : vector<1x96xf32> to vector<1x32xf32>
    %200 = arith.negf %199 : vector<1x32xf32>
    %201 = math.exp %200 : vector<1x32xf32>
    %cst_64 = arith.constant 1.000000e+00 : f32
    %202 = vector.broadcast %cst_64 : f32 to vector<1x32xf32>
    %203 = arith.addf %202, %201 : vector<1x32xf32>
    %204 = arith.divf %202, %203 : vector<1x32xf32>
    %205 = vector.extract_strided_slice %198 {offsets = [0, 32], sizes = [1, 32], strides = [1, 1]} : vector<1x96xf32> to vector<1x32xf32>
    %206 = arith.negf %205 : vector<1x32xf32>
    %207 = math.exp %206 : vector<1x32xf32>
    %cst_65 = arith.constant 1.000000e+00 : f32
    %208 = vector.broadcast %cst_65 : f32 to vector<1x32xf32>
    %209 = arith.addf %208, %207 : vector<1x32xf32>
    %210 = arith.divf %208, %209 : vector<1x32xf32>
    %211 = vector.extract_strided_slice %197 {offsets = [0, 64], sizes = [1, 32], strides = [1, 1]} : vector<1x96xf32> to vector<1x32xf32>
    %212 = vector.extract_strided_slice %172 {offsets = [0, 64], sizes = [1, 32], strides = [1, 1]} : vector<1x96xf32> to vector<1x32xf32>
    %213 = arith.mulf %204, %212 : vector<1x32xf32>
    %214 = arith.addf %211, %213 : vector<1x32xf32>
    %215 = math.tanh %214 : vector<1x32xf32>
    %cst_66 = arith.constant 1.000000e+00 : f32
    %216 = vector.broadcast %cst_66 : f32 to vector<1x32xf32>
    %217 = arith.subf %216, %210 : vector<1x32xf32>
    %218 = arith.mulf %217, %215 : vector<1x32xf32>
    %219 = arith.mulf %210, %166 : vector<1x32xf32>
    %220 = arith.addf %218, %219 : vector<1x32xf32>
    %c2 = arith.constant 2 : index
    %c0_67 = arith.constant 0 : index
    %221 = vector.load %arg6[%c2, %c0_67] : memref<8x32xf32, #tpu.memory_space<vmem>>, vector<1x32xf32>
    tpu.vector_store %arg6[%c2, %c0_67], %196 {strides = array<i32>} : memref<8x32xf32, #tpu.memory_space<vmem>>, vector<1x32xf32>,
    %c5 = arith.constant 5 : index
    %c0_68 = arith.constant 0 : index
    %222 = vector.load %arg7[%c5, %c0_68] : memref<8x32xf32, #tpu.memory_space<vmem>>, vector<1x32xf32>
    tpu.vector_store %arg7[%c5, %c0_68], %220 {strides = array<i32>} : memref<8x32xf32, #tpu.memory_space<vmem>>, vector<1x32xf32>,
    %cst_69 = arith.constant dense<0.000000e+00> : vector<1x96xf32>
    %223 = tpu.matmul %196, %55, %cst_69 {dimension_numbers = #tpu.dot_dimension_numbers<[1], [0], [0], [1], [0, 0, 1, 1], [], []>} : vector<1x32xf32>, vector<32x96xf32>, vector<1x96xf32> -> vector<1x96xf32>
    %224 = arith.addf %223, %56 : vector<1x96xf32>
    %cst_70 = arith.constant dense<0.000000e+00> : vector<1x96xf32>
    %225 = tpu.matmul %220, %57, %cst_70 {dimension_numbers = #tpu.dot_dimension_numbers<[1], [0], [0], [1], [0, 0, 1, 1], [], []>} : vector<1x32xf32>, vector<32x96xf32>, vector<1x96xf32> -> vector<1x96xf32>
    %226 = arith.addf %225, %58 : vector<1x96xf32>
    %227 = vector.extract_strided_slice %53 {offsets = [3, 0], sizes = [1, 96], strides = [1, 1]} : vector<8x96xf32> to vector<1x96xf32>
    %228 = arith.addf %227, %224 : vector<1x96xf32>
    %229 = vector.extract_strided_slice %228 {offsets = [0, 0], sizes = [1, 32], strides = [1, 1]} : vector<1x96xf32> to vector<1x32xf32>
    %230 = arith.negf %229 : vector<1x32xf32>
    %231 = math.exp %230 : vector<1x32xf32>
    %cst_71 = arith.constant 1.000000e+00 : f32
    %232 = vector.broadcast %cst_71 : f32 to vector<1x32xf32>
    %233 = arith.addf %232, %231 : vector<1x32xf32>
    %234 = arith.divf %232, %233 : vector<1x32xf32>
    %235 = vector.extract_strided_slice %228 {offsets = [0, 32], sizes = [1, 32], strides = [1, 1]} : vector<1x96xf32> to vector<1x32xf32>
    %236 = arith.negf %235 : vector<1x32xf32>
    %237 = math.exp %236 : vector<1x32xf32>
    %cst_72 = arith.constant 1.000000e+00 : f32
    %238 = vector.broadcast %cst_72 : f32 to vector<1x32xf32>
    %239 = arith.addf %238, %237 : vector<1x32xf32>
    %240 = arith.divf %238, %239 : vector<1x32xf32>
    %241 = vector.extract_strided_slice %227 {offsets = [0, 64], sizes = [1, 32], strides = [1, 1]} : vector<1x96xf32> to vector<1x32xf32>
    %242 = vector.extract_strided_slice %224 {offsets = [0, 64], sizes = [1, 32], strides = [1, 1]} : vector<1x96xf32> to vector<1x32xf32>
    %243 = arith.mulf %234, %242 : vector<1x32xf32>
    %244 = arith.addf %241, %243 : vector<1x32xf32>
    %245 = math.tanh %244 : vector<1x32xf32>
    %cst_73 = arith.constant 1.000000e+00 : f32
    %246 = vector.broadcast %cst_73 : f32 to vector<1x32xf32>
    %247 = arith.subf %246, %240 : vector<1x32xf32>
    %248 = arith.mulf %247, %245 : vector<1x32xf32>
    %249 = arith.mulf %240, %196 : vector<1x32xf32>
    %250 = arith.addf %248, %249 : vector<1x32xf32>
    %251 = vector.extract_strided_slice %54 {offsets = [4, 0], sizes = [1, 96], strides = [1, 1]} : vector<8x96xf32> to vector<1x96xf32>
    %252 = arith.addf %251, %226 : vector<1x96xf32>
    %253 = vector.extract_strided_slice %252 {offsets = [0, 0], sizes = [1, 32], strides = [1, 1]} : vector<1x96xf32> to vector<1x32xf32>
    %254 = arith.negf %253 : vector<1x32xf32>
    %255 = math.exp %254 : vector<1x32xf32>
    %cst_74 = arith.constant 1.000000e+00 : f32
    %256 = vector.broadcast %cst_74 : f32 to vector<1x32xf32>
    %257 = arith.addf %256, %255 : vector<1x32xf32>
    %258 = arith.divf %256, %257 : vector<1x32xf32>
    %259 = vector.extract_strided_slice %252 {offsets = [0, 32], sizes = [1, 32], strides = [1, 1]} : vector<1x96xf32> to vector<1x32xf32>
    %260 = arith.negf %259 : vector<1x32xf32>
    %261 = math.exp %260 : vector<1x32xf32>
    %cst_75 = arith.constant 1.000000e+00 : f32
    %262 = vector.broadcast %cst_75 : f32 to vector<1x32xf32>
    %263 = arith.addf %262, %261 : vector<1x32xf32>
    %264 = arith.divf %262, %263 : vector<1x32xf32>
    %265 = vector.extract_strided_slice %251 {offsets = [0, 64], sizes = [1, 32], strides = [1, 1]} : vector<1x96xf32> to vector<1x32xf32>
    %266 = vector.extract_strided_slice %226 {offsets = [0, 64], sizes = [1, 32], strides = [1, 1]} : vector<1x96xf32> to vector<1x32xf32>
    %267 = arith.mulf %258, %266 : vector<1x32xf32>
    %268 = arith.addf %265, %267 : vector<1x32xf32>
    %269 = math.tanh %268 : vector<1x32xf32>
    %cst_76 = arith.constant 1.000000e+00 : f32
    %270 = vector.broadcast %cst_76 : f32 to vector<1x32xf32>
    %271 = arith.subf %270, %264 : vector<1x32xf32>
    %272 = arith.mulf %271, %269 : vector<1x32xf32>
    %273 = arith.mulf %264, %220 : vector<1x32xf32>
    %274 = arith.addf %272, %273 : vector<1x32xf32>
    %c3 = arith.constant 3 : index
    %c0_77 = arith.constant 0 : index
    %275 = vector.load %arg6[%c3, %c0_77] : memref<8x32xf32, #tpu.memory_space<vmem>>, vector<1x32xf32>
    tpu.vector_store %arg6[%c3, %c0_77], %250 {strides = array<i32>} : memref<8x32xf32, #tpu.memory_space<vmem>>, vector<1x32xf32>,
    %c4 = arith.constant 4 : index
    %c0_78 = arith.constant 0 : index
    %276 = vector.load %arg7[%c4, %c0_78] : memref<8x32xf32, #tpu.memory_space<vmem>>, vector<1x32xf32>
    tpu.vector_store %arg7[%c4, %c0_78], %274 {strides = array<i32>} : memref<8x32xf32, #tpu.memory_space<vmem>>, vector<1x32xf32>,
    %cst_79 = arith.constant dense<0.000000e+00> : vector<1x96xf32>
    %277 = tpu.matmul %250, %55, %cst_79 {dimension_numbers = #tpu.dot_dimension_numbers<[1], [0], [0], [1], [0, 0, 1, 1], [], []>} : vector<1x32xf32>, vector<32x96xf32>, vector<1x96xf32> -> vector<1x96xf32>
    %278 = arith.addf %277, %56 : vector<1x96xf32>
    %cst_80 = arith.constant dense<0.000000e+00> : vector<1x96xf32>
    %279 = tpu.matmul %274, %57, %cst_80 {dimension_numbers = #tpu.dot_dimension_numbers<[1], [0], [0], [1], [0, 0, 1, 1], [], []>} : vector<1x32xf32>, vector<32x96xf32>, vector<1x96xf32> -> vector<1x96xf32>
    %280 = arith.addf %279, %58 : vector<1x96xf32>
    %281 = vector.extract_strided_slice %53 {offsets = [4, 0], sizes = [1, 96], strides = [1, 1]} : vector<8x96xf32> to vector<1x96xf32>
    %282 = arith.addf %281, %278 : vector<1x96xf32>
    %283 = vector.extract_strided_slice %282 {offsets = [0, 0], sizes = [1, 32], strides = [1, 1]} : vector<1x96xf32> to vector<1x32xf32>
    %284 = arith.negf %283 : vector<1x32xf32>
    %285 = math.exp %284 : vector<1x32xf32>
    %cst_81 = arith.constant 1.000000e+00 : f32
    %286 = vector.broadcast %cst_81 : f32 to vector<1x32xf32>
    %287 = arith.addf %286, %285 : vector<1x32xf32>
    %288 = arith.divf %286, %287 : vector<1x32xf32>
    %289 = vector.extract_strided_slice %282 {offsets = [0, 32], sizes = [1, 32], strides = [1, 1]} : vector<1x96xf32> to vector<1x32xf32>
    %290 = arith.negf %289 : vector<1x32xf32>
    %291 = math.exp %290 : vector<1x32xf32>
    %cst_82 = arith.constant 1.000000e+00 : f32
    %292 = vector.broadcast %cst_82 : f32 to vector<1x32xf32>
    %293 = arith.addf %292, %291 : vector<1x32xf32>
    %294 = arith.divf %292, %293 : vector<1x32xf32>
    %295 = vector.extract_strided_slice %281 {offsets = [0, 64], sizes = [1, 32], strides = [1, 1]} : vector<1x96xf32> to vector<1x32xf32>
    %296 = vector.extract_strided_slice %278 {offsets = [0, 64], sizes = [1, 32], strides = [1, 1]} : vector<1x96xf32> to vector<1x32xf32>
    %297 = arith.mulf %288, %296 : vector<1x32xf32>
    %298 = arith.addf %295, %297 : vector<1x32xf32>
    %299 = math.tanh %298 : vector<1x32xf32>
    %cst_83 = arith.constant 1.000000e+00 : f32
    %300 = vector.broadcast %cst_83 : f32 to vector<1x32xf32>
    %301 = arith.subf %300, %294 : vector<1x32xf32>
    %302 = arith.mulf %301, %299 : vector<1x32xf32>
    %303 = arith.mulf %294, %250 : vector<1x32xf32>
    %304 = arith.addf %302, %303 : vector<1x32xf32>
    %305 = vector.extract_strided_slice %54 {offsets = [3, 0], sizes = [1, 96], strides = [1, 1]} : vector<8x96xf32> to vector<1x96xf32>
    %306 = arith.addf %305, %280 : vector<1x96xf32>
    %307 = vector.extract_strided_slice %306 {offsets = [0, 0], sizes = [1, 32], strides = [1, 1]} : vector<1x96xf32> to vector<1x32xf32>
    %308 = arith.negf %307 : vector<1x32xf32>
    %309 = math.exp %308 : vector<1x32xf32>
    %cst_84 = arith.constant 1.000000e+00 : f32
    %310 = vector.broadcast %cst_84 : f32 to vector<1x32xf32>
    %311 = arith.addf %310, %309 : vector<1x32xf32>
    %312 = arith.divf %310, %311 : vector<1x32xf32>
    %313 = vector.extract_strided_slice %306 {offsets = [0, 32], sizes = [1, 32], strides = [1, 1]} : vector<1x96xf32> to vector<1x32xf32>
    %314 = arith.negf %313 : vector<1x32xf32>
    %315 = math.exp %314 : vector<1x32xf32>
    %cst_85 = arith.constant 1.000000e+00 : f32
    %316 = vector.broadcast %cst_85 : f32 to vector<1x32xf32>
    %317 = arith.addf %316, %315 : vector<1x32xf32>
    %318 = arith.divf %316, %317 : vector<1x32xf32>
    %319 = vector.extract_strided_slice %305 {offsets = [0, 64], sizes = [1, 32], strides = [1, 1]} : vector<1x96xf32> to vector<1x32xf32>
    %320 = vector.extract_strided_slice %280 {offsets = [0, 64], sizes = [1, 32], strides = [1, 1]} : vector<1x96xf32> to vector<1x32xf32>
    %321 = arith.mulf %312, %320 : vector<1x32xf32>
    %322 = arith.addf %319, %321 : vector<1x32xf32>
    %323 = math.tanh %322 : vector<1x32xf32>
    %cst_86 = arith.constant 1.000000e+00 : f32
    %324 = vector.broadcast %cst_86 : f32 to vector<1x32xf32>
    %325 = arith.subf %324, %318 : vector<1x32xf32>
    %326 = arith.mulf %325, %323 : vector<1x32xf32>
    %327 = arith.mulf %318, %274 : vector<1x32xf32>
    %328 = arith.addf %326, %327 : vector<1x32xf32>
    %c4_87 = arith.constant 4 : index
    %c0_88 = arith.constant 0 : index
    %329 = vector.load %arg6[%c4_87, %c0_88] : memref<8x32xf32, #tpu.memory_space<vmem>>, vector<1x32xf32>
    tpu.vector_store %arg6[%c4_87, %c0_88], %304 {strides = array<i32>} : memref<8x32xf32, #tpu.memory_space<vmem>>, vector<1x32xf32>,
    %c3_89 = arith.constant 3 : index
    %c0_90 = arith.constant 0 : index
    %330 = vector.load %arg7[%c3_89, %c0_90] : memref<8x32xf32, #tpu.memory_space<vmem>>, vector<1x32xf32>
    tpu.vector_store %arg7[%c3_89, %c0_90], %328 {strides = array<i32>} : memref<8x32xf32, #tpu.memory_space<vmem>>, vector<1x32xf32>,
    %cst_91 = arith.constant dense<0.000000e+00> : vector<1x96xf32>
    %331 = tpu.matmul %304, %55, %cst_91 {dimension_numbers = #tpu.dot_dimension_numbers<[1], [0], [0], [1], [0, 0, 1, 1], [], []>} : vector<1x32xf32>, vector<32x96xf32>, vector<1x96xf32> -> vector<1x96xf32>
    %332 = arith.addf %331, %56 : vector<1x96xf32>
    %cst_92 = arith.constant dense<0.000000e+00> : vector<1x96xf32>
    %333 = tpu.matmul %328, %57, %cst_92 {dimension_numbers = #tpu.dot_dimension_numbers<[1], [0], [0], [1], [0, 0, 1, 1], [], []>} : vector<1x32xf32>, vector<32x96xf32>, vector<1x96xf32> -> vector<1x96xf32>
    %334 = arith.addf %333, %58 : vector<1x96xf32>
    %335 = vector.extract_strided_slice %53 {offsets = [5, 0], sizes = [1, 96], strides = [1, 1]} : vector<8x96xf32> to vector<1x96xf32>
    %336 = arith.addf %335, %332 : vector<1x96xf32>
    %337 = vector.extract_strided_slice %336 {offsets = [0, 0], sizes = [1, 32], strides = [1, 1]} : vector<1x96xf32> to vector<1x32xf32>
    %338 = arith.negf %337 : vector<1x32xf32>
    %339 = math.exp %338 : vector<1x32xf32>
    %cst_93 = arith.constant 1.000000e+00 : f32
    %340 = vector.broadcast %cst_93 : f32 to vector<1x32xf32>
    %341 = arith.addf %340, %339 : vector<1x32xf32>
    %342 = arith.divf %340, %341 : vector<1x32xf32>
    %343 = vector.extract_strided_slice %336 {offsets = [0, 32], sizes = [1, 32], strides = [1, 1]} : vector<1x96xf32> to vector<1x32xf32>
    %344 = arith.negf %343 : vector<1x32xf32>
    %345 = math.exp %344 : vector<1x32xf32>
    %cst_94 = arith.constant 1.000000e+00 : f32
    %346 = vector.broadcast %cst_94 : f32 to vector<1x32xf32>
    %347 = arith.addf %346, %345 : vector<1x32xf32>
    %348 = arith.divf %346, %347 : vector<1x32xf32>
    %349 = vector.extract_strided_slice %335 {offsets = [0, 64], sizes = [1, 32], strides = [1, 1]} : vector<1x96xf32> to vector<1x32xf32>
    %350 = vector.extract_strided_slice %332 {offsets = [0, 64], sizes = [1, 32], strides = [1, 1]} : vector<1x96xf32> to vector<1x32xf32>
    %351 = arith.mulf %342, %350 : vector<1x32xf32>
    %352 = arith.addf %349, %351 : vector<1x32xf32>
    %353 = math.tanh %352 : vector<1x32xf32>
    %cst_95 = arith.constant 1.000000e+00 : f32
    %354 = vector.broadcast %cst_95 : f32 to vector<1x32xf32>
    %355 = arith.subf %354, %348 : vector<1x32xf32>
    %356 = arith.mulf %355, %353 : vector<1x32xf32>
    %357 = arith.mulf %348, %304 : vector<1x32xf32>
    %358 = arith.addf %356, %357 : vector<1x32xf32>
    %359 = vector.extract_strided_slice %54 {offsets = [2, 0], sizes = [1, 96], strides = [1, 1]} : vector<8x96xf32> to vector<1x96xf32>
    %360 = arith.addf %359, %334 : vector<1x96xf32>
    %361 = vector.extract_strided_slice %360 {offsets = [0, 0], sizes = [1, 32], strides = [1, 1]} : vector<1x96xf32> to vector<1x32xf32>
    %362 = arith.negf %361 : vector<1x32xf32>
    %363 = math.exp %362 : vector<1x32xf32>
    %cst_96 = arith.constant 1.000000e+00 : f32
    %364 = vector.broadcast %cst_96 : f32 to vector<1x32xf32>
    %365 = arith.addf %364, %363 : vector<1x32xf32>
    %366 = arith.divf %364, %365 : vector<1x32xf32>
    %367 = vector.extract_strided_slice %360 {offsets = [0, 32], sizes = [1, 32], strides = [1, 1]} : vector<1x96xf32> to vector<1x32xf32>
    %368 = arith.negf %367 : vector<1x32xf32>
    %369 = math.exp %368 : vector<1x32xf32>
    %cst_97 = arith.constant 1.000000e+00 : f32
    %370 = vector.broadcast %cst_97 : f32 to vector<1x32xf32>
    %371 = arith.addf %370, %369 : vector<1x32xf32>
    %372 = arith.divf %370, %371 : vector<1x32xf32>
    %373 = vector.extract_strided_slice %359 {offsets = [0, 64], sizes = [1, 32], strides = [1, 1]} : vector<1x96xf32> to vector<1x32xf32>
    %374 = vector.extract_strided_slice %334 {offsets = [0, 64], sizes = [1, 32], strides = [1, 1]} : vector<1x96xf32> to vector<1x32xf32>
    %375 = arith.mulf %366, %374 : vector<1x32xf32>
    %376 = arith.addf %373, %375 : vector<1x32xf32>
    %377 = math.tanh %376 : vector<1x32xf32>
    %cst_98 = arith.constant 1.000000e+00 : f32
    %378 = vector.broadcast %cst_98 : f32 to vector<1x32xf32>
    %379 = arith.subf %378, %372 : vector<1x32xf32>
    %380 = arith.mulf %379, %377 : vector<1x32xf32>
    %381 = arith.mulf %372, %328 : vector<1x32xf32>
    %382 = arith.addf %380, %381 : vector<1x32xf32>
    %c5_99 = arith.constant 5 : index
    %c0_100 = arith.constant 0 : index
    %383 = vector.load %arg6[%c5_99, %c0_100] : memref<8x32xf32, #tpu.memory_space<vmem>>, vector<1x32xf32>
    tpu.vector_store %arg6[%c5_99, %c0_100], %358 {strides = array<i32>} : memref<8x32xf32, #tpu.memory_space<vmem>>, vector<1x32xf32>,
    %c2_101 = arith.constant 2 : index
    %c0_102 = arith.constant 0 : index
    %384 = vector.load %arg7[%c2_101, %c0_102] : memref<8x32xf32, #tpu.memory_space<vmem>>, vector<1x32xf32>
    tpu.vector_store %arg7[%c2_101, %c0_102], %382 {strides = array<i32>} : memref<8x32xf32, #tpu.memory_space<vmem>>, vector<1x32xf32>,
    %cst_103 = arith.constant dense<0.000000e+00> : vector<1x96xf32>
    %385 = tpu.matmul %358, %55, %cst_103 {dimension_numbers = #tpu.dot_dimension_numbers<[1], [0], [0], [1], [0, 0, 1, 1], [], []>} : vector<1x32xf32>, vector<32x96xf32>, vector<1x96xf32> -> vector<1x96xf32>
    %386 = arith.addf %385, %56 : vector<1x96xf32>
    %cst_104 = arith.constant dense<0.000000e+00> : vector<1x96xf32>
    %387 = tpu.matmul %382, %57, %cst_104 {dimension_numbers = #tpu.dot_dimension_numbers<[1], [0], [0], [1], [0, 0, 1, 1], [], []>} : vector<1x32xf32>, vector<32x96xf32>, vector<1x96xf32> -> vector<1x96xf32>
    %388 = arith.addf %387, %58 : vector<1x96xf32>
    %389 = vector.extract_strided_slice %53 {offsets = [6, 0], sizes = [1, 96], strides = [1, 1]} : vector<8x96xf32> to vector<1x96xf32>
    %390 = arith.addf %389, %386 : vector<1x96xf32>
    %391 = vector.extract_strided_slice %390 {offsets = [0, 0], sizes = [1, 32], strides = [1, 1]} : vector<1x96xf32> to vector<1x32xf32>
    %392 = arith.negf %391 : vector<1x32xf32>
    %393 = math.exp %392 : vector<1x32xf32>
    %cst_105 = arith.constant 1.000000e+00 : f32
    %394 = vector.broadcast %cst_105 : f32 to vector<1x32xf32>
    %395 = arith.addf %394, %393 : vector<1x32xf32>
    %396 = arith.divf %394, %395 : vector<1x32xf32>
    %397 = vector.extract_strided_slice %390 {offsets = [0, 32], sizes = [1, 32], strides = [1, 1]} : vector<1x96xf32> to vector<1x32xf32>
    %398 = arith.negf %397 : vector<1x32xf32>
    %399 = math.exp %398 : vector<1x32xf32>
    %cst_106 = arith.constant 1.000000e+00 : f32
    %400 = vector.broadcast %cst_106 : f32 to vector<1x32xf32>
    %401 = arith.addf %400, %399 : vector<1x32xf32>
    %402 = arith.divf %400, %401 : vector<1x32xf32>
    %403 = vector.extract_strided_slice %389 {offsets = [0, 64], sizes = [1, 32], strides = [1, 1]} : vector<1x96xf32> to vector<1x32xf32>
    %404 = vector.extract_strided_slice %386 {offsets = [0, 64], sizes = [1, 32], strides = [1, 1]} : vector<1x96xf32> to vector<1x32xf32>
    %405 = arith.mulf %396, %404 : vector<1x32xf32>
    %406 = arith.addf %403, %405 : vector<1x32xf32>
    %407 = math.tanh %406 : vector<1x32xf32>
    %cst_107 = arith.constant 1.000000e+00 : f32
    %408 = vector.broadcast %cst_107 : f32 to vector<1x32xf32>
    %409 = arith.subf %408, %402 : vector<1x32xf32>
    %410 = arith.mulf %409, %407 : vector<1x32xf32>
    %411 = arith.mulf %402, %358 : vector<1x32xf32>
    %412 = arith.addf %410, %411 : vector<1x32xf32>
    %413 = vector.extract_strided_slice %54 {offsets = [1, 0], sizes = [1, 96], strides = [1, 1]} : vector<8x96xf32> to vector<1x96xf32>
    %414 = arith.addf %413, %388 : vector<1x96xf32>
    %415 = vector.extract_strided_slice %414 {offsets = [0, 0], sizes = [1, 32], strides = [1, 1]} : vector<1x96xf32> to vector<1x32xf32>
    %416 = arith.negf %415 : vector<1x32xf32>
    %417 = math.exp %416 : vector<1x32xf32>
    %cst_108 = arith.constant 1.000000e+00 : f32
    %418 = vector.broadcast %cst_108 : f32 to vector<1x32xf32>
    %419 = arith.addf %418, %417 : vector<1x32xf32>
    %420 = arith.divf %418, %419 : vector<1x32xf32>
    %421 = vector.extract_strided_slice %414 {offsets = [0, 32], sizes = [1, 32], strides = [1, 1]} : vector<1x96xf32> to vector<1x32xf32>
    %422 = arith.negf %421 : vector<1x32xf32>
    %423 = math.exp %422 : vector<1x32xf32>
    %cst_109 = arith.constant 1.000000e+00 : f32
    %424 = vector.broadcast %cst_109 : f32 to vector<1x32xf32>
    %425 = arith.addf %424, %423 : vector<1x32xf32>
    %426 = arith.divf %424, %425 : vector<1x32xf32>
    %427 = vector.extract_strided_slice %413 {offsets = [0, 64], sizes = [1, 32], strides = [1, 1]} : vector<1x96xf32> to vector<1x32xf32>
    %428 = vector.extract_strided_slice %388 {offsets = [0, 64], sizes = [1, 32], strides = [1, 1]} : vector<1x96xf32> to vector<1x32xf32>
    %429 = arith.mulf %420, %428 : vector<1x32xf32>
    %430 = arith.addf %427, %429 : vector<1x32xf32>
    %431 = math.tanh %430 : vector<1x32xf32>
    %cst_110 = arith.constant 1.000000e+00 : f32
    %432 = vector.broadcast %cst_110 : f32 to vector<1x32xf32>
    %433 = arith.subf %432, %426 : vector<1x32xf32>
    %434 = arith.mulf %433, %431 : vector<1x32xf32>
    %435 = arith.mulf %426, %382 : vector<1x32xf32>
    %436 = arith.addf %434, %435 : vector<1x32xf32>
    %c6_111 = arith.constant 6 : index
    %c0_112 = arith.constant 0 : index
    %437 = vector.load %arg6[%c6_111, %c0_112] : memref<8x32xf32, #tpu.memory_space<vmem>>, vector<1x32xf32>
    tpu.vector_store %arg6[%c6_111, %c0_112], %412 {strides = array<i32>} : memref<8x32xf32, #tpu.memory_space<vmem>>, vector<1x32xf32>,
    %c1_113 = arith.constant 1 : index
    %c0_114 = arith.constant 0 : index
    %438 = vector.load %arg7[%c1_113, %c0_114] : memref<8x32xf32, #tpu.memory_space<vmem>>, vector<1x32xf32>
    tpu.vector_store %arg7[%c1_113, %c0_114], %436 {strides = array<i32>} : memref<8x32xf32, #tpu.memory_space<vmem>>, vector<1x32xf32>,
    %cst_115 = arith.constant dense<0.000000e+00> : vector<1x96xf32>
    %439 = tpu.matmul %412, %55, %cst_115 {dimension_numbers = #tpu.dot_dimension_numbers<[1], [0], [0], [1], [0, 0, 1, 1], [], []>} : vector<1x32xf32>, vector<32x96xf32>, vector<1x96xf32> -> vector<1x96xf32>
    %440 = arith.addf %439, %56 : vector<1x96xf32>
    %cst_116 = arith.constant dense<0.000000e+00> : vector<1x96xf32>
    %441 = tpu.matmul %436, %57, %cst_116 {dimension_numbers = #tpu.dot_dimension_numbers<[1], [0], [0], [1], [0, 0, 1, 1], [], []>} : vector<1x32xf32>, vector<32x96xf32>, vector<1x96xf32> -> vector<1x96xf32>
    %442 = arith.addf %441, %58 : vector<1x96xf32>
    %443 = vector.extract_strided_slice %53 {offsets = [7, 0], sizes = [1, 96], strides = [1, 1]} : vector<8x96xf32> to vector<1x96xf32>
    %444 = arith.addf %443, %440 : vector<1x96xf32>
    %445 = vector.extract_strided_slice %444 {offsets = [0, 0], sizes = [1, 32], strides = [1, 1]} : vector<1x96xf32> to vector<1x32xf32>
    %446 = arith.negf %445 : vector<1x32xf32>
    %447 = math.exp %446 : vector<1x32xf32>
    %cst_117 = arith.constant 1.000000e+00 : f32
    %448 = vector.broadcast %cst_117 : f32 to vector<1x32xf32>
    %449 = arith.addf %448, %447 : vector<1x32xf32>
    %450 = arith.divf %448, %449 : vector<1x32xf32>
    %451 = vector.extract_strided_slice %444 {offsets = [0, 32], sizes = [1, 32], strides = [1, 1]} : vector<1x96xf32> to vector<1x32xf32>
    %452 = arith.negf %451 : vector<1x32xf32>
    %453 = math.exp %452 : vector<1x32xf32>
    %cst_118 = arith.constant 1.000000e+00 : f32
    %454 = vector.broadcast %cst_118 : f32 to vector<1x32xf32>
    %455 = arith.addf %454, %453 : vector<1x32xf32>
    %456 = arith.divf %454, %455 : vector<1x32xf32>
    %457 = vector.extract_strided_slice %443 {offsets = [0, 64], sizes = [1, 32], strides = [1, 1]} : vector<1x96xf32> to vector<1x32xf32>
    %458 = vector.extract_strided_slice %440 {offsets = [0, 64], sizes = [1, 32], strides = [1, 1]} : vector<1x96xf32> to vector<1x32xf32>
    %459 = arith.mulf %450, %458 : vector<1x32xf32>
    %460 = arith.addf %457, %459 : vector<1x32xf32>
    %461 = math.tanh %460 : vector<1x32xf32>
    %cst_119 = arith.constant 1.000000e+00 : f32
    %462 = vector.broadcast %cst_119 : f32 to vector<1x32xf32>
    %463 = arith.subf %462, %456 : vector<1x32xf32>
    %464 = arith.mulf %463, %461 : vector<1x32xf32>
    %465 = arith.mulf %456, %412 : vector<1x32xf32>
    %466 = arith.addf %464, %465 : vector<1x32xf32>
    %467 = vector.extract_strided_slice %54 {offsets = [0, 0], sizes = [1, 96], strides = [1, 1]} : vector<8x96xf32> to vector<1x96xf32>
    %468 = arith.addf %467, %442 : vector<1x96xf32>
    %469 = vector.extract_strided_slice %468 {offsets = [0, 0], sizes = [1, 32], strides = [1, 1]} : vector<1x96xf32> to vector<1x32xf32>
    %470 = arith.negf %469 : vector<1x32xf32>
    %471 = math.exp %470 : vector<1x32xf32>
    %cst_120 = arith.constant 1.000000e+00 : f32
    %472 = vector.broadcast %cst_120 : f32 to vector<1x32xf32>
    %473 = arith.addf %472, %471 : vector<1x32xf32>
    %474 = arith.divf %472, %473 : vector<1x32xf32>
    %475 = vector.extract_strided_slice %468 {offsets = [0, 32], sizes = [1, 32], strides = [1, 1]} : vector<1x96xf32> to vector<1x32xf32>
    %476 = arith.negf %475 : vector<1x32xf32>
    %477 = math.exp %476 : vector<1x32xf32>
    %cst_121 = arith.constant 1.000000e+00 : f32
    %478 = vector.broadcast %cst_121 : f32 to vector<1x32xf32>
    %479 = arith.addf %478, %477 : vector<1x32xf32>
    %480 = arith.divf %478, %479 : vector<1x32xf32>
    %481 = vector.extract_strided_slice %467 {offsets = [0, 64], sizes = [1, 32], strides = [1, 1]} : vector<1x96xf32> to vector<1x32xf32>
    %482 = vector.extract_strided_slice %442 {offsets = [0, 64], sizes = [1, 32], strides = [1, 1]} : vector<1x96xf32> to vector<1x32xf32>
    %483 = arith.mulf %474, %482 : vector<1x32xf32>
    %484 = arith.addf %481, %483 : vector<1x32xf32>
    %485 = math.tanh %484 : vector<1x32xf32>
    %cst_122 = arith.constant 1.000000e+00 : f32
    %486 = vector.broadcast %cst_122 : f32 to vector<1x32xf32>
    %487 = arith.subf %486, %480 : vector<1x32xf32>
    %488 = arith.mulf %487, %485 : vector<1x32xf32>
    %489 = arith.mulf %480, %436 : vector<1x32xf32>
    %490 = arith.addf %488, %489 : vector<1x32xf32>
    %c7_123 = arith.constant 7 : index
    %c0_124 = arith.constant 0 : index
    %491 = vector.load %arg6[%c7_123, %c0_124] : memref<8x32xf32, #tpu.memory_space<vmem>>, vector<1x32xf32>
    tpu.vector_store %arg6[%c7_123, %c0_124], %466 {strides = array<i32>} : memref<8x32xf32, #tpu.memory_space<vmem>>, vector<1x32xf32>,
    %c0_125 = arith.constant 0 : index
    %c0_126 = arith.constant 0 : index
    %492 = vector.load %arg7[%c0_125, %c0_126] : memref<8x32xf32, #tpu.memory_space<vmem>>, vector<1x32xf32>
    tpu.vector_store %arg7[%c0_125, %c0_126], %490 {strides = array<i32>} : memref<8x32xf32, #tpu.memory_space<vmem>>, vector<1x32xf32>,
    %c0_127 = arith.constant 0 : index
    %c0_128 = arith.constant 0 : index
    %493 = vector.load %arg6[%c0_127, %c0_128] : memref<8x32xf32, #tpu.memory_space<vmem>>, vector<8x32xf32>
    %c0_129 = arith.constant 0 : index
    %c0_130 = arith.constant 0 : index
    %494 = vector.load %arg7[%c0_129, %c0_130] : memref<8x32xf32, #tpu.memory_space<vmem>>, vector<8x32xf32>
    %c176 = arith.constant 176 : index
    %c0_131 = arith.constant 0 : index
    %495 = vector.load %arg4[%c176, %c0_131] : memref<248x192xf32, #tpu.memory_space<vmem>>, vector<32x1xf32>
    %cst_132 = arith.constant dense<0.000000e+00> : vector<8x1xf32>
    %496 = tpu.matmul %493, %495, %cst_132 {dimension_numbers = #tpu.dot_dimension_numbers<[1], [0], [0], [1], [0, 0, 1, 1], [], []>} : vector<8x32xf32>, vector<32x1xf32>, vector<8x1xf32> -> vector<8x1xf32>
    %c208 = arith.constant 208 : index
    %c0_133 = arith.constant 0 : index
    %497 = vector.load %arg4[%c208, %c0_133] : memref<248x192xf32, #tpu.memory_space<vmem>>, vector<32x1xf32>
    %cst_134 = arith.constant dense<0.000000e+00> : vector<8x1xf32>
    %498 = tpu.matmul %494, %497, %cst_134 {dimension_numbers = #tpu.dot_dimension_numbers<[1], [0], [0], [1], [0, 0, 1, 1], [], []>} : vector<8x32xf32>, vector<32x1xf32>, vector<8x1xf32> -> vector<8x1xf32>
    %499 = arith.addf %496, %498 : vector<8x1xf32>
    %c240 = arith.constant 240 : index
    %c0_135 = arith.constant 0 : index
    %500 = vector.load %arg4[%c240, %c0_135] : memref<248x192xf32, #tpu.memory_space<vmem>>, vector<1x1xf32>
    %501 = vector.broadcast %500 : vector<1x1xf32> to vector<8x1xf32>
    %502 = arith.addf %499, %501 : vector<8x1xf32>
    %cst_136 = arith.constant dense<0xFF800000> : vector<1xf32>
    %503 = vector.multi_reduction <maximumf>, %502, %cst_136 [0] : vector<8x1xf32> to vector<1xf32>
    %504 = vector.shape_cast %503 : vector<1xf32> to vector<1x1xf32>
    %505 = vector.broadcast %504 : vector<1x1xf32> to vector<8x1xf32>
    %506 = arith.subf %502, %505 : vector<8x1xf32>
    %507 = math.exp %506 : vector<8x1xf32>
    %cst_137 = arith.constant dense<0.000000e+00> : vector<1xf32>
    %508 = vector.multi_reduction <add>, %507, %cst_137 [0] : vector<8x1xf32> to vector<1xf32>
    %509 = vector.shape_cast %508 : vector<1xf32> to vector<1x1xf32>
    %510 = tpu.reciprocal %509 {approx = true} : vector<1x1xf32> -> vector<1x1xf32>
    %511 = vector.broadcast %510 : vector<1x1xf32> to vector<8x1xf32>
    %512 = arith.mulf %507, %511 : vector<8x1xf32>
    %513 = vector.broadcast %512 : vector<8x1xf32> to vector<8x32xf32>
    %514 = arith.mulf %513, %493 : vector<8x32xf32>
    %cst_138 = arith.constant dense<0.000000e+00> : vector<32xf32>
    %515 = vector.multi_reduction <add>, %514, %cst_138 [0] : vector<8x32xf32> to vector<32xf32>
    %516 = vector.shape_cast %515 : vector<32xf32> to vector<1x32xf32>
    %517 = vector.broadcast %512 : vector<8x1xf32> to vector<8x32xf32>
    %518 = arith.mulf %517, %494 : vector<8x32xf32>
    %cst_139 = arith.constant dense<0.000000e+00> : vector<32xf32>
    %519 = vector.multi_reduction <add>, %518, %cst_139 [0] : vector<8x32xf32> to vector<32xf32>
    %520 = vector.shape_cast %519 : vector<32xf32> to vector<1x32xf32>
    %521 = tpu.concatenate %516, %520 in 1 : vector<1x32xf32>, vector<1x32xf32> -> vector<1x64xf32>
    %c0_140 = arith.constant 0 : index
    %c0_141 = arith.constant 0 : index
    %522 = vector.load %arg5[%c0_140, %c0_141] : memref<1x64xf32, #tpu.memory_space<vmem>>, vector<1x64xf32>
    tpu.vector_store %arg5[%c0_140, %c0_141], %521 {strides = array<i32>} : memref<1x64xf32, #tpu.memory_space<vmem>>, vector<1x64xf32>,
    return
  }
}

</mosaic_0001>

<llo_original>
// kernel: tpu_custom_call.1
$region0: #{tpu_custom_call.1}
  #allocation0 [shape = 'u32[]', space=smem, size = 0x4, offset = 0x4, fixed_abs, tag = 'smem constant byte address 0x4 - core index']
  #allocation1 [shape = 'u32[144,128]{1,0:T(1,128)}', space=vmem, size = 0x12000, scoped, tag = 'internal scratch']
  #allocation2 [shape = 'f32[8,32]{1,0:T(8,128)}', space=vmem, size = 0x1000, scoped, tag = 'scratch operand']
  #allocation3 [shape = 'f32[8,32]{1,0:T(8,128)}', space=vmem, size = 0x1000, scoped, tag = 'scratch operand']
  %s0 = inlined_call_operand.vmem [shape: f32[64,8], index: 0, kind: input, shape index: {}]
  %s1 = inlined_call_operand.vmem [shape: f32[8,8,8], index: 1, kind: input, shape index: {}]
  %s2 = inlined_call_operand.vmem [shape: f32[8,8,1], index: 2, kind: input, shape index: {}]
  %s3 = inlined_call_operand.vmem [shape: f32[56,32], index: 3, kind: input, shape index: {}]
  %s4 = inlined_call_operand.vmem [shape: f32[248,192], index: 4, kind: input, shape index: {}]
  %s5 = inlined_call_operand.hbm [shape: f32[1,64], index: 5, kind: output, shape index: {}]
  %s6 = sld [smem:[#allocation0]]
  $region30: #{tpu_custom_call.1} parent=0
    _
  %s8 = ssub.s32 1, %s6
  %s9 = scalar_select 0, %s8, %s6
  $region1: #{tpu_custom_call.1} parent=0
    #allocation4 [shape = 'u8[512]{0}', space=vmem, size = 0x400, scoped, tag = 'output window, operand 0, single buffered']
    #allocation5 [shape = 's32[1]{0}', space=sflag, size = 0x4, scoped, tag = 'scoped memory for tpu_custom_call.1']
    %10 = vsyncpa [#allocation5], 0
    // Predicated region
    $region2: #{tpu_custom_call.1} parent=1 // pred_check
      _
    $region3: #{tpu_custom_call.1} parent=1 // pred_check_branch
      %12 = sbr.rel (0) target = $region5
    $region4: #{tpu_custom_call.1} parent=1 // pred_region
      _
    $region5: #{tpu_custom_call.1} parent=1 // pred_fallthru
      _
    // Predicated region
    $region6: #{tpu_custom_call.1} parent=1 // pred_check
      _
    $region7: #{tpu_custom_call.1} parent=1 // pred_check_branch
      %14 = sbr.rel (0) target = $region9
    $region8: #{tpu_custom_call.1} parent=1 // pred_region
      _
    $region9: #{tpu_custom_call.1} parent=1 // pred_fallthru
      _
    // Predicated region
    $region10: #{tpu_custom_call.1} parent=1 // pred_check
      _
    $region11: #{tpu_custom_call.1} parent=1 // pred_check_branch
      %16 = sbr.rel (0) target = $region13
    $region12: #{tpu_custom_call.1} parent=1 // pred_region
      _
    $region13: #{tpu_custom_call.1} parent=1 // pred_fallthru
      _
    // Predicated region
    $region14: #{tpu_custom_call.1} parent=1 // pred_check
      _
    $region15: #{tpu_custom_call.1} parent=1 // pred_check_branch
      %18 = sbr.rel (0) target = $region17
    $region16: #{tpu_custom_call.1} parent=1 // pred_region
      _
    $region17: #{tpu_custom_call.1} parent=1 // pred_fallthru
      _
    // Predicated region
    $region18: #{tpu_custom_call.1} parent=1 // pred_check
      _
    $region19: #{tpu_custom_call.1} parent=1 // pred_check_branch
      %20 = sbr.rel (0) target = $region21
    $region20: #{tpu_custom_call.1} parent=1 // pred_region
      _
    $region21: #{tpu_custom_call.1} parent=1 // pred_fallthru
      _
    %v21 = vld [vmem:[%s0] sm:$0xff]
    %v22 = vld [vmem:[%s0 + $0x8] sm:$0xff]
    %v23 = vld [vmem:[%s0 + $0x10] sm:$0xff]
    %v24 = vld [vmem:[%s0 + $0x18] sm:$0xff]
    %v25 = vld [vmem:[%s0 + $0x20] sm:$0xff]
    %v26 = vld [vmem:[%s0 + $0x28] sm:$0xff]
    %v27 = vld [vmem:[%s0 + $0x30] sm:$0xff]
    %v28 = vld [vmem:[%s0 + $0x38] sm:$0xff]
    %v29 = vld [vmem:[%s1] sm:$0xff]
    %v30 = vld [vmem:[%s1 + $0x8] sm:$0xff]
    %v31 = vld [vmem:[%s1 + $0x10] sm:$0xff]
    %v32 = vld [vmem:[%s1 + $0x18] sm:$0xff]
    %v33 = vld [vmem:[%s1 + $0x20] sm:$0xff]
    %v34 = vld [vmem:[%s1 + $0x28] sm:$0xff]
    %v35 = vld [vmem:[%s1 + $0x30] sm:$0xff]
    %v36 = vld [vmem:[%s1 + $0x38] sm:$0xff]
    %v37 = vld [vmem:[%s2] sm:$0xff]
    %v38 = vld [vmem:[%s2 + $0x8] sm:$0xff]
    %v39 = vld [vmem:[%s2 + $0x10] sm:$0xff]
    %v40 = vld [vmem:[%s2 + $0x18] sm:$0xff]
    %v41 = vld [vmem:[%s2 + $0x20] sm:$0xff]
    %v42 = vld [vmem:[%s2 + $0x28] sm:$0xff]
    %v43 = vld [vmem:[%s2 + $0x30] sm:$0xff]
    %v44 = vld [vmem:[%s2 + $0x38] sm:$0xff]
    %v45 = vld [vmem:[%s3] sm:$0xff]
    %v46 = vld [vmem:[%s3 + $0x8] sm:$0x1]
    %v47 = vld [vmem:[%s3 + $0x10] sm:$0xff]
    %v48 = vld [vmem:[%s3 + $0x18] sm:$0xff]
    %v49 = vld [vmem:[%s3 + $0x20] sm:$0xff]
    %v50 = vld [vmem:[%s3 + $0x28] sm:$0xff]
    %v51 = vld [vmem:[%s3 + $0x30] sm:$0x1]
    %vm52 = vcmask 64512
    %v54 = vsel %vm52, %v21, 0
    %v57 = vsel %vm52, %v22, 0
    %v60 = vsel %vm52, %v23, 0
    %v63 = vsel %vm52, %v24, 0
    %v66 = vsel %vm52, %v25, 0
    %v69 = vsel %vm52, %v26, 0
    %v72 = vsel %vm52, %v27, 0
    %v75 = vsel %vm52, %v28, 0
    %77 = vmatprep.subr.mxu0 0.0
    %78 = vmatpush1.msra.mxu0 0.0
    %79 = vmatprep.subr.mxu0 0.0
    %80 = vmatpush1.msra.mxu0 0.0
    %81 = vmatprep.subr.mxu0 0.0
    %82 = vmatpush1.msra.mxu0 0.0
    %83 = vmatprep.subr.mxu0 0.0
    %84 = vmatpush1.msra.mxu0 0.0
    %85 = vmatprep.subr.mxu0 0.0
    %86 = vmatpush1.msra.mxu0 0.0
    %87 = vmatprep.subr.mxu0 0.0
    %88 = vmatpush1.msra.mxu0 0.0
    %89 = vmatprep.subr.mxu0 0.0
    %90 = vmatpush1.msra.mxu0 0.0
    %91 = vmatprep.subr.mxu0 0.0
    %92 = vmatpush1.msra.mxu0 0.0
    %93 = vmatprep.subr.mxu0 0.0
    %94 = vmatpush1.msra.mxu0 0.0
    %95 = vmatprep.subr.mxu0 0.0
    %96 = vmatpush1.msra.mxu0 0.0
    %97 = vmatprep.subr.mxu0 0.0
    %98 = vmatpush1.msra.mxu0 0.0
    %99 = vmatprep.subr.mxu0 0.0
    %100 = vmatpush1.msra.mxu0 0.0
    %101 = vmatprep.subr.mxu0 0.0
    %102 = vmatpush1.msra.mxu0 0.0
    %103 = vmatprep.subr.mxu0 0.0
    %104 = vmatpush1.msra.mxu0 0.0
    %105 = vmatprep.subr.mxu0 0.0
    %106 = vmatpush1.msra.mxu0 0.0
    %107 = vmatprep.subr.mxu0 0.0
    %108 = vmatpush1.msra.mxu0 %v45
    %109 = vmatprep.subr.mxu0 0.0
    %110 = vmatpush2.msra.mxu0 0.0
    %111 = vmatprep.subr.mxu0 0.0
    %112 = vmatpush2.msra.mxu0 0.0
    %113 = vmatprep.subr.mxu0 0.0
    %114 = vmatpush2.msra.mxu0 0.0
    %115 = vmatprep.subr.mxu0 0.0
    %116 = vmatpush2.msra.mxu0 0.0
    %117 = vmatprep.subr.mxu0 0.0
    %118 = vmatpush2.msra.mxu0 0.0
    %119 = vmatprep.subr.mxu0 0.0
    %120 = vmatpush2.msra.mxu0 0.0
    %121 = vmatprep.subr.mxu0 0.0
    %122 = vmatpush2.msra.mxu0 0.0
    %123 = vmatprep.subr.mxu0 0.0
    %124 = vmatpush2.msra.mxu0 0.0
    %125 = vmatprep.subr.mxu0 0.0
    %126 = vmatpush2.msra.mxu0 0.0
    %127 = vmatprep.subr.mxu0 0.0
    %128 = vmatpush2.msra.mxu0 0.0
    %129 = vmatprep.subr.mxu0 0.0
    %130 = vmatpush2.msra.mxu0 0.0
    %131 = vmatprep.subr.mxu0 0.0
    %132 = vmatpush2.msra.mxu0 0.0
    %133 = vmatprep.subr.mxu0 0.0
    %134 = vmatpush2.msra.mxu0 0.0
    %135 = vmatprep.subr.mxu0 0.0
    %136 = vmatpush2.msra.mxu0 0.0
    %137 = vmatprep.subr.mxu0 0.0
    %138 = vmatpush2.msra.mxu0 0.0
    %139 = vmatprep.subr.mxu0 0.0
    %140 = vmatpush2.msra.mxu0 0.0
    %141 = vmatprep.mubr.f32.mxu0 0.0
    %142 = vmatmul.mubr.f32.gmra.mxu0 %v54
    %v143 = vpop.f32.mrf.mxu0
    %v144 = vadd.f32 0.0, %v143
    %v145 = vpop.f32.mrf.mxu0
    %146 = vmatprep.mubr.f32.mxu0 0.0
    %147 = vmatmul.mubr.f32.gmra.mxu0 %v57
    %v148 = vpop.f32.mrf.mxu0
    %v149 = vadd.f32 0.0, %v148
    %v150 = vpop.f32.mrf.mxu0
    %151 = vmatprep.mubr.f32.mxu0 0.0
    %152 = vmatmul.mubr.f32.gmra.mxu0 %v60
    %v153 = vpop.f32.mrf.mxu0
    %v154 = vadd.f32 0.0, %v153
    %v155 = vpop.f32.mrf.mxu0
    %156 = vmatprep.mubr.f32.mxu0 0.0
    %157 = vmatmul.mubr.f32.gmra.mxu0 %v63
    %v158 = vpop.f32.mrf.mxu0
    %v159 = vadd.f32 0.0, %v158
    %v160 = vpop.f32.mrf.mxu0
    %161 = vmatprep.mubr.f32.mxu0 0.0
    %162 = vmatmul.mubr.f32.gmra.mxu0 %v66
    %v163 = vpop.f32.mrf.mxu0
    %v164 = vadd.f32 0.0, %v163
    %v165 = vpop.f32.mrf.mxu0
    %166 = vmatprep.mubr.f32.mxu0 0.0
    %167 = vmatmul.mubr.f32.gmra.mxu0 %v69
    %v168 = vpop.f32.mrf.mxu0
    %v169 = vadd.f32 0.0, %v168
    %v170 = vpop.f32.mrf.mxu0
    %171 = vmatprep.mubr.f32.mxu0 0.0
    %172 = vmatmul.mubr.f32.gmra.mxu0 %v72
    %v173 = vpop.f32.mrf.mxu0
    %v174 = vadd.f32 0.0, %v173
    %v175 = vpop.f32.mrf.mxu0
    %176 = vmatprep.mubr.f32.mxu0 0.0
    %177 = vmatmul.mubr.f32.gmra.mxu0 %v75
    %v178 = vpop.f32.mrf.mxu0
    %v179 = vadd.f32 0.0, %v178
    %v180 = vpop.f32.mrf.mxu0
    %181 = vdwg.mxu0
    %v182 = vlaneseq
    %v183 = vshrl.u32 %v182, 7
    %v184 = vsub.s32 0, %v183
    %v185 = vrot.slane %v46, %v184
    %v187 = vsel %vm52, %v29, 0
    %189 = vmatprep.subr.mxu0 0.0
    %190 = vmatpush1.msra.mxu0 0.0
    %191 = vmatprep.subr.mxu0 0.0
    %192 = vmatpush1.msra.mxu0 0.0
    %193 = vmatprep.subr.mxu0 0.0
    %194 = vmatpush1.msra.mxu0 0.0
    %195 = vmatprep.subr.mxu0 0.0
    %196 = vmatpush1.msra.mxu0 0.0
    %197 = vmatprep.subr.mxu0 0.0
    %198 = vmatpush1.msra.mxu0 0.0
    %199 = vmatprep.subr.mxu0 0.0
    %200 = vmatpush1.msra.mxu0 0.0
    %201 = vmatprep.subr.mxu0 0.0
    %202 = vmatpush1.msra.mxu0 0.0
    %203 = vmatprep.subr.mxu0 0.0
    %204 = vmatpush1.msra.mxu0 0.0
    %205 = vmatprep.subr.mxu0 0.0
    %206 = vmatpush1.msra.mxu0 0.0
    %207 = vmatprep.subr.mxu0 0.0
    %208 = vmatpush1.msra.mxu0 0.0
    %209 = vmatprep.subr.mxu0 0.0
    %210 = vmatpush1.msra.mxu0 0.0
    %211 = vmatprep.subr.mxu0 0.0
    %212 = vmatpush1.msra.mxu0 0.0
    %213 = vmatprep.subr.mxu0 0.0
    %214 = vmatpush1.msra.mxu0 0.0
    %215 = vmatprep.subr.mxu0 0.0
    %216 = vmatpush1.msra.mxu0 0.0
    %217 = vmatprep.subr.mxu0 0.0
    %218 = vmatpush1.msra.mxu0 0.0
    %219 = vmatprep.subr.mxu0 0.0
    %220 = vmatpush1.msra.mxu0 %v144
    %221 = vmatprep.subr.mxu0 0.0
    %222 = vmatpush2.msra.mxu0 0.0
    %223 = vmatprep.subr.mxu0 0.0
    %224 = vmatpush2.msra.mxu0 0.0
    %225 = vmatprep.subr.mxu0 0.0
    %226 = vmatpush2.msra.mxu0 0.0
    %227 = vmatprep.subr.mxu0 0.0
    %228 = vmatpush2.msra.mxu0 0.0
    %229 = vmatprep.subr.mxu0 0.0
    %230 = vmatpush2.msra.mxu0 0.0
    %231 = vmatprep.subr.mxu0 0.0
    %232 = vmatpush2.msra.mxu0 0.0
    %233 = vmatprep.subr.mxu0 0.0
    %234 = vmatpush2.msra.mxu0 0.0
    %235 = vmatprep.subr.mxu0 0.0
    %236 = vmatpush2.msra.mxu0 0.0
    %237 = vmatprep.subr.mxu0 0.0
    %238 = vmatpush2.msra.mxu0 0.0
    %239 = vmatprep.subr.mxu0 0.0
    %240 = vmatpush2.msra.mxu0 0.0
    %241 = vmatprep.subr.mxu0 0.0
    %242 = vmatpush2.msra.mxu0 0.0
    %243 = vmatprep.subr.mxu0 0.0
    %244 = vmatpush2.msra.mxu0 0.0
    %245 = vmatprep.subr.mxu0 0.0
    %246 = vmatpush2.msra.mxu0 0.0
    %247 = vmatprep.subr.mxu0 0.0
    %248 = vmatpush2.msra.mxu0 0.0
    %249 = vmatprep.subr.mxu0 0.0
    %250 = vmatpush2.msra.mxu0 0.0
    %251 = vmatprep.subr.mxu0 0.0
    %252 = vmatpush2.msra.mxu0 0.0
    %253 = vmatprep.mubr.f32.mxu0 0.0
    %254 = vmatmul.mubr.f32.gmra.mxu0 %v187
    %v255 = vpop.f32.mrf.mxu0
    %v256 = vadd.f32 %v185, %v255
    %v257 = vpop.f32.mrf.mxu0
    %258 = vdwg.mxu0
    %v260 = vsel %vm52, %v30, 0
    %262 = vmatprep.subr.mxu0 0.0
    %263 = vmatpush1.msra.mxu0 0.0
    %264 = vmatprep.subr.mxu0 0.0
    %265 = vmatpush1.msra.mxu0 0.0
    %266 = vmatprep.subr.mxu0 0.0
    %267 = vmatpush1.msra.mxu0 0.0
    %268 = vmatprep.subr.mxu0 0.0
    %269 = vmatpush1.msra.mxu0 0.0
    %270 = vmatprep.subr.mxu0 0.0
    %271 = vmatpush1.msra.mxu0 0.0
    %272 = vmatprep.subr.mxu0 0.0
    %273 = vmatpush1.msra.mxu0 0.0
    %274 = vmatprep.subr.mxu0 0.0
    %275 = vmatpush1.msra.mxu0 0.0
    %276 = vmatprep.subr.mxu0 0.0
    %277 = vmatpush1.msra.mxu0 0.0
    %278 = vmatprep.subr.mxu0 0.0
    %279 = vmatpush1.msra.mxu0 0.0
    %280 = vmatprep.subr.mxu0 0.0
    %281 = vmatpush1.msra.mxu0 0.0
    %282 = vmatprep.subr.mxu0 0.0
    %283 = vmatpush1.msra.mxu0 0.0
    %284 = vmatprep.subr.mxu0 0.0
    %285 = vmatpush1.msra.mxu0 0.0
    %286 = vmatprep.subr.mxu0 0.0
    %287 = vmatpush1.msra.mxu0 0.0
    %288 = vmatprep.subr.mxu0 0.0
    %289 = vmatpush1.msra.mxu0 0.0
    %290 = vmatprep.subr.mxu0 0.0
    %291 = vmatpush1.msra.mxu0 0.0
    %292 = vmatprep.subr.mxu0 0.0
    %293 = vmatpush1.msra.mxu0 %v149
    %294 = vmatprep.subr.mxu0 0.0
    %295 = vmatpush2.msra.mxu0 0.0
    %296 = vmatprep.subr.mxu0 0.0
    %297 = vmatpush2.msra.mxu0 0.0
    %298 = vmatprep.subr.mxu0 0.0
    %299 = vmatpush2.msra.mxu0 0.0
    %300 = vmatprep.subr.mxu0 0.0
    %301 = vmatpush2.msra.mxu0 0.0
    %302 = vmatprep.subr.mxu0 0.0
    %303 = vmatpush2.msra.mxu0 0.0
    %304 = vmatprep.subr.mxu0 0.0
    %305 = vmatpush2.msra.mxu0 0.0
    %306 = vmatprep.subr.mxu0 0.0
    %307 = vmatpush2.msra.mxu0 0.0
    %308 = vmatprep.subr.mxu0 0.0
    %309 = vmatpush2.msra.mxu0 0.0
    %310 = vmatprep.subr.mxu0 0.0
    %311 = vmatpush2.msra.mxu0 0.0
    %312 = vmatprep.subr.mxu0 0.0
    %313 = vmatpush2.msra.mxu0 0.0
    %314 = vmatprep.subr.mxu0 0.0
    %315 = vmatpush2.msra.mxu0 0.0
    %316 = vmatprep.subr.mxu0 0.0
    %317 = vmatpush2.msra.mxu0 0.0
    %318 = vmatprep.subr.mxu0 0.0
    %319 = vmatpush2.msra.mxu0 0.0
    %320 = vmatprep.subr.mxu0 0.0
    %321 = vmatpush2.msra.mxu0 0.0
    %322 = vmatprep.subr.mxu0 0.0
    %323 = vmatpush2.msra.mxu0 0.0
    %324 = vmatprep.subr.mxu0 0.0
    %325 = vmatpush2.msra.mxu0 0.0
    %326 = vmatprep.mubr.f32.mxu0 0.0
    %327 = vmatmul.mubr.f32.gmra.mxu0 %v260
    %v328 = vpop.f32.mrf.mxu0
    %v329 = vadd.f32 %v185, %v328
    %v330 = vpop.f32.mrf.mxu0
    %331 = vdwg.mxu0
    %v333 = vsel %vm52, %v31, 0
    %335 = vmatprep.subr.mxu0 0.0
    %336 = vmatpush1.msra.mxu0 0.0
    %337 = vmatprep.subr.mxu0 0.0
    %338 = vmatpush1.msra.mxu0 0.0
    %339 = vmatprep.subr.mxu0 0.0
    %340 = vmatpush1.msra.mxu0 0.0
    %341 = vmatprep.subr.mxu0 0.0
    %342 = vmatpush1.msra.mxu0 0.0
    %343 = vmatprep.subr.mxu0 0.0
    %344 = vmatpush1.msra.mxu0 0.0
    %345 = vmatprep.subr.mxu0 0.0
    %346 = vmatpush1.msra.mxu0 0.0
    %347 = vmatprep.subr.mxu0 0.0
    %348 = vmatpush1.msra.mxu0 0.0
    %349 = vmatprep.subr.mxu0 0.0
    %350 = vmatpush1.msra.mxu0 0.0
    %351 = vmatprep.subr.mxu0 0.0
    %352 = vmatpush1.msra.mxu0 0.0
    %353 = vmatprep.subr.mxu0 0.0
    %354 = vmatpush1.msra.mxu0 0.0
    %355 = vmatprep.subr.mxu0 0.0
    %356 = vmatpush1.msra.mxu0 0.0
    %357 = vmatprep.subr.mxu0 0.0
    %358 = vmatpush1.msra.mxu0 0.0
    %359 = vmatprep.subr.mxu0 0.0
    %360 = vmatpush1.msra.mxu0 0.0
    %361 = vmatprep.subr.mxu0 0.0
    %362 = vmatpush1.msra.mxu0 0.0
    %363 = vmatprep.subr.mxu0 0.0
    %364 = vmatpush1.msra.mxu0 0.0
    %365 = vmatprep.subr.mxu0 0.0
    %366 = vmatpush1.msra.mxu0 %v154
    %367 = vmatprep.subr.mxu0 0.0
    %368 = vmatpush2.msra.mxu0 0.0
    %369 = vmatprep.subr.mxu0 0.0
    %370 = vmatpush2.msra.mxu0 0.0
    %371 = vmatprep.subr.mxu0 0.0
    %372 = vmatpush2.msra.mxu0 0.0
    %373 = vmatprep.subr.mxu0 0.0
    %374 = vmatpush2.msra.mxu0 0.0
    %375 = vmatprep.subr.mxu0 0.0
    %376 = vmatpush2.msra.mxu0 0.0
    %377 = vmatprep.subr.mxu0 0.0
    %378 = vmatpush2.msra.mxu0 0.0
    %379 = vmatprep.subr.mxu0 0.0
    %380 = vmatpush2.msra.mxu0 0.0
    %381 = vmatprep.subr.mxu0 0.0
    %382 = vmatpush2.msra.mxu0 0.0
    %383 = vmatprep.subr.mxu0 0.0
    %384 = vmatpush2.msra.mxu0 0.0
    %385 = vmatprep.subr.mxu0 0.0
    %386 = vmatpush2.msra.mxu0 0.0
    %387 = vmatprep.subr.mxu0 0.0
    %388 = vmatpush2.msra.mxu0 0.0
    %389 = vmatprep.subr.mxu0 0.0
    %390 = vmatpush2.msra.mxu0 0.0
    %391 = vmatprep.subr.mxu0 0.0
    %392 = vmatpush2.msra.mxu0 0.0
    %393 = vmatprep.subr.mxu0 0.0
    %394 = vmatpush2.msra.mxu0 0.0
    %395 = vmatprep.subr.mxu0 0.0
    %396 = vmatpush2.msra.mxu0 0.0
    %397 = vmatprep.subr.mxu0 0.0
    %398 = vmatpush2.msra.mxu0 0.0
    %399 = vmatprep.mubr.f32.mxu0 0.0
    %400 = vmatmul.mubr.f32.gmra.mxu0 %v333
    %v401 = vpop.f32.mrf.mxu0
    %v402 = vadd.f32 %v185, %v401
    %v403 = vpop.f32.mrf.mxu0
    %404 = vdwg.mxu0
    %v406 = vsel %vm52, %v32, 0
    %408 = vmatprep.subr.mxu0 0.0
    %409 = vmatpush1.msra.mxu0 0.0
    %410 = vmatprep.subr.mxu0 0.0
    %411 = vmatpush1.msra.mxu0 0.0
    %412 = vmatprep.subr.mxu0 0.0
    %413 = vmatpush1.msra.mxu0 0.0
    %414 = vmatprep.subr.mxu0 0.0
    %415 = vmatpush1.msra.mxu0 0.0
    %416 = vmatprep.subr.mxu0 0.0
    %417 = vmatpush1.msra.mxu0 0.0
    %418 = vmatprep.subr.mxu0 0.0
    %419 = vmatpush1.msra.mxu0 0.0
    %420 = vmatprep.subr.mxu0 0.0
    %421 = vmatpush1.msra.mxu0 0.0
    %422 = vmatprep.subr.mxu0 0.0
    %423 = vmatpush1.msra.mxu0 0.0
    %424 = vmatprep.subr.mxu0 0.0
    %425 = vmatpush1.msra.mxu0 0.0
    %426 = vmatprep.subr.mxu0 0.0
    %427 = vmatpush1.msra.mxu0 0.0
    %428 = vmatprep.subr.mxu0 0.0
    %429 = vmatpush1.msra.mxu0 0.0
    %430 = vmatprep.subr.mxu0 0.0
    %431 = vmatpush1.msra.mxu0 0.0
    %432 = vmatprep.subr.mxu0 0.0
    %433 = vmatpush1.msra.mxu0 0.0
    %434 = vmatprep.subr.mxu0 0.0
    %435 = vmatpush1.msra.mxu0 0.0
    %436 = vmatprep.subr.mxu0 0.0
    %437 = vmatpush1.msra.mxu0 0.0
    %438 = vmatprep.subr.mxu0 0.0
    %439 = vmatpush1.msra.mxu0 %v159
    %440 = vmatprep.subr.mxu0 0.0
    %441 = vmatpush2.msra.mxu0 0.0
    %442 = vmatprep.subr.mxu0 0.0
    %443 = vmatpush2.msra.mxu0 0.0
    %444 = vmatprep.subr.mxu0 0.0
    %445 = vmatpush2.msra.mxu0 0.0
    %446 = vmatprep.subr.mxu0 0.0
    %447 = vmatpush2.msra.mxu0 0.0
    %448 = vmatprep.subr.mxu0 0.0
    %449 = vmatpush2.msra.mxu0 0.0
    %450 = vmatprep.subr.mxu0 0.0
    %451 = vmatpush2.msra.mxu0 0.0
    %452 = vmatprep.subr.mxu0 0.0
    %453 = vmatpush2.msra.mxu0 0.0
    %454 = vmatprep.subr.mxu0 0.0
    %455 = vmatpush2.msra.mxu0 0.0
    %456 = vmatprep.subr.mxu0 0.0
    %457 = vmatpush2.msra.mxu0 0.0
    %458 = vmatprep.subr.mxu0 0.0
    %459 = vmatpush2.msra.mxu0 0.0
    %460 = vmatprep.subr.mxu0 0.0
    %461 = vmatpush2.msra.mxu0 0.0
    %462 = vmatprep.subr.mxu0 0.0
    %463 = vmatpush2.msra.mxu0 0.0
    %464 = vmatprep.subr.mxu0 0.0
    %465 = vmatpush2.msra.mxu0 0.0
    %466 = vmatprep.subr.mxu0 0.0
    %467 = vmatpush2.msra.mxu0 0.0
    %468 = vmatprep.subr.mxu0 0.0
    %469 = vmatpush2.msra.mxu0 0.0
    %470 = vmatprep.subr.mxu0 0.0
    %471 = vmatpush2.msra.mxu0 0.0
    %472 = vmatprep.mubr.f32.mxu0 0.0
    %473 = vmatmul.mubr.f32.gmra.mxu0 %v406
    %v474 = vpop.f32.mrf.mxu0
    %v475 = vadd.f32 %v185, %v474
    %v476 = vpop.f32.mrf.mxu0
    %477 = vdwg.mxu0
    %v479 = vsel %vm52, %v33, 0
    %481 = vmatprep.subr.mxu0 0.0
    %482 = vmatpush1.msra.mxu0 0.0
    %483 = vmatprep.subr.mxu0 0.0
    %484 = vmatpush1.msra.mxu0 0.0
    %485 = vmatprep.subr.mxu0 0.0
    %486 = vmatpush1.msra.mxu0 0.0
    %487 = vmatprep.subr.mxu0 0.0
    %488 = vmatpush1.msra.mxu0 0.0
    %489 = vmatprep.subr.mxu0 0.0
    %490 = vmatpush1.msra.mxu0 0.0
    %491 = vmatprep.subr.mxu0 0.0
    %492 = vmatpush1.msra.mxu0 0.0
    %493 = vmatprep.subr.mxu0 0.0
    %494 = vmatpush1.msra.mxu0 0.0
    %495 = vmatprep.subr.mxu0 0.0
    %496 = vmatpush1.msra.mxu0 0.0
    %497 = vmatprep.subr.mxu0 0.0
    %498 = vmatpush1.msra.mxu0 0.0
    %499 = vmatprep.subr.mxu0 0.0
    %500 = vmatpush1.msra.mxu0 0.0
    %501 = vmatprep.subr.mxu0 0.0
    %502 = vmatpush1.msra.mxu0 0.0
    %503 = vmatprep.subr.mxu0 0.0
    %504 = vmatpush1.msra.mxu0 0.0
    %505 = vmatprep.subr.mxu0 0.0
    %506 = vmatpush1.msra.mxu0 0.0
    %507 = vmatprep.subr.mxu0 0.0
    %508 = vmatpush1.msra.mxu0 0.0
    %509 = vmatprep.subr.mxu0 0.0
    %510 = vmatpush1.msra.mxu0 0.0
    %511 = vmatprep.subr.mxu0 0.0
    %512 = vmatpush1.msra.mxu0 %v164
    %513 = vmatprep.subr.mxu0 0.0
    %514 = vmatpush2.msra.mxu0 0.0
    %515 = vmatprep.subr.mxu0 0.0
    %516 = vmatpush2.msra.mxu0 0.0
    %517 = vmatprep.subr.mxu0 0.0
    %518 = vmatpush2.msra.mxu0 0.0
    %519 = vmatprep.subr.mxu0 0.0
    %520 = vmatpush2.msra.mxu0 0.0
    %521 = vmatprep.subr.mxu0 0.0
    %522 = vmatpush2.msra.mxu0 0.0
    %523 = vmatprep.subr.mxu0 0.0
    %524 = vmatpush2.msra.mxu0 0.0
    %525 = vmatprep.subr.mxu0 0.0
    %526 = vmatpush2.msra.mxu0 0.0
    %527 = vmatprep.subr.mxu0 0.0
    %528 = vmatpush2.msra.mxu0 0.0
    %529 = vmatprep.subr.mxu0 0.0
    %530 = vmatpush2.msra.mxu0 0.0
    %531 = vmatprep.subr.mxu0 0.0
    %532 = vmatpush2.msra.mxu0 0.0
    %533 = vmatprep.subr.mxu0 0.0
    %534 = vmatpush2.msra.mxu0 0.0
    %535 = vmatprep.subr.mxu0 0.0
    %536 = vmatpush2.msra.mxu0 0.0
    %537 = vmatprep.subr.mxu0 0.0
    %538 = vmatpush2.msra.mxu0 0.0
    %539 = vmatprep.subr.mxu0 0.0
    %540 = vmatpush2.msra.mxu0 0.0
    %541 = vmatprep.subr.mxu0 0.0
    %542 = vmatpush2.msra.mxu0 0.0
    %543 = vmatprep.subr.mxu0 0.0
    %544 = vmatpush2.msra.mxu0 0.0
    %545 = vmatprep.mubr.f32.mxu0 0.0
    %546 = vmatmul.mubr.f32.gmra.mxu0 %v479
    %v547 = vpop.f32.mrf.mxu0
    %v548 = vadd.f32 %v185, %v547
    %v549 = vpop.f32.mrf.mxu0
    %550 = vdwg.mxu0
    %v552 = vsel %vm52, %v34, 0
    %554 = vmatprep.subr.mxu0 0.0
    %555 = vmatpush1.msra.mxu0 0.0
    %556 = vmatprep.subr.mxu0 0.0
    %557 = vmatpush1.msra.mxu0 0.0
    %558 = vmatprep.subr.mxu0 0.0
    %559 = vmatpush1.msra.mxu0 0.0
    %560 = vmatprep.subr.mxu0 0.0
    %561 = vmatpush1.msra.mxu0 0.0
    %562 = vmatprep.subr.mxu0 0.0
    %563 = vmatpush1.msra.mxu0 0.0
    %564 = vmatprep.subr.mxu0 0.0
    %565 = vmatpush1.msra.mxu0 0.0
    %566 = vmatprep.subr.mxu0 0.0
    %567 = vmatpush1.msra.mxu0 0.0
    %568 = vmatprep.subr.mxu0 0.0
    %569 = vmatpush1.msra.mxu0 0.0
    %570 = vmatprep.subr.mxu0 0.0
    %571 = vmatpush1.msra.mxu0 0.0
    %572 = vmatprep.subr.mxu0 0.0
    %573 = vmatpush1.msra.mxu0 0.0
    %574 = vmatprep.subr.mxu0 0.0
    %575 = vmatpush1.msra.mxu0 0.0
    %576 = vmatprep.subr.mxu0 0.0
    %577 = vmatpush1.msra.mxu0 0.0
    %578 = vmatprep.subr.mxu0 0.0
    %579 = vmatpush1.msra.mxu0 0.0
    %580 = vmatprep.subr.mxu0 0.0
    %581 = vmatpush1.msra.mxu0 0.0
    %582 = vmatprep.subr.mxu0 0.0
    %583 = vmatpush1.msra.mxu0 0.0
    %584 = vmatprep.subr.mxu0 0.0
    %585 = vmatpush1.msra.mxu0 %v169
    %586 = vmatprep.subr.mxu0 0.0
    %587 = vmatpush2.msra.mxu0 0.0
    %588 = vmatprep.subr.mxu0 0.0
    %589 = vmatpush2.msra.mxu0 0.0
    %590 = vmatprep.subr.mxu0 0.0
    %591 = vmatpush2.msra.mxu0 0.0
    %592 = vmatprep.subr.mxu0 0.0
    %593 = vmatpush2.msra.mxu0 0.0
    %594 = vmatprep.subr.mxu0 0.0
    %595 = vmatpush2.msra.mxu0 0.0
    %596 = vmatprep.subr.mxu0 0.0
    %597 = vmatpush2.msra.mxu0 0.0
    %598 = vmatprep.subr.mxu0 0.0
    %599 = vmatpush2.msra.mxu0 0.0
    %600 = vmatprep.subr.mxu0 0.0
    %601 = vmatpush2.msra.mxu0 0.0
    %602 = vmatprep.subr.mxu0 0.0
    %603 = vmatpush2.msra.mxu0 0.0
    %604 = vmatprep.subr.mxu0 0.0
    %605 = vmatpush2.msra.mxu0 0.0
    %606 = vmatprep.subr.mxu0 0.0
    %607 = vmatpush2.msra.mxu0 0.0
    %608 = vmatprep.subr.mxu0 0.0
    %609 = vmatpush2.msra.mxu0 0.0
    %610 = vmatprep.subr.mxu0 0.0
    %611 = vmatpush2.msra.mxu0 0.0
    %612 = vmatprep.subr.mxu0 0.0
    %613 = vmatpush2.msra.mxu0 0.0
    %614 = vmatprep.subr.mxu0 0.0
    %615 = vmatpush2.msra.mxu0 0.0
    %616 = vmatprep.subr.mxu0 0.0
    %617 = vmatpush2.msra.mxu0 0.0
    %618 = vmatprep.mubr.f32.mxu0 0.0
    %619 = vmatmul.mubr.f32.gmra.mxu0 %v552
    %v620 = vpop.f32.mrf.mxu0
    %v621 = vadd.f32 %v185, %v620
    %v622 = vpop.f32.mrf.mxu0
    %623 = vdwg.mxu0
    %v625 = vsel %vm52, %v35, 0
    %627 = vmatprep.subr.mxu0 0.0
    %628 = vmatpush1.msra.mxu0 0.0
    %629 = vmatprep.subr.mxu0 0.0
    %630 = vmatpush1.msra.mxu0 0.0
    %631 = vmatprep.subr.mxu0 0.0
    %632 = vmatpush1.msra.mxu0 0.0
    %633 = vmatprep.subr.mxu0 0.0
    %634 = vmatpush1.msra.mxu0 0.0
    %635 = vmatprep.subr.mxu0 0.0
    %636 = vmatpush1.msra.mxu0 0.0
    %637 = vmatprep.subr.mxu0 0.0
    %638 = vmatpush1.msra.mxu0 0.0
    %639 = vmatprep.subr.mxu0 0.0
    %640 = vmatpush1.msra.mxu0 0.0
    %641 = vmatprep.subr.mxu0 0.0
    %642 = vmatpush1.msra.mxu0 0.0
    %643 = vmatprep.subr.mxu0 0.0
    %644 = vmatpush1.msra.mxu0 0.0
    %645 = vmatprep.subr.mxu0 0.0
    %646 = vmatpush1.msra.mxu0 0.0
    %647 = vmatprep.subr.mxu0 0.0
    %648 = vmatpush1.msra.mxu0 0.0
    %649 = vmatprep.subr.mxu0 0.0
    %650 = vmatpush1.msra.mxu0 0.0
    %651 = vmatprep.subr.mxu0 0.0
    %652 = vmatpush1.msra.mxu0 0.0
    %653 = vmatprep.subr.mxu0 0.0
    %654 = vmatpush1.msra.mxu0 0.0
    %655 = vmatprep.subr.mxu0 0.0
    %656 = vmatpush1.msra.mxu0 0.0
    %657 = vmatprep.subr.mxu0 0.0
    %658 = vmatpush1.msra.mxu0 %v174
    %659 = vmatprep.subr.mxu0 0.0
    %660 = vmatpush2.msra.mxu0 0.0
    %661 = vmatprep.subr.mxu0 0.0
    %662 = vmatpush2.msra.mxu0 0.0
    %663 = vmatprep.subr.mxu0 0.0
    %664 = vmatpush2.msra.mxu0 0.0
    %665 = vmatprep.subr.mxu0 0.0
    %666 = vmatpush2.msra.mxu0 0.0
    %667 = vmatprep.subr.mxu0 0.0
    %668 = vmatpush2.msra.mxu0 0.0
    %669 = vmatprep.subr.mxu0 0.0
    %670 = vmatpush2.msra.mxu0 0.0
    %671 = vmatprep.subr.mxu0 0.0
    %672 = vmatpush2.msra.mxu0 0.0
    %673 = vmatprep.subr.mxu0 0.0
    %674 = vmatpush2.msra.mxu0 0.0
    %675 = vmatprep.subr.mxu0 0.0
    %676 = vmatpush2.msra.mxu0 0.0
    %677 = vmatprep.subr.mxu0 0.0
    %678 = vmatpush2.msra.mxu0 0.0
    %679 = vmatprep.subr.mxu0 0.0
    %680 = vmatpush2.msra.mxu0 0.0
    %681 = vmatprep.subr.mxu0 0.0
    %682 = vmatpush2.msra.mxu0 0.0
    %683 = vmatprep.subr.mxu0 0.0
    %684 = vmatpush2.msra.mxu0 0.0
    %685 = vmatprep.subr.mxu0 0.0
    %686 = vmatpush2.msra.mxu0 0.0
    %687 = vmatprep.subr.mxu0 0.0
    %688 = vmatpush2.msra.mxu0 0.0
    %689 = vmatprep.subr.mxu0 0.0
    %690 = vmatpush2.msra.mxu0 0.0
    %691 = vmatprep.mubr.f32.mxu0 0.0
    %692 = vmatmul.mubr.f32.gmra.mxu0 %v625
    %v693 = vpop.f32.mrf.mxu0
    %v694 = vadd.f32 %v185, %v693
    %v695 = vpop.f32.mrf.mxu0
    %696 = vdwg.mxu0
    %v698 = vsel %vm52, %v36, 0
    %700 = vmatprep.subr.mxu0 0.0
    %701 = vmatpush1.msra.mxu0 0.0
    %702 = vmatprep.subr.mxu0 0.0
    %703 = vmatpush1.msra.mxu0 0.0
    %704 = vmatprep.subr.mxu0 0.0
    %705 = vmatpush1.msra.mxu0 0.0
    %706 = vmatprep.subr.mxu0 0.0
    %707 = vmatpush1.msra.mxu0 0.0
    %708 = vmatprep.subr.mxu0 0.0
    %709 = vmatpush1.msra.mxu0 0.0
    %710 = vmatprep.subr.mxu0 0.0
    %711 = vmatpush1.msra.mxu0 0.0
    %712 = vmatprep.subr.mxu0 0.0
    %713 = vmatpush1.msra.mxu0 0.0
    %714 = vmatprep.subr.mxu0 0.0
    %715 = vmatpush1.msra.mxu0 0.0
    %716 = vmatprep.subr.mxu0 0.0
    %717 = vmatpush1.msra.mxu0 0.0
    %718 = vmatprep.subr.mxu0 0.0
    %719 = vmatpush1.msra.mxu0 0.0
    %720 = vmatprep.subr.mxu0 0.0
    %721 = vmatpush1.msra.mxu0 0.0
    %722 = vmatprep.subr.mxu0 0.0
    %723 = vmatpush1.msra.mxu0 0.0
    %724 = vmatprep.subr.mxu0 0.0
    %725 = vmatpush1.msra.mxu0 0.0
    %726 = vmatprep.subr.mxu0 0.0
    %727 = vmatpush1.msra.mxu0 0.0
    %728 = vmatprep.subr.mxu0 0.0
    %729 = vmatpush1.msra.mxu0 0.0
    %730 = vmatprep.subr.mxu0 0.0
    %731 = vmatpush1.msra.mxu0 %v179
    %732 = vmatprep.subr.mxu0 0.0
    %733 = vmatpush2.msra.mxu0 0.0
    %734 = vmatprep.subr.mxu0 0.0
    %735 = vmatpush2.msra.mxu0 0.0
    %736 = vmatprep.subr.mxu0 0.0
    %737 = vmatpush2.msra.mxu0 0.0
    %738 = vmatprep.subr.mxu0 0.0
    %739 = vmatpush2.msra.mxu0 0.0
    %740 = vmatprep.subr.mxu0 0.0
    %741 = vmatpush2.msra.mxu0 0.0
    %742 = vmatprep.subr.mxu0 0.0
    %743 = vmatpush2.msra.mxu0 0.0
    %744 = vmatprep.subr.mxu0 0.0
    %745 = vmatpush2.msra.mxu0 0.0
    %746 = vmatprep.subr.mxu0 0.0
    %747 = vmatpush2.msra.mxu0 0.0
    %748 = vmatprep.subr.mxu0 0.0
    %749 = vmatpush2.msra.mxu0 0.0
    %750 = vmatprep.subr.mxu0 0.0
    %751 = vmatpush2.msra.mxu0 0.0
    %752 = vmatprep.subr.mxu0 0.0
    %753 = vmatpush2.msra.mxu0 0.0
    %754 = vmatprep.subr.mxu0 0.0
    %755 = vmatpush2.msra.mxu0 0.0
    %756 = vmatprep.subr.mxu0 0.0
    %757 = vmatpush2.msra.mxu0 0.0
    %758 = vmatprep.subr.mxu0 0.0
    %759 = vmatpush2.msra.mxu0 0.0
    %760 = vmatprep.subr.mxu0 0.0
    %761 = vmatpush2.msra.mxu0 0.0
    %762 = vmatprep.subr.mxu0 0.0
    %763 = vmatpush2.msra.mxu0 0.0
    %764 = vmatprep.mubr.f32.mxu0 0.0
    %765 = vmatmul.mubr.f32.gmra.mxu0 %v698
    %v766 = vpop.f32.mrf.mxu0
    %v767 = vadd.f32 %v185, %v766
    %v768 = vpop.f32.mrf.mxu0
    %769 = vdwg.mxu0
    %v770 = vmax.f32 %v256, 0.0
    %v771 = vmax.f32 %v329, 0.0
    %v772 = vmax.f32 %v402, 0.0
    %v773 = vmax.f32 %v475, 0.0
    %v774 = vmax.f32 %v548, 0.0
    %v775 = vmax.f32 %v621, 0.0
    %v776 = vmax.f32 %v694, 0.0
    %v777 = vmax.f32 %v767, 0.0
    %vm778 = vcmask 261120
    %v780 = vsel %vm778, %v770, 0
    %v783 = vsel %vm778, %v771, 0
    %v786 = vsel %vm778, %v772, 0
    %v789 = vsel %vm778, %v773, 0
    %v792 = vsel %vm778, %v774, 0
    %v795 = vsel %vm778, %v775, 0
    %v798 = vsel %vm778, %v776, 0
    %v801 = vsel %vm778, %v777, 0
    %803 = vmatprep.subr.mxu0 0.0
    %804 = vmatpush1.msra.mxu0 0.0
    %805 = vmatprep.subr.mxu0 0.0
    %806 = vmatpush1.msra.mxu0 0.0
    %807 = vmatprep.subr.mxu0 0.0
    %808 = vmatpush1.msra.mxu0 0.0
    %809 = vmatprep.subr.mxu0 0.0
    %810 = vmatpush1.msra.mxu0 0.0
    %811 = vmatprep.subr.mxu0 0.0
    %812 = vmatpush1.msra.mxu0 0.0
    %813 = vmatprep.subr.mxu0 0.0
    %814 = vmatpush1.msra.mxu0 0.0
    %815 = vmatprep.subr.mxu0 0.0
    %816 = vmatpush1.msra.mxu0 0.0
    %817 = vmatprep.subr.mxu0 0.0
    %818 = vmatpush1.msra.mxu0 0.0
    %819 = vmatprep.subr.mxu0 0.0
    %820 = vmatpush1.msra.mxu0 0.0
    %821 = vmatprep.subr.mxu0 0.0
    %822 = vmatpush1.msra.mxu0 0.0
    %823 = vmatprep.subr.mxu0 0.0
    %824 = vmatpush1.msra.mxu0 0.0
    %825 = vmatprep.subr.mxu0 0.0
    %826 = vmatpush1.msra.mxu0 0.0
    %827 = vmatprep.subr.mxu0 0.0
    %828 = vmatpush1.msra.mxu0 %v50
    %829 = vmatprep.subr.mxu0 0.0
    %830 = vmatpush1.msra.mxu0 %v49
    %831 = vmatprep.subr.mxu0 0.0
    %832 = vmatpush1.msra.mxu0 %v48
    %833 = vmatprep.subr.mxu0 0.0
    %834 = vmatpush1.msra.mxu0 %v47
    %835 = vmatprep.subr.mxu0 0.0
    %836 = vmatpush2.msra.mxu0 0.0
    %837 = vmatprep.subr.mxu0 0.0
    %838 = vmatpush2.msra.mxu0 0.0
    %839 = vmatprep.subr.mxu0 0.0
    %840 = vmatpush2.msra.mxu0 0.0
    %841 = vmatprep.subr.mxu0 0.0
    %842 = vmatpush2.msra.mxu0 0.0
    %843 = vmatprep.subr.mxu0 0.0
    %844 = vmatpush2.msra.mxu0 0.0
    %845 = vmatprep.subr.mxu0 0.0
    %846 = vmatpush2.msra.mxu0 0.0
    %847 = vmatprep.subr.mxu0 0.0
    %848 = vmatpush2.msra.mxu0 0.0
    %849 = vmatprep.subr.mxu0 0.0
    %850 = vmatpush2.msra.mxu0 0.0
    %851 = vmatprep.subr.mxu0 0.0
    %852 = vmatpush2.msra.mxu0 0.0
    %853 = vmatprep.subr.mxu0 0.0
    %854 = vmatpush2.msra.mxu0 0.0
    %855 = vmatprep.subr.mxu0 0.0
    %856 = vmatpush2.msra.mxu0 0.0
    %857 = vmatprep.subr.mxu0 0.0
    %858 = vmatpush2.msra.mxu0 0.0
    %859 = vmatprep.subr.mxu0 0.0
    %860 = vmatpush2.msra.mxu0 0.0
    %861 = vmatprep.subr.mxu0 0.0
    %862 = vmatpush2.msra.mxu0 0.0
    %863 = vmatprep.subr.mxu0 0.0
    %864 = vmatpush2.msra.mxu0 0.0
    %865 = vmatprep.subr.mxu0 0.0
    %866 = vmatpush2.msra.mxu0 0.0
    %867 = vmatprep.mubr.f32.mxu0 0.0
    %868 = vmatmul.mubr.f32.gmra.mxu0 %v780
    %v869 = vpop.f32.mrf.mxu0
    %v870 = vadd.f32 0.0, %v869
    %v871 = vpop.f32.mrf.mxu0
    %872 = vmatprep.mubr.f32.mxu0 0.0
    %873 = vmatmul.mubr.f32.gmra.mxu0 %v783
    %v874 = vpop.f32.mrf.mxu0
    %v875 = vadd.f32 0.0, %v874
    %v876 = vpop.f32.mrf.mxu0
    %877 = vmatprep.mubr.f32.mxu0 0.0
    %878 = vmatmul.mubr.f32.gmra.mxu0 %v786
    %v879 = vpop.f32.mrf.mxu0
    %v880 = vadd.f32 0.0, %v879
    %v881 = vpop.f32.mrf.mxu0
    %882 = vmatprep.mubr.f32.mxu0 0.0
    %883 = vmatmul.mubr.f32.gmra.mxu0 %v789
    %v884 = vpop.f32.mrf.mxu0
    %v885 = vadd.f32 0.0, %v884
    %v886 = vpop.f32.mrf.mxu0
    %887 = vmatprep.mubr.f32.mxu0 0.0
    %888 = vmatmul.mubr.f32.gmra.mxu0 %v792
    %v889 = vpop.f32.mrf.mxu0
    %v890 = vadd.f32 0.0, %v889
    %v891 = vpop.f32.mrf.mxu0
    %892 = vmatprep.mubr.f32.mxu0 0.0
    %893 = vmatmul.mubr.f32.gmra.mxu0 %v795
    %v894 = vpop.f32.mrf.mxu0
    %v895 = vadd.f32 0.0, %v894
    %v896 = vpop.f32.mrf.mxu0
    %897 = vmatprep.mubr.f32.mxu0 0.0
    %898 = vmatmul.mubr.f32.gmra.mxu0 %v798
    %v899 = vpop.f32.mrf.mxu0
    %v900 = vadd.f32 0.0, %v899
    %v901 = vpop.f32.mrf.mxu0
    %902 = vmatprep.mubr.f32.mxu0 0.0
    %903 = vmatmul.mubr.f32.gmra.mxu0 %v801
    %v904 = vpop.f32.mrf.mxu0
    %v905 = vadd.f32 0.0, %v904
    %v906 = vpop.f32.mrf.mxu0
    %907 = vdwg.mxu0
    %v908 = vlaneseq
    %v909 = vshrl.u32 %v908, 7
    %v910 = vsub.s32 0, %v909
    %v911 = vrot.slane %v51, %v910
    %912 = vmatprep.subr.mxu0 0.0
    %913 = vmatpush1.msra.mxu0 0.0
    %914 = vmatprep.subr.mxu0 0.0
    %915 = vmatpush1.msra.mxu0 0.0
    %916 = vmatprep.subr.mxu0 0.0
    %917 = vmatpush1.msra.mxu0 0.0
    %918 = vmatprep.subr.mxu0 0.0
    %919 = vmatpush1.msra.mxu0 0.0
    %920 = vmatprep.subr.mxu0 0.0
    %921 = vmatpush1.msra.mxu0 0.0
    %922 = vmatprep.subr.mxu0 0.0
    %923 = vmatpush1.msra.mxu0 0.0
    %924 = vmatprep.subr.mxu0 0.0
    %925 = vmatpush1.msra.mxu0 0.0
    %926 = vmatprep.subr.mxu0 0.0
    %927 = vmatpush1.msra.mxu0 0.0
    %928 = vmatprep.subr.mxu0 0.0
    %929 = vmatpush1.msra.mxu0 0.0
    %930 = vmatprep.subr.mxu0 0.0
    %931 = vmatpush1.msra.mxu0 0.0
    %932 = vmatprep.subr.mxu0 0.0
    %933 = vmatpush1.msra.mxu0 0.0
    %934 = vmatprep.subr.mxu0 0.0
    %935 = vmatpush1.msra.mxu0 0.0
    %936 = vmatprep.subr.mxu0 0.0
    %937 = vmatpush1.msra.mxu0 0.0
    %938 = vmatprep.subr.mxu0 0.0
    %939 = vmatpush1.msra.mxu0 0.0
    %940 = vmatprep.subr.mxu0 0.0
    %941 = vmatpush1.msra.mxu0 0.0
    %942 = vmatprep.subr.mxu0 0.0
    %943 = vmatpush1.msra.mxu0 %v870
    %944 = vmatprep.subr.mxu0 0.0
    %945 = vmatpush2.msra.mxu0 0.0
    %946 = vmatprep.subr.mxu0 0.0
    %947 = vmatpush2.msra.mxu0 0.0
    %948 = vmatprep.subr.mxu0 0.0
    %949 = vmatpush2.msra.mxu0 0.0
    %950 = vmatprep.subr.mxu0 0.0
    %951 = vmatpush2.msra.mxu0 0.0
    %952 = vmatprep.subr.mxu0 0.0
    %953 = vmatpush2.msra.mxu0 0.0
    %954 = vmatprep.subr.mxu0 0.0
    %955 = vmatpush2.msra.mxu0 0.0
    %956 = vmatprep.subr.mxu0 0.0
    %957 = vmatpush2.msra.mxu0 0.0
    %958 = vmatprep.subr.mxu0 0.0
    %959 = vmatpush2.msra.mxu0 0.0
    %960 = vmatprep.subr.mxu0 0.0
    %961 = vmatpush2.msra.mxu0 0.0
    %962 = vmatprep.subr.mxu0 0.0
    %963 = vmatpush2.msra.mxu0 0.0
    %964 = vmatprep.subr.mxu0 0.0
    %965 = vmatpush2.msra.mxu0 0.0
    %966 = vmatprep.subr.mxu0 0.0
    %967 = vmatpush2.msra.mxu0 0.0
    %968 = vmatprep.subr.mxu0 0.0
    %969 = vmatpush2.msra.mxu0 0.0
    %970 = vmatprep.subr.mxu0 0.0
    %971 = vmatpush2.msra.mxu0 0.0
    %972 = vmatprep.subr.mxu0 0.0
    %973 = vmatpush2.msra.mxu0 0.0
    %974 = vmatprep.subr.mxu0 0.0
    %975 = vmatpush2.msra.mxu0 0.0
    %976 = vmatprep.mubr.f32.mxu0 0.0
    %977 = vmatmul.mubr.f32.gmra.mxu0 %v187
    %v978 = vpop.f32.mrf.mxu0
    %v979 = vadd.f32 %v911, %v978
    %v980 = vpop.f32.mrf.mxu0
    %981 = vdwg.mxu0
    %982 = vmatprep.subr.mxu0 0.0
    %983 = vmatpush1.msra.mxu0 0.0
    %984 = vmatprep.subr.mxu0 0.0
    %985 = vmatpush1.msra.mxu0 0.0
    %986 = vmatprep.subr.mxu0 0.0
    %987 = vmatpush1.msra.mxu0 0.0
    %988 = vmatprep.subr.mxu0 0.0
    %989 = vmatpush1.msra.mxu0 0.0
    %990 = vmatprep.subr.mxu0 0.0
    %991 = vmatpush1.msra.mxu0 0.0
    %992 = vmatprep.subr.mxu0 0.0
    %993 = vmatpush1.msra.mxu0 0.0
    %994 = vmatprep.subr.mxu0 0.0
    %995 = vmatpush1.msra.mxu0 0.0
    %996 = vmatprep.subr.mxu0 0.0
    %997 = vmatpush1.msra.mxu0 0.0
    %998 = vmatprep.subr.mxu0 0.0
    %999 = vmatpush1.msra.mxu0 0.0
    %1000 = vmatprep.subr.mxu0 0.0
    %1001 = vmatpush1.msra.mxu0 0.0
    %1002 = vmatprep.subr.mxu0 0.0
    %1003 = vmatpush1.msra.mxu0 0.0
    %1004 = vmatprep.subr.mxu0 0.0
    %1005 = vmatpush1.msra.mxu0 0.0
    %1006 = vmatprep.subr.mxu0 0.0
    %1007 = vmatpush1.msra.mxu0 0.0
    %1008 = vmatprep.subr.mxu0 0.0
    %1009 = vmatpush1.msra.mxu0 0.0
    %1010 = vmatprep.subr.mxu0 0.0
    %1011 = vmatpush1.msra.mxu0 0.0
    %1012 = vmatprep.subr.mxu0 0.0
    %1013 = vmatpush1.msra.mxu0 %v875
    %1014 = vmatprep.subr.mxu0 0.0
    %1015 = vmatpush2.msra.mxu0 0.0
    %1016 = vmatprep.subr.mxu0 0.0
    %1017 = vmatpush2.msra.mxu0 0.0
    %1018 = vmatprep.subr.mxu0 0.0
    %1019 = vmatpush2.msra.mxu0 0.0
    %1020 = vmatprep.subr.mxu0 0.0
    %1021 = vmatpush2.msra.mxu0 0.0
    %1022 = vmatprep.subr.mxu0 0.0
    %1023 = vmatpush2.msra.mxu0 0.0
    %1024 = vmatprep.subr.mxu0 0.0
    %1025 = vmatpush2.msra.mxu0 0.0
    %1026 = vmatprep.subr.mxu0 0.0
    %1027 = vmatpush2.msra.mxu0 0.0
    %1028 = vmatprep.subr.mxu0 0.0
    %1029 = vmatpush2.msra.mxu0 0.0
    %1030 = vmatprep.subr.mxu0 0.0
    %1031 = vmatpush2.msra.mxu0 0.0
    %1032 = vmatprep.subr.mxu0 0.0
    %1033 = vmatpush2.msra.mxu0 0.0
    %1034 = vmatprep.subr.mxu0 0.0
    %1035 = vmatpush2.msra.mxu0 0.0
    %1036 = vmatprep.subr.mxu0 0.0
    %1037 = vmatpush2.msra.mxu0 0.0
    %1038 = vmatprep.subr.mxu0 0.0
    %1039 = vmatpush2.msra.mxu0 0.0
    %1040 = vmatprep.subr.mxu0 0.0
    %1041 = vmatpush2.msra.mxu0 0.0
    %1042 = vmatprep.subr.mxu0 0.0
    %1043 = vmatpush2.msra.mxu0 0.0
    %1044 = vmatprep.subr.mxu0 0.0
    %1045 = vmatpush2.msra.mxu0 0.0
    %1046 = vmatprep.mubr.f32.mxu0 0.0
    %1047 = vmatmul.mubr.f32.gmra.mxu0 %v260
    %v1048 = vpop.f32.mrf.mxu0
    %v1049 = vadd.f32 %v911, %v1048
    %v1050 = vpop.f32.mrf.mxu0
    %1051 = vdwg.mxu0
    %1052 = vmatprep.subr.mxu0 0.0
    %1053 = vmatpush1.msra.mxu0 0.0
    %1054 = vmatprep.subr.mxu0 0.0
    %1055 = vmatpush1.msra.mxu0 0.0
    %1056 = vmatprep.subr.mxu0 0.0
    %1057 = vmatpush1.msra.mxu0 0.0
    %1058 = vmatprep.subr.mxu0 0.0
    %1059 = vmatpush1.msra.mxu0 0.0
    %1060 = vmatprep.subr.mxu0 0.0
    %1061 = vmatpush1.msra.mxu0 0.0
    %1062 = vmatprep.subr.mxu0 0.0
    %1063 = vmatpush1.msra.mxu0 0.0
    %1064 = vmatprep.subr.mxu0 0.0
    %1065 = vmatpush1.msra.mxu0 0.0
    %1066 = vmatprep.subr.mxu0 0.0
    %1067 = vmatpush1.msra.mxu0 0.0
    %1068 = vmatprep.subr.mxu0 0.0
    %1069 = vmatpush1.msra.mxu0 0.0
    %1070 = vmatprep.subr.mxu0 0.0
    %1071 = vmatpush1.msra.mxu0 0.0
    %1072 = vmatprep.subr.mxu0 0.0
    %1073 = vmatpush1.msra.mxu0 0.0
    %1074 = vmatprep.subr.mxu0 0.0
    %1075 = vmatpush1.msra.mxu0 0.0
    %1076 = vmatprep.subr.mxu0 0.0
    %1077 = vmatpush1.msra.mxu0 0.0
    %1078 = vmatprep.subr.mxu0 0.0
    %1079 = vmatpush1.msra.mxu0 0.0
    %1080 = vmatprep.subr.mxu0 0.0
    %1081 = vmatpush1.msra.mxu0 0.0
    %1082 = vmatprep.subr.mxu0 0.0
    %1083 = vmatpush1.msra.mxu0 %v880
    %1084 = vmatprep.subr.mxu0 0.0
    %1085 = vmatpush2.msra.mxu0 0.0
    %1086 = vmatprep.subr.mxu0 0.0
    %1087 = vmatpush2.msra.mxu0 0.0
    %1088 = vmatprep.subr.mxu0 0.0
    %1089 = vmatpush2.msra.mxu0 0.0
    %1090 = vmatprep.subr.mxu0 0.0
    %1091 = vmatpush2.msra.mxu0 0.0
    %1092 = vmatprep.subr.mxu0 0.0
    %1093 = vmatpush2.msra.mxu0 0.0
    %1094 = vmatprep.subr.mxu0 0.0
    %1095 = vmatpush2.msra.mxu0 0.0
    %1096 = vmatprep.subr.mxu0 0.0
    %1097 = vmatpush2.msra.mxu0 0.0
    %1098 = vmatprep.subr.mxu0 0.0
    %1099 = vmatpush2.msra.mxu0 0.0
    %1100 = vmatprep.subr.mxu0 0.0
    %1101 = vmatpush2.msra.mxu0 0.0
    %1102 = vmatprep.subr.mxu0 0.0
    %1103 = vmatpush2.msra.mxu0 0.0
    %1104 = vmatprep.subr.mxu0 0.0
    %1105 = vmatpush2.msra.mxu0 0.0
    %1106 = vmatprep.subr.mxu0 0.0
    %1107 = vmatpush2.msra.mxu0 0.0
    %1108 = vmatprep.subr.mxu0 0.0
    %1109 = vmatpush2.msra.mxu0 0.0
    %1110 = vmatprep.subr.mxu0 0.0
    %1111 = vmatpush2.msra.mxu0 0.0
    %1112 = vmatprep.subr.mxu0 0.0
    %1113 = vmatpush2.msra.mxu0 0.0
    %1114 = vmatprep.subr.mxu0 0.0
    %1115 = vmatpush2.msra.mxu0 0.0
    %1116 = vmatprep.mubr.f32.mxu0 0.0
    %1117 = vmatmul.mubr.f32.gmra.mxu0 %v333
    %v1118 = vpop.f32.mrf.mxu0
    %v1119 = vadd.f32 %v911, %v1118
    %v1120 = vpop.f32.mrf.mxu0
    %1121 = vdwg.mxu0
    %1122 = vmatprep.subr.mxu0 0.0
    %1123 = vmatpush1.msra.mxu0 0.0
    %1124 = vmatprep.subr.mxu0 0.0
    %1125 = vmatpush1.msra.mxu0 0.0
    %1126 = vmatprep.subr.mxu0 0.0
    %1127 = vmatpush1.msra.mxu0 0.0
    %1128 = vmatprep.subr.mxu0 0.0
    %1129 = vmatpush1.msra.mxu0 0.0
    %1130 = vmatprep.subr.mxu0 0.0
    %1131 = vmatpush1.msra.mxu0 0.0
    %1132 = vmatprep.subr.mxu0 0.0
    %1133 = vmatpush1.msra.mxu0 0.0
    %1134 = vmatprep.subr.mxu0 0.0
    %1135 = vmatpush1.msra.mxu0 0.0
    %1136 = vmatprep.subr.mxu0 0.0
    %1137 = vmatpush1.msra.mxu0 0.0
    %1138 = vmatprep.subr.mxu0 0.0
    %1139 = vmatpush1.msra.mxu0 0.0
    %1140 = vmatprep.subr.mxu0 0.0
    %1141 = vmatpush1.msra.mxu0 0.0
    %1142 = vmatprep.subr.mxu0 0.0
    %1143 = vmatpush1.msra.mxu0 0.0
    %1144 = vmatprep.subr.mxu0 0.0
    %1145 = vmatpush1.msra.mxu0 0.0
    %1146 = vmatprep.subr.mxu0 0.0
    %1147 = vmatpush1.msra.mxu0 0.0
    %1148 = vmatprep.subr.mxu0 0.0
    %1149 = vmatpush1.msra.mxu0 0.0
    %1150 = vmatprep.subr.mxu0 0.0
    %1151 = vmatpush1.msra.mxu0 0.0
    %1152 = vmatprep.subr.mxu0 0.0
    %1153 = vmatpush1.msra.mxu0 %v885
    %1154 = vmatprep.subr.mxu0 0.0
    %1155 = vmatpush2.msra.mxu0 0.0
    %1156 = vmatprep.subr.mxu0 0.0
    %1157 = vmatpush2.msra.mxu0 0.0
    %1158 = vmatprep.subr.mxu0 0.0
    %1159 = vmatpush2.msra.mxu0 0.0
    %1160 = vmatprep.subr.mxu0 0.0
    %1161 = vmatpush2.msra.mxu0 0.0
    %1162 = vmatprep.subr.mxu0 0.0
    %1163 = vmatpush2.msra.mxu0 0.0
    %1164 = vmatprep.subr.mxu0 0.0
    %1165 = vmatpush2.msra.mxu0 0.0
    %1166 = vmatprep.subr.mxu0 0.0
    %1167 = vmatpush2.msra.mxu0 0.0
    %1168 = vmatprep.subr.mxu0 0.0
    %1169 = vmatpush2.msra.mxu0 0.0
    %1170 = vmatprep.subr.mxu0 0.0
    %1171 = vmatpush2.msra.mxu0 0.0
    %1172 = vmatprep.subr.mxu0 0.0
    %1173 = vmatpush2.msra.mxu0 0.0
    %1174 = vmatprep.subr.mxu0 0.0
    %1175 = vmatpush2.msra.mxu0 0.0
    %1176 = vmatprep.subr.mxu0 0.0
    %1177 = vmatpush2.msra.mxu0 0.0
    %1178 = vmatprep.subr.mxu0 0.0
    %1179 = vmatpush2.msra.mxu0 0.0
    %1180 = vmatprep.subr.mxu0 0.0
    %1181 = vmatpush2.msra.mxu0 0.0
    %1182 = vmatprep.subr.mxu0 0.0
    %1183 = vmatpush2.msra.mxu0 0.0
    %1184 = vmatprep.subr.mxu0 0.0
    %1185 = vmatpush2.msra.mxu0 0.0
    %1186 = vmatprep.mubr.f32.mxu0 0.0
    %1187 = vmatmul.mubr.f32.gmra.mxu0 %v406
    %v1188 = vpop.f32.mrf.mxu0
    %v1189 = vadd.f32 %v911, %v1188
    %v1190 = vpop.f32.mrf.mxu0
    %1191 = vdwg.mxu0
    %1192 = vmatprep.subr.mxu0 0.0
    %1193 = vmatpush1.msra.mxu0 0.0
    %1194 = vmatprep.subr.mxu0 0.0
    %1195 = vmatpush1.msra.mxu0 0.0
    %1196 = vmatprep.subr.mxu0 0.0
    %1197 = vmatpush1.msra.mxu0 0.0
    %1198 = vmatprep.subr.mxu0 0.0
    %1199 = vmatpush1.msra.mxu0 0.0
    %1200 = vmatprep.subr.mxu0 0.0
    %1201 = vmatpush1.msra.mxu0 0.0
    %1202 = vmatprep.subr.mxu0 0.0
    %1203 = vmatpush1.msra.mxu0 0.0
    %1204 = vmatprep.subr.mxu0 0.0
    %1205 = vmatpush1.msra.mxu0 0.0
    %1206 = vmatprep.subr.mxu0 0.0
    %1207 = vmatpush1.msra.mxu0 0.0
    %1208 = vmatprep.subr.mxu0 0.0
    %1209 = vmatpush1.msra.mxu0 0.0
    %1210 = vmatprep.subr.mxu0 0.0
    %1211 = vmatpush1.msra.mxu0 0.0
    %1212 = vmatprep.subr.mxu0 0.0
    %1213 = vmatpush1.msra.mxu0 0.0
    %1214 = vmatprep.subr.mxu0 0.0
    %1215 = vmatpush1.msra.mxu0 0.0
    %1216 = vmatprep.subr.mxu0 0.0
    %1217 = vmatpush1.msra.mxu0 0.0
    %1218 = vmatprep.subr.mxu0 0.0
    %1219 = vmatpush1.msra.mxu0 0.0
    %1220 = vmatprep.subr.mxu0 0.0
    %1221 = vmatpush1.msra.mxu0 0.0
    %1222 = vmatprep.subr.mxu0 0.0
    %1223 = vmatpush1.msra.mxu0 %v890
    %1224 = vmatprep.subr.mxu0 0.0
    %1225 = vmatpush2.msra.mxu0 0.0
    %1226 = vmatprep.subr.mxu0 0.0
    %1227 = vmatpush2.msra.mxu0 0.0
    %1228 = vmatprep.subr.mxu0 0.0
    %1229 = vmatpush2.msra.mxu0 0.0
    %1230 = vmatprep.subr.mxu0 0.0
    %1231 = vmatpush2.msra.mxu0 0.0
    %1232 = vmatprep.subr.mxu0 0.0
    %1233 = vmatpush2.msra.mxu0 0.0
    %1234 = vmatprep.subr.mxu0 0.0
    %1235 = vmatpush2.msra.mxu0 0.0
    %1236 = vmatprep.subr.mxu0 0.0
    %1237 = vmatpush2.msra.mxu0 0.0
    %1238 = vmatprep.subr.mxu0 0.0
    %1239 = vmatpush2.msra.mxu0 0.0
    %1240 = vmatprep.subr.mxu0 0.0
    %1241 = vmatpush2.msra.mxu0 0.0
    %1242 = vmatprep.subr.mxu0 0.0
    %1243 = vmatpush2.msra.mxu0 0.0
    %1244 = vmatprep.subr.mxu0 0.0
    %1245 = vmatpush2.msra.mxu0 0.0
    %1246 = vmatprep.subr.mxu0 0.0
    %1247 = vmatpush2.msra.mxu0 0.0
    %1248 = vmatprep.subr.mxu0 0.0
    %1249 = vmatpush2.msra.mxu0 0.0
    %1250 = vmatprep.subr.mxu0 0.0
    %1251 = vmatpush2.msra.mxu0 0.0
    %1252 = vmatprep.subr.mxu0 0.0
    %1253 = vmatpush2.msra.mxu0 0.0
    %1254 = vmatprep.subr.mxu0 0.0
    %1255 = vmatpush2.msra.mxu0 0.0
    %1256 = vmatprep.mubr.f32.mxu0 0.0
    %1257 = vmatmul.mubr.f32.gmra.mxu0 %v479
    %v1258 = vpop.f32.mrf.mxu0
    %v1259 = vadd.f32 %v911, %v1258
    %v1260 = vpop.f32.mrf.mxu0
    %1261 = vdwg.mxu0
    %1262 = vmatprep.subr.mxu0 0.0
    %1263 = vmatpush1.msra.mxu0 0.0
    %1264 = vmatprep.subr.mxu0 0.0
    %1265 = vmatpush1.msra.mxu0 0.0
    %1266 = vmatprep.subr.mxu0 0.0
    %1267 = vmatpush1.msra.mxu0 0.0
    %1268 = vmatprep.subr.mxu0 0.0
    %1269 = vmatpush1.msra.mxu0 0.0
    %1270 = vmatprep.subr.mxu0 0.0
    %1271 = vmatpush1.msra.mxu0 0.0
    %1272 = vmatprep.subr.mxu0 0.0
    %1273 = vmatpush1.msra.mxu0 0.0
    %1274 = vmatprep.subr.mxu0 0.0
    %1275 = vmatpush1.msra.mxu0 0.0
    %1276 = vmatprep.subr.mxu0 0.0
    %1277 = vmatpush1.msra.mxu0 0.0
    %1278 = vmatprep.subr.mxu0 0.0
    %1279 = vmatpush1.msra.mxu0 0.0
    %1280 = vmatprep.subr.mxu0 0.0
    %1281 = vmatpush1.msra.mxu0 0.0
    %1282 = vmatprep.subr.mxu0 0.0
    %1283 = vmatpush1.msra.mxu0 0.0
    %1284 = vmatprep.subr.mxu0 0.0
    %1285 = vmatpush1.msra.mxu0 0.0
    %1286 = vmatprep.subr.mxu0 0.0
    %1287 = vmatpush1.msra.mxu0 0.0
    %1288 = vmatprep.subr.mxu0 0.0
    %1289 = vmatpush1.msra.mxu0 0.0
    %1290 = vmatprep.subr.mxu0 0.0
    %1291 = vmatpush1.msra.mxu0 0.0
    %1292 = vmatprep.subr.mxu0 0.0
    %1293 = vmatpush1.msra.mxu0 %v895
    %1294 = vmatprep.subr.mxu0 0.0
    %1295 = vmatpush2.msra.mxu0 0.0
    %1296 = vmatprep.subr.mxu0 0.0
    %1297 = vmatpush2.msra.mxu0 0.0
    %1298 = vmatprep.subr.mxu0 0.0
    %1299 = vmatpush2.msra.mxu0 0.0
    %1300 = vmatprep.subr.mxu0 0.0
    %1301 = vmatpush2.msra.mxu0 0.0
    %1302 = vmatprep.subr.mxu0 0.0
    %1303 = vmatpush2.msra.mxu0 0.0
    %1304 = vmatprep.subr.mxu0 0.0
    %1305 = vmatpush2.msra.mxu0 0.0
    %1306 = vmatprep.subr.mxu0 0.0
    %1307 = vmatpush2.msra.mxu0 0.0
    %1308 = vmatprep.subr.mxu0 0.0
    %1309 = vmatpush2.msra.mxu0 0.0
    %1310 = vmatprep.subr.mxu0 0.0
    %1311 = vmatpush2.msra.mxu0 0.0
    %1312 = vmatprep.subr.mxu0 0.0
    %1313 = vmatpush2.msra.mxu0 0.0
    %1314 = vmatprep.subr.mxu0 0.0
    %1315 = vmatpush2.msra.mxu0 0.0
    %1316 = vmatprep.subr.mxu0 0.0
    %1317 = vmatpush2.msra.mxu0 0.0
    %1318 = vmatprep.subr.mxu0 0.0
    %1319 = vmatpush2.msra.mxu0 0.0
    %1320 = vmatprep.subr.mxu0 0.0
    %1321 = vmatpush2.msra.mxu0 0.0
    %1322 = vmatprep.subr.mxu0 0.0
    %1323 = vmatpush2.msra.mxu0 0.0
    %1324 = vmatprep.subr.mxu0 0.0
    %1325 = vmatpush2.msra.mxu0 0.0
    %1326 = vmatprep.mubr.f32.mxu0 0.0
    %1327 = vmatmul.mubr.f32.gmra.mxu0 %v552
    %v1328 = vpop.f32.mrf.mxu0
    %v1329 = vadd.f32 %v911, %v1328
    %v1330 = vpop.f32.mrf.mxu0
    %1331 = vdwg.mxu0
    %1332 = vmatprep.subr.mxu0 0.0
    %1333 = vmatpush1.msra.mxu0 0.0
    %1334 = vmatprep.subr.mxu0 0.0
    %1335 = vmatpush1.msra.mxu0 0.0
    %1336 = vmatprep.subr.mxu0 0.0
    %1337 = vmatpush1.msra.mxu0 0.0
    %1338 = vmatprep.subr.mxu0 0.0
    %1339 = vmatpush1.msra.mxu0 0.0
    %1340 = vmatprep.subr.mxu0 0.0
    %1341 = vmatpush1.msra.mxu0 0.0
    %1342 = vmatprep.subr.mxu0 0.0
    %1343 = vmatpush1.msra.mxu0 0.0
    %1344 = vmatprep.subr.mxu0 0.0
    %1345 = vmatpush1.msra.mxu0 0.0
    %1346 = vmatprep.subr.mxu0 0.0
    %1347 = vmatpush1.msra.mxu0 0.0
    %1348 = vmatprep.subr.mxu0 0.0
    %1349 = vmatpush1.msra.mxu0 0.0
    %1350 = vmatprep.subr.mxu0 0.0
    %1351 = vmatpush1.msra.mxu0 0.0
    %1352 = vmatprep.subr.mxu0 0.0
    %1353 = vmatpush1.msra.mxu0 0.0
    %1354 = vmatprep.subr.mxu0 0.0
    %1355 = vmatpush1.msra.mxu0 0.0
    %1356 = vmatprep.subr.mxu0 0.0
    %1357 = vmatpush1.msra.mxu0 0.0
    %1358 = vmatprep.subr.mxu0 0.0
    %1359 = vmatpush1.msra.mxu0 0.0
    %1360 = vmatprep.subr.mxu0 0.0
    %1361 = vmatpush1.msra.mxu0 0.0
    %1362 = vmatprep.subr.mxu0 0.0
    %1363 = vmatpush1.msra.mxu0 %v900
    %1364 = vmatprep.subr.mxu0 0.0
    %1365 = vmatpush2.msra.mxu0 0.0
    %1366 = vmatprep.subr.mxu0 0.0
    %1367 = vmatpush2.msra.mxu0 0.0
    %1368 = vmatprep.subr.mxu0 0.0
    %1369 = vmatpush2.msra.mxu0 0.0
    %1370 = vmatprep.subr.mxu0 0.0
    %1371 = vmatpush2.msra.mxu0 0.0
    %1372 = vmatprep.subr.mxu0 0.0
    %1373 = vmatpush2.msra.mxu0 0.0
    %1374 = vmatprep.subr.mxu0 0.0
    %1375 = vmatpush2.msra.mxu0 0.0
    %1376 = vmatprep.subr.mxu0 0.0
    %1377 = vmatpush2.msra.mxu0 0.0
    %1378 = vmatprep.subr.mxu0 0.0
    %1379 = vmatpush2.msra.mxu0 0.0
    %1380 = vmatprep.subr.mxu0 0.0
    %1381 = vmatpush2.msra.mxu0 0.0
    %1382 = vmatprep.subr.mxu0 0.0
    %1383 = vmatpush2.msra.mxu0 0.0
    %1384 = vmatprep.subr.mxu0 0.0
    %1385 = vmatpush2.msra.mxu0 0.0
    %1386 = vmatprep.subr.mxu0 0.0
    %1387 = vmatpush2.msra.mxu0 0.0
    %1388 = vmatprep.subr.mxu0 0.0
    %1389 = vmatpush2.msra.mxu0 0.0
    %1390 = vmatprep.subr.mxu0 0.0
    %1391 = vmatpush2.msra.mxu0 0.0
    %1392 = vmatprep.subr.mxu0 0.0
    %1393 = vmatpush2.msra.mxu0 0.0
    %1394 = vmatprep.subr.mxu0 0.0
    %1395 = vmatpush2.msra.mxu0 0.0
    %1396 = vmatprep.mubr.f32.mxu0 0.0
    %1397 = vmatmul.mubr.f32.gmra.mxu0 %v625
    %v1398 = vpop.f32.mrf.mxu0
    %v1399 = vadd.f32 %v911, %v1398
    %v1400 = vpop.f32.mrf.mxu0
    %1401 = vdwg.mxu0
    %1402 = vmatprep.subr.mxu0 0.0
    %1403 = vmatpush1.msra.mxu0 0.0
    %1404 = vmatprep.subr.mxu0 0.0
    %1405 = vmatpush1.msra.mxu0 0.0
    %1406 = vmatprep.subr.mxu0 0.0
    %1407 = vmatpush1.msra.mxu0 0.0
    %1408 = vmatprep.subr.mxu0 0.0
    %1409 = vmatpush1.msra.mxu0 0.0
    %1410 = vmatprep.subr.mxu0 0.0
    %1411 = vmatpush1.msra.mxu0 0.0
    %1412 = vmatprep.subr.mxu0 0.0
    %1413 = vmatpush1.msra.mxu0 0.0
    %1414 = vmatprep.subr.mxu0 0.0
    %1415 = vmatpush1.msra.mxu0 0.0
    %1416 = vmatprep.subr.mxu0 0.0
    %1417 = vmatpush1.msra.mxu0 0.0
    %1418 = vmatprep.subr.mxu0 0.0
    %1419 = vmatpush1.msra.mxu0 0.0
    %1420 = vmatprep.subr.mxu0 0.0
    %1421 = vmatpush1.msra.mxu0 0.0
    %1422 = vmatprep.subr.mxu0 0.0
    %1423 = vmatpush1.msra.mxu0 0.0
    %1424 = vmatprep.subr.mxu0 0.0
    %1425 = vmatpush1.msra.mxu0 0.0
    %1426 = vmatprep.subr.mxu0 0.0
    %1427 = vmatpush1.msra.mxu0 0.0
    %1428 = vmatprep.subr.mxu0 0.0
    %1429 = vmatpush1.msra.mxu0 0.0
    %1430 = vmatprep.subr.mxu0 0.0
    %1431 = vmatpush1.msra.mxu0 0.0
    %1432 = vmatprep.subr.mxu0 0.0
    %1433 = vmatpush1.msra.mxu0 %v905
    %1434 = vmatprep.subr.mxu0 0.0
    %1435 = vmatpush2.msra.mxu0 0.0
    %1436 = vmatprep.subr.mxu0 0.0
    %1437 = vmatpush2.msra.mxu0 0.0
    %1438 = vmatprep.subr.mxu0 0.0
    %1439 = vmatpush2.msra.mxu0 0.0
    %1440 = vmatprep.subr.mxu0 0.0
    %1441 = vmatpush2.msra.mxu0 0.0
    %1442 = vmatprep.subr.mxu0 0.0
    %1443 = vmatpush2.msra.mxu0 0.0
    %1444 = vmatprep.subr.mxu0 0.0
    %1445 = vmatpush2.msra.mxu0 0.0
    %1446 = vmatprep.subr.mxu0 0.0
    %1447 = vmatpush2.msra.mxu0 0.0
    %1448 = vmatprep.subr.mxu0 0.0
    %1449 = vmatpush2.msra.mxu0 0.0
    %1450 = vmatprep.subr.mxu0 0.0
    %1451 = vmatpush2.msra.mxu0 0.0
    %1452 = vmatprep.subr.mxu0 0.0
    %1453 = vmatpush2.msra.mxu0 0.0
    %1454 = vmatprep.subr.mxu0 0.0
    %1455 = vmatpush2.msra.mxu0 0.0
    %1456 = vmatprep.subr.mxu0 0.0
    %1457 = vmatpush2.msra.mxu0 0.0
    %1458 = vmatprep.subr.mxu0 0.0
    %1459 = vmatpush2.msra.mxu0 0.0
    %1460 = vmatprep.subr.mxu0 0.0
    %1461 = vmatpush2.msra.mxu0 0.0
    %1462 = vmatprep.subr.mxu0 0.0
    %1463 = vmatpush2.msra.mxu0 0.0
    %1464 = vmatprep.subr.mxu0 0.0
    %1465 = vmatpush2.msra.mxu0 0.0
    %1466 = vmatprep.mubr.f32.mxu0 0.0
    %1467 = vmatmul.mubr.f32.gmra.mxu0 %v698
    %v1468 = vpop.f32.mrf.mxu0
    %v1469 = vadd.f32 %v911, %v1468
    %v1470 = vpop.f32.mrf.mxu0
    %1471 = vdwg.mxu0
    %v1472 = vmax.f32 %v979, 0.0
    %v1473 = vmax.f32 %v1049, 0.0
    %v1474 = vmax.f32 %v1119, 0.0
    %v1475 = vmax.f32 %v1189, 0.0
    %v1476 = vmax.f32 %v1259, 0.0
    %v1477 = vmax.f32 %v1329, 0.0
    %v1478 = vmax.f32 %v1399, 0.0
    %v1479 = vmax.f32 %v1469, 0.0
    %vm1480 = vcmask 7168
    %v1481 = vsel %vm1480, %v37, 0.0
    %v1482 = vrot.slane %v1481, 4
    %v1483 = vadd.f32 %v1481, %v1482
    %v1484 = vrot.slane %v1483, 2
    %v1485 = vadd.f32 %v1483, %v1484
    %v1486 = vrot.slane %v1485, 1
    %v1487 = vadd.f32 %v1485, %v1486
    %v1488 = vsel %vm1480, %v38, 0.0
    %v1489 = vrot.slane %v1488, 4
    %v1490 = vadd.f32 %v1488, %v1489
    %v1491 = vrot.slane %v1490, 2
    %v1492 = vadd.f32 %v1490, %v1491
    %v1493 = vrot.slane %v1492, 1
    %v1494 = vadd.f32 %v1492, %v1493
    %v1495 = vsel %vm1480, %v39, 0.0
    %v1496 = vrot.slane %v1495, 4
    %v1497 = vadd.f32 %v1495, %v1496
    %v1498 = vrot.slane %v1497, 2
    %v1499 = vadd.f32 %v1497, %v1498
    %v1500 = vrot.slane %v1499, 1
    %v1501 = vadd.f32 %v1499, %v1500
    %v1502 = vsel %vm1480, %v40, 0.0
    %v1503 = vrot.slane %v1502, 4
    %v1504 = vadd.f32 %v1502, %v1503
    %v1505 = vrot.slane %v1504, 2
    %v1506 = vadd.f32 %v1504, %v1505
    %v1507 = vrot.slane %v1506, 1
    %v1508 = vadd.f32 %v1506, %v1507
    %v1509 = vsel %vm1480, %v41, 0.0
    %v1510 = vrot.slane %v1509, 4
    %v1511 = vadd.f32 %v1509, %v1510
    %v1512 = vrot.slane %v1511, 2
    %v1513 = vadd.f32 %v1511, %v1512
    %v1514 = vrot.slane %v1513, 1
    %v1515 = vadd.f32 %v1513, %v1514
    %v1516 = vsel %vm1480, %v42, 0.0
    %v1517 = vrot.slane %v1516, 4
    %v1518 = vadd.f32 %v1516, %v1517
    %v1519 = vrot.slane %v1518, 2
    %v1520 = vadd.f32 %v1518, %v1519
    %v1521 = vrot.slane %v1520, 1
    %v1522 = vadd.f32 %v1520, %v1521
    %v1523 = vsel %vm1480, %v43, 0.0
    %v1524 = vrot.slane %v1523, 4
    %v1525 = vadd.f32 %v1523, %v1524
    %v1526 = vrot.slane %v1525, 2
    %v1527 = vadd.f32 %v1525, %v1526
    %v1528 = vrot.slane %v1527, 1
    %v1529 = vadd.f32 %v1527, %v1528
    %v1530 = vsel %vm1480, %v44, 0.0
    %v1531 = vrot.slane %v1530, 4
    %v1532 = vadd.f32 %v1530, %v1531
    %v1533 = vrot.slane %v1532, 2
    %v1534 = vadd.f32 %v1532, %v1533
    %v1535 = vrot.slane %v1534, 1
    %v1536 = vadd.f32 %v1534, %v1535
    %v1537 = vmax.f32 %v1487, 1.0
    %v1538 = vmax.f32 %v1494, 1.0
    %v1539 = vmax.f32 %v1501, 1.0
    %v1540 = vmax.f32 %v1508, 1.0
    %v1541 = vmax.f32 %v1515, 1.0
    %v1542 = vmax.f32 %v1522, 1.0
    %v1543 = vmax.f32 %v1529, 1.0
    %v1544 = vmax.f32 %v1536, 1.0
    %1546 = vset.pattern.permute.xlu0 0
    %1547 = vperm.xlu0 %1546, %v37
    %v1548 = vpop.permute.xlu0 %1547
    %1551 = vset.pattern.permute.xlu0 0
    %1552 = vperm.xlu0 %1551, %v38
    %v1553 = vpop.permute.xlu0 %1552
    %1556 = vset.pattern.permute.xlu0 0
    %1557 = vperm.xlu0 %1556, %v39
    %v1558 = vpop.permute.xlu0 %1557
    %1561 = vset.pattern.permute.xlu0 0
    %1562 = vperm.xlu0 %1561, %v40
    %v1563 = vpop.permute.xlu0 %1562
    %1566 = vset.pattern.permute.xlu0 0
    %1567 = vperm.xlu0 %1566, %v41
    %v1568 = vpop.permute.xlu0 %1567
    %1571 = vset.pattern.permute.xlu0 0
    %1572 = vperm.xlu0 %1571, %v42
    %v1573 = vpop.permute.xlu0 %1572
    %1576 = vset.pattern.permute.xlu0 0
    %1577 = vperm.xlu0 %1576, %v43
    %v1578 = vpop.permute.xlu0 %1577
    %1581 = vset.pattern.permute.xlu0 0
    %1582 = vperm.xlu0 %1581, %v44
    %v1583 = vpop.permute.xlu0 %1582
    %v1585 = vmul.f32 %v1472, %v1548
    %v1586 = vmul.f32 %v1473, %v1553
    %v1587 = vmul.f32 %v1474, %v1558
    %v1588 = vmul.f32 %v1475, %v1563
    %v1589 = vmul.f32 %v1476, %v1568
    %v1590 = vmul.f32 %v1477, %v1573
    %v1591 = vmul.f32 %v1478, %v1578
    %v1592 = vmul.f32 %v1479, %v1583
    %v1593 = vsel %vm778, %v1585, 0.0
    %v1594 = vrot.slane %v1593, 4
    %v1595 = vadd.f32 %v1593, %v1594
    %v1596 = vrot.slane %v1595, 2
    %v1597 = vadd.f32 %v1595, %v1596
    %v1598 = vrot.slane %v1597, 1
    %v1599 = vadd.f32 %v1597, %v1598
    %v1600 = vsel %vm778, %v1586, 0.0
    %v1601 = vrot.slane %v1600, 4
    %v1602 = vadd.f32 %v1600, %v1601
    %v1603 = vrot.slane %v1602, 2
    %v1604 = vadd.f32 %v1602, %v1603
    %v1605 = vrot.slane %v1604, 1
    %v1606 = vadd.f32 %v1604, %v1605
    %v1607 = vsel %vm778, %v1587, 0.0
    %v1608 = vrot.slane %v1607, 4
    %v1609 = vadd.f32 %v1607, %v1608
    %v1610 = vrot.slane %v1609, 2
    %v1611 = vadd.f32 %v1609, %v1610
    %v1612 = vrot.slane %v1611, 1
    %v1613 = vadd.f32 %v1611, %v1612
    %v1614 = vsel %vm778, %v1588, 0.0
    %v1615 = vrot.slane %v1614, 4
    %v1616 = vadd.f32 %v1614, %v1615
    %v1617 = vrot.slane %v1616, 2
    %v1618 = vadd.f32 %v1616, %v1617
    %v1619 = vrot.slane %v1618, 1
    %v1620 = vadd.f32 %v1618, %v1619
    %v1621 = vsel %vm778, %v1589, 0.0
    %v1622 = vrot.slane %v1621, 4
    %v1623 = vadd.f32 %v1621, %v1622
    %v1624 = vrot.slane %v1623, 2
    %v1625 = vadd.f32 %v1623, %v1624
    %v1626 = vrot.slane %v1625, 1
    %v1627 = vadd.f32 %v1625, %v1626
    %v1628 = vsel %vm778, %v1590, 0.0
    %v1629 = vrot.slane %v1628, 4
    %v1630 = vadd.f32 %v1628, %v1629
    %v1631 = vrot.slane %v1630, 2
    %v1632 = vadd.f32 %v1630, %v1631
    %v1633 = vrot.slane %v1632, 1
    %v1634 = vadd.f32 %v1632, %v1633
    %v1635 = vsel %vm778, %v1591, 0.0
    %v1636 = vrot.slane %v1635, 4
    %v1637 = vadd.f32 %v1635, %v1636
    %v1638 = vrot.slane %v1637, 2
    %v1639 = vadd.f32 %v1637, %v1638
    %v1640 = vrot.slane %v1639, 1
    %v1641 = vadd.f32 %v1639, %v1640
    %v1642 = vsel %vm778, %v1592, 0.0
    %v1643 = vrot.slane %v1642, 4
    %v1644 = vadd.f32 %v1642, %v1643
    %v1645 = vrot.slane %v1644, 2
    %v1646 = vadd.f32 %v1644, %v1645
    %v1647 = vrot.slane %v1646, 1
    %v1648 = vadd.f32 %v1646, %v1647
    %v1649 = vrcp.pop %v1537
    %v1650 = vrcp.pop %v1538
    %v1651 = vrcp.pop %v1539
    %v1652 = vrcp.pop %v1540
    %v1653 = vrcp.pop %v1541
    %v1654 = vrcp.pop %v1542
    %v1655 = vrcp.pop %v1543
    %v1656 = vrcp.pop %v1544
    %1658 = vset.pattern.permute.xlu0 0
    %1659 = vperm.xlu0 %1658, %v1649
    %v1660 = vpop.permute.xlu0 %1659
    %1663 = vset.pattern.permute.xlu0 0
    %1664 = vperm.xlu0 %1663, %v1650
    %v1665 = vpop.permute.xlu0 %1664
    %1668 = vset.pattern.permute.xlu0 0
    %1669 = vperm.xlu0 %1668, %v1651
    %v1670 = vpop.permute.xlu0 %1669
    %1673 = vset.pattern.permute.xlu0 0
    %1674 = vperm.xlu0 %1673, %v1652
    %v1675 = vpop.permute.xlu0 %1674
    %1678 = vset.pattern.permute.xlu0 0
    %1679 = vperm.xlu0 %1678, %v1653
    %v1680 = vpop.permute.xlu0 %1679
    %1683 = vset.pattern.permute.xlu0 0
    %1684 = vperm.xlu0 %1683, %v1654
    %v1685 = vpop.permute.xlu0 %1684
    %1688 = vset.pattern.permute.xlu0 0
    %1689 = vperm.xlu0 %1688, %v1655
    %v1690 = vpop.permute.xlu0 %1689
    %1693 = vset.pattern.permute.xlu0 0
    %1694 = vperm.xlu0 %1693, %v1656
    %v1695 = vpop.permute.xlu0 %1694
    %v1697 = vmul.f32 %v1599, %v1660
    %v1698 = vmul.f32 %v1606, %v1665
    %v1699 = vmul.f32 %v1613, %v1670
    %v1700 = vmul.f32 %v1620, %v1675
    %v1701 = vmul.f32 %v1627, %v1680
    %v1702 = vmul.f32 %v1634, %v1685
    %v1703 = vmul.f32 %v1641, %v1690
    %v1704 = vmul.f32 %v1648, %v1695
    %vm1705 = vcmp.gt.f32.partialorder %v37, 0.0
    %vm1706 = vcmp.gt.f32.partialorder %v38, 0.0
    %vm1707 = vcmp.gt.f32.partialorder %v39, 0.0
    %vm1708 = vcmp.gt.f32.partialorder %v40, 0.0
    %vm1709 = vcmp.gt.f32.partialorder %v41, 0.0
    %vm1710 = vcmp.gt.f32.partialorder %v42, 0.0
    %vm1711 = vcmp.gt.f32.partialorder %v43, 0.0
    %vm1712 = vcmp.gt.f32.partialorder %v44, 0.0
    %v1713 = vsel %vm1705, 1, 0
    %v1714 = vsel %vm1706, 1, 0
    %v1715 = vsel %vm1707, 1, 0
    %v1716 = vsel %vm1708, 1, 0
    %v1717 = vsel %vm1709, 1, 0
    %v1718 = vsel %vm1710, 1, 0
    %v1719 = vsel %vm1711, 1, 0
    %v1720 = vsel %vm1712, 1, 0
    %1721 = vset.pattern.permute.xlu0 0
    %1722 = vperm.xlu0 %1721, %v1713
    %v1723 = vpop.permute.xlu0 %1722
    %1724 = vset.pattern.permute.xlu0 0
    %1725 = vperm.xlu0 %1724, %v1714
    %v1726 = vpop.permute.xlu0 %1725
    %1727 = vset.pattern.permute.xlu0 0
    %1728 = vperm.xlu0 %1727, %v1715
    %v1729 = vpop.permute.xlu0 %1728
    %1730 = vset.pattern.permute.xlu0 0
    %1731 = vperm.xlu0 %1730, %v1716
    %v1732 = vpop.permute.xlu0 %1731
    %1733 = vset.pattern.permute.xlu0 0
    %1734 = vperm.xlu0 %1733, %v1717
    %v1735 = vpop.permute.xlu0 %1734
    %1736 = vset.pattern.permute.xlu0 0
    %1737 = vperm.xlu0 %1736, %v1718
    %v1738 = vpop.permute.xlu0 %1737
    %1739 = vset.pattern.permute.xlu0 0
    %1740 = vperm.xlu0 %1739, %v1719
    %v1741 = vpop.permute.xlu0 %1740
    %1742 = vset.pattern.permute.xlu0 0
    %1743 = vperm.xlu0 %1742, %v1720
    %v1744 = vpop.permute.xlu0 %1743
    %vm1745 = vcmp.eq.s32.totalorder %v1723, 1
    %vm1746 = vcmp.eq.s32.totalorder %v1726, 1
    %vm1747 = vcmp.eq.s32.totalorder %v1729, 1
    %vm1748 = vcmp.eq.s32.totalorder %v1732, 1
    %vm1749 = vcmp.eq.s32.totalorder %v1735, 1
    %vm1750 = vcmp.eq.s32.totalorder %v1738, 1
    %vm1751 = vcmp.eq.s32.totalorder %v1741, 1
    %vm1752 = vcmp.eq.s32.totalorder %v1744, 1
    %v1753 = vsel %vm1745, %v1472, -1e+30
    %v1754 = vsel %vm1746, %v1473, -1e+30
    %v1755 = vsel %vm1747, %v1474, -1e+30
    %v1756 = vsel %vm1748, %v1475, -1e+30
    %v1757 = vsel %vm1749, %v1476, -1e+30
    %v1758 = vsel %vm1750, %v1477, -1e+30
    %v1759 = vsel %vm1751, %v1478, -1e+30
    %v1760 = vsel %vm1752, %v1479, -1e+30
    %v1761 = vsel %vm778, %v1753, -inf
    %v1762 = vrot.slane %v1761, 4
    %v1763 = vmax.f32 %v1761, %v1762
    %v1764 = vrot.slane %v1763, 2
    %v1765 = vmax.f32 %v1763, %v1764
    %v1766 = vrot.slane %v1765, 1
    %v1767 = vmax.f32 %v1765, %v1766
    %v1768 = vsel %vm778, %v1754, -inf
    %v1769 = vrot.slane %v1768, 4
    %v1770 = vmax.f32 %v1768, %v1769
    %v1771 = vrot.slane %v1770, 2
    %v1772 = vmax.f32 %v1770, %v1771
    %v1773 = vrot.slane %v1772, 1
    %v1774 = vmax.f32 %v1772, %v1773
    %v1775 = vsel %vm778, %v1755, -inf
    %v1776 = vrot.slane %v1775, 4
    %v1777 = vmax.f32 %v1775, %v1776
    %v1778 = vrot.slane %v1777, 2
    %v1779 = vmax.f32 %v1777, %v1778
    %v1780 = vrot.slane %v1779, 1
    %v1781 = vmax.f32 %v1779, %v1780
    %v1782 = vsel %vm778, %v1756, -inf
    %v1783 = vrot.slane %v1782, 4
    %v1784 = vmax.f32 %v1782, %v1783
    %v1785 = vrot.slane %v1784, 2
    %v1786 = vmax.f32 %v1784, %v1785
    %v1787 = vrot.slane %v1786, 1
    %v1788 = vmax.f32 %v1786, %v1787
    %v1789 = vsel %vm778, %v1757, -inf
    %v1790 = vrot.slane %v1789, 4
    %v1791 = vmax.f32 %v1789, %v1790
    %v1792 = vrot.slane %v1791, 2
    %v1793 = vmax.f32 %v1791, %v1792
    %v1794 = vrot.slane %v1793, 1
    %v1795 = vmax.f32 %v1793, %v1794
    %v1796 = vsel %vm778, %v1758, -inf
    %v1797 = vrot.slane %v1796, 4
    %v1798 = vmax.f32 %v1796, %v1797
    %v1799 = vrot.slane %v1798, 2
    %v1800 = vmax.f32 %v1798, %v1799
    %v1801 = vrot.slane %v1800, 1
    %v1802 = vmax.f32 %v1800, %v1801
    %v1803 = vsel %vm778, %v1759, -inf
    %v1804 = vrot.slane %v1803, 4
    %v1805 = vmax.f32 %v1803, %v1804
    %v1806 = vrot.slane %v1805, 2
    %v1807 = vmax.f32 %v1805, %v1806
    %v1808 = vrot.slane %v1807, 1
    %v1809 = vmax.f32 %v1807, %v1808
    %v1810 = vsel %vm778, %v1760, -inf
    %v1811 = vrot.slane %v1810, 4
    %v1812 = vmax.f32 %v1810, %v1811
    %v1813 = vrot.slane %v1812, 2
    %v1814 = vmax.f32 %v1812, %v1813
    %v1815 = vrot.slane %v1814, 1
    %v1816 = vmax.f32 %v1814, %v1815
    %v1817 = vld [vmem:[%s4] sm:$0xff]
    %v1818 = vld [vmem:[%s4 + $0x10] sm:$0xff]
    %v1819 = vld [vmem:[%s4 + $0x20] sm:$0xff]
    %v1820 = vld [vmem:[%s4 + $0x30] sm:$0xff]
    %v1821 = vld [vmem:[%s4 + $0x40] sm:$0xff]
    %v1822 = vld [vmem:[%s4 + $0x50] sm:$0xff]
    %v1823 = vld [vmem:[%s4 + $0x60] sm:$0xff]
    %v1824 = vld [vmem:[%s4 + $0x70] sm:$0xff]
    %vm1833 = vcmask 1041409
    %v1834 = vsel %vm1833, %v1774, %v1767
    %vm1835 = vcmask 1042434
    %v1836 = vsel %vm1835, %v1781, %v1834
    %vm1837 = vcmask 1043459
    %v1838 = vsel %vm1837, %v1788, %v1836
    %vm1839 = vcmask 1044484
    %v1840 = vsel %vm1839, %v1795, %v1838
    %vm1841 = vcmask 1045509
    %v1842 = vsel %vm1841, %v1802, %v1840
    %vm1843 = vcmask 1046534
    %v1844 = vsel %vm1843, %v1809, %v1842
    %vm1845 = vcmask 1047559
    %v1846 = vsel %vm1845, %v1816, %v1844
    %v1847 = vsel %vm778, %v1846, 0
    %1849 = vmatprep.subr.mxu0 0.0
    %1850 = vmatpush1.msra.mxu0 0.0
    %1851 = vmatprep.subr.mxu0 0.0
    %1852 = vmatpush1.msra.mxu0 0.0
    %1853 = vmatprep.subr.mxu0 0.0
    %1854 = vmatpush1.msra.mxu0 0.0
    %1855 = vmatprep.subr.mxu0 0.0
    %1856 = vmatpush1.msra.mxu0 0.0
    %1857 = vmatprep.subr.mxu0 0.0
    %1858 = vmatpush1.msra.mxu0 0.0
    %1859 = vmatprep.subr.mxu0 0.0
    %1860 = vmatpush1.msra.mxu0 0.0
    %1861 = vmatprep.subr.mxu0 0.0
    %1862 = vmatpush1.msra.mxu0 0.0
    %1863 = vmatprep.subr.mxu0 0.0
    %1864 = vmatpush1.msra.mxu0 0.0
    %1865 = vmatprep.subr.mxu0 0.0
    %1866 = vmatpush1.msra.mxu0 0.0
    %1867 = vmatprep.subr.mxu0 0.0
    %1868 = vmatpush1.msra.mxu0 0.0
    %1869 = vmatprep.subr.mxu0 0.0
    %1870 = vmatpush1.msra.mxu0 0.0
    %1871 = vmatprep.subr.mxu0 0.0
    %1872 = vmatpush1.msra.mxu0 0.0
    %1873 = vmatprep.subr.mxu0 0.0
    %1874 = vmatpush1.msra.mxu0 %v1824
    %1875 = vmatprep.subr.mxu0 0.0
    %1876 = vmatpush1.msra.mxu0 %v1823
    %1877 = vmatprep.subr.mxu0 0.0
    %1878 = vmatpush1.msra.mxu0 %v1822
    %1879 = vmatprep.subr.mxu0 0.0
    %1880 = vmatpush1.msra.mxu0 %v1821
    %1881 = vmatprep.subr.mxu0 0.0
    %1882 = vmatpush2.msra.mxu0 0.0
    %1883 = vmatprep.subr.mxu0 0.0
    %1884 = vmatpush2.msra.mxu0 0.0
    %1885 = vmatprep.subr.mxu0 0.0
    %1886 = vmatpush2.msra.mxu0 0.0
    %1887 = vmatprep.subr.mxu0 0.0
    %1888 = vmatpush2.msra.mxu0 0.0
    %1889 = vmatprep.subr.mxu0 0.0
    %1890 = vmatpush2.msra.mxu0 0.0
    %1891 = vmatprep.subr.mxu0 0.0
    %1892 = vmatpush2.msra.mxu0 0.0
    %1893 = vmatprep.subr.mxu0 0.0
    %1894 = vmatpush2.msra.mxu0 0.0
    %1895 = vmatprep.subr.mxu0 0.0
    %1896 = vmatpush2.msra.mxu0 0.0
    %1897 = vmatprep.subr.mxu0 0.0
    %1898 = vmatpush2.msra.mxu0 0.0
    %1899 = vmatprep.subr.mxu0 0.0
    %1900 = vmatpush2.msra.mxu0 0.0
    %1901 = vmatprep.subr.mxu0 0.0
    %1902 = vmatpush2.msra.mxu0 0.0
    %1903 = vmatprep.subr.mxu0 0.0
    %1904 = vmatpush2.msra.mxu0 0.0
    %1905 = vmatprep.subr.mxu0 0.0
    %1906 = vmatpush2.msra.mxu0 0.0
    %1907 = vmatprep.subr.mxu0 0.0
    %1908 = vmatpush2.msra.mxu0 0.0
    %1909 = vmatprep.subr.mxu0 0.0
    %1910 = vmatpush2.msra.mxu0 0.0
    %1911 = vmatprep.subr.mxu0 0.0
    %1912 = vmatpush2.msra.mxu0 0.0
    %1913 = vmatprep.mubr.f32.mxu0 0.0
    %1914 = vmatmul.mubr.f32.gmra.mxu0 %v1847
    %v1915 = vpop.f32.mrf.mxu0
    %v1916 = vadd.f32 0.0, %v1915
    %v1917 = vpop.f32.mrf.mxu0
    %1918 = vdwg.mxu0
    %v1927 = vsel %vm1833, %v1698, %v1697
    %v1928 = vsel %vm1835, %v1699, %v1927
    %v1929 = vsel %vm1837, %v1700, %v1928
    %v1930 = vsel %vm1839, %v1701, %v1929
    %v1931 = vsel %vm1841, %v1702, %v1930
    %v1932 = vsel %vm1843, %v1703, %v1931
    %v1933 = vsel %vm1845, %v1704, %v1932
    %v1934 = vsel %vm778, %v1933, 0
    %1936 = vmatprep.subr.mxu0 0.0
    %1937 = vmatpush1.msra.mxu0 0.0
    %1938 = vmatprep.subr.mxu0 0.0
    %1939 = vmatpush1.msra.mxu0 0.0
    %1940 = vmatprep.subr.mxu0 0.0
    %1941 = vmatpush1.msra.mxu0 0.0
    %1942 = vmatprep.subr.mxu0 0.0
    %1943 = vmatpush1.msra.mxu0 0.0
    %1944 = vmatprep.subr.mxu0 0.0
    %1945 = vmatpush1.msra.mxu0 0.0
    %1946 = vmatprep.subr.mxu0 0.0
    %1947 = vmatpush1.msra.mxu0 0.0
    %1948 = vmatprep.subr.mxu0 0.0
    %1949 = vmatpush1.msra.mxu0 0.0
    %1950 = vmatprep.subr.mxu0 0.0
    %1951 = vmatpush1.msra.mxu0 0.0
    %1952 = vmatprep.subr.mxu0 0.0
    %1953 = vmatpush1.msra.mxu0 0.0
    %1954 = vmatprep.subr.mxu0 0.0
    %1955 = vmatpush1.msra.mxu0 0.0
    %1956 = vmatprep.subr.mxu0 0.0
    %1957 = vmatpush1.msra.mxu0 0.0
    %1958 = vmatprep.subr.mxu0 0.0
    %1959 = vmatpush1.msra.mxu0 0.0
    %1960 = vmatprep.subr.mxu0 0.0
    %1961 = vmatpush1.msra.mxu0 %v1820
    %1962 = vmatprep.subr.mxu0 0.0
    %1963 = vmatpush1.msra.mxu0 %v1819
    %1964 = vmatprep.subr.mxu0 0.0
    %1965 = vmatpush1.msra.mxu0 %v1818
    %1966 = vmatprep.subr.mxu0 0.0
    %1967 = vmatpush1.msra.mxu0 %v1817
    %1968 = vmatprep.subr.mxu0 0.0
    %1969 = vmatpush2.msra.mxu0 0.0
    %1970 = vmatprep.subr.mxu0 0.0
    %1971 = vmatpush2.msra.mxu0 0.0
    %1972 = vmatprep.subr.mxu0 0.0
    %1973 = vmatpush2.msra.mxu0 0.0
    %1974 = vmatprep.subr.mxu0 0.0
    %1975 = vmatpush2.msra.mxu0 0.0
    %1976 = vmatprep.subr.mxu0 0.0
    %1977 = vmatpush2.msra.mxu0 0.0
    %1978 = vmatprep.subr.mxu0 0.0
    %1979 = vmatpush2.msra.mxu0 0.0
    %1980 = vmatprep.subr.mxu0 0.0
    %1981 = vmatpush2.msra.mxu0 0.0
    %1982 = vmatprep.subr.mxu0 0.0
    %1983 = vmatpush2.msra.mxu0 0.0
    %1984 = vmatprep.subr.mxu0 0.0
    %1985 = vmatpush2.msra.mxu0 0.0
    %1986 = vmatprep.subr.mxu0 0.0
    %1987 = vmatpush2.msra.mxu0 0.0
    %1988 = vmatprep.subr.mxu0 0.0
    %1989 = vmatpush2.msra.mxu0 0.0
    %1990 = vmatprep.subr.mxu0 0.0
    %1991 = vmatpush2.msra.mxu0 0.0
    %1992 = vmatprep.subr.mxu0 0.0
    %1993 = vmatpush2.msra.mxu0 0.0
    %1994 = vmatprep.subr.mxu0 0.0
    %1995 = vmatpush2.msra.mxu0 0.0
    %1996 = vmatprep.subr.mxu0 0.0
    %1997 = vmatpush2.msra.mxu0 0.0
    %1998 = vmatprep.subr.mxu0 0.0
    %1999 = vmatpush2.msra.mxu0 0.0
    %2000 = vmatprep.mubr.f32.mxu0 0.0
    %2001 = vmatmul.mubr.f32.gmra.mxu0 %v1934
    %v2002 = vpop.f32.mrf.mxu0
    %v2003 = vadd.f32 %v1916, %v2002
    %v2004 = vpop.f32.mrf.mxu0
    %2005 = vdwg.mxu0
    %v2006 = vld [vmem:[%s4 + $0x80] ss:$0 sm:$0xff]
    %v2007 = vadd.f32 %v2003, %v2006
    %v2008 = vld [vmem:[%s4 + $0x90] sm:$0xff]
    %v2009 = vld [vmem:[%s4 + $0x98] sm:$0xff]
    %v2010 = vld [vmem:[%s4 + $0xa0] sm:$0xff]
    %v2011 = vld [vmem:[%s4 + $0xa8] sm:$0xff]
    %s2012 = scalar_lea.vmem %s4, 176
    %v2013 = vld [vmem:[%s2012] ss:$8 sm:$0x3]
    %v2015 = vlaneseq
    %v2016 = vshrl.u32 %v2015, 7
    %v2017 = vsub.s32 0, %v2016
    %v2018 = vrot.slane %v2013, %v2017
    %v2019 = vlaneseq
    %v2020 = vshrl.u32 %v2019, 7
    %v2021 = vsub.s32 1, %v2020
    %v2022 = vrot.slane %v2013, %v2021
    %vm2025 = vcmask 130048
    %v2027 = vsel %vm2025, %v2007, 0
    %2029 = vmatprep.subr.mxu0 0.0
    %2030 = vmatpush1.msra.mxu0 0.0
    %2031 = vmatprep.subr.mxu0 0.0
    %2032 = vmatpush1.msra.mxu0 0.0
    %2033 = vmatprep.subr.mxu0 0.0
    %2034 = vmatpush1.msra.mxu0 0.0
    %2035 = vmatprep.subr.mxu0 0.0
    %2036 = vmatpush1.msra.mxu0 0.0
    %2037 = vmatprep.subr.mxu0 0.0
    %2038 = vmatpush1.msra.mxu0 0.0
    %2039 = vmatprep.subr.mxu0 0.0
    %2040 = vmatpush1.msra.mxu0 0.0
    %2041 = vmatprep.subr.mxu0 0.0
    %2042 = vmatpush1.msra.mxu0 0.0
    %2043 = vmatprep.subr.mxu0 0.0
    %2044 = vmatpush1.msra.mxu0 0.0
    %2045 = vmatprep.subr.mxu0 0.0
    %2046 = vmatpush1.msra.mxu0 0.0
    %2047 = vmatprep.subr.mxu0 0.0
    %2048 = vmatpush1.msra.mxu0 0.0
    %2049 = vmatprep.subr.mxu0 0.0
    %2050 = vmatpush1.msra.mxu0 0.0
    %2051 = vmatprep.subr.mxu0 0.0
    %2052 = vmatpush1.msra.mxu0 0.0
    %2053 = vmatprep.subr.mxu0 0.0
    %2054 = vmatpush1.msra.mxu0 0.0
    %2055 = vmatprep.subr.mxu0 0.0
    %2056 = vmatpush1.msra.mxu0 0.0
    %2057 = vmatprep.subr.mxu0 %v2011
    %2058 = vmatpush1.msra.mxu0 %v2010
    %2059 = vmatprep.subr.mxu0 %v2009
    %2060 = vmatpush1.msra.mxu0 %v2008
    %2061 = vmatprep.subr.mxu0 0.0
    %2062 = vmatpush2.msra.mxu0 0.0
    %2063 = vmatprep.subr.mxu0 0.0
    %2064 = vmatpush2.msra.mxu0 0.0
    %2065 = vmatprep.subr.mxu0 0.0
    %2066 = vmatpush2.msra.mxu0 0.0
    %2067 = vmatprep.subr.mxu0 0.0
    %2068 = vmatpush2.msra.mxu0 0.0
    %2069 = vmatprep.subr.mxu0 0.0
    %2070 = vmatpush2.msra.mxu0 0.0
    %2071 = vmatprep.subr.mxu0 0.0
    %2072 = vmatpush2.msra.mxu0 0.0
    %2073 = vmatprep.subr.mxu0 0.0
    %2074 = vmatpush2.msra.mxu0 0.0
    %2075 = vmatprep.subr.mxu0 0.0
    %2076 = vmatpush2.msra.mxu0 0.0
    %2077 = vmatprep.subr.mxu0 0.0
    %2078 = vmatpush2.msra.mxu0 0.0
    %2079 = vmatprep.subr.mxu0 0.0
    %2080 = vmatpush2.msra.mxu0 0.0
    %2081 = vmatprep.subr.mxu0 0.0
    %2082 = vmatpush2.msra.mxu0 0.0
    %2083 = vmatprep.subr.mxu0 0.0
    %2084 = vmatpush2.msra.mxu0 0.0
    %2085 = vmatprep.subr.mxu0 0.0
    %2086 = vmatpush2.msra.mxu0 0.0
    %2087 = vmatprep.subr.mxu0 0.0
    %2088 = vmatpush2.msra.mxu0 0.0
    %2089 = vmatprep.subr.mxu0 0.0
    %2090 = vmatpush2.msra.mxu0 0.0
    %2091 = vmatprep.subr.mxu0 0.0
    %2092 = vmatpush2.msra.mxu0 0.0
    %2093 = vmatprep.mubr.f32.mxu0 0.0
    %2094 = vmatmul.mubr.f32.gmra.mxu0 %v2027
    %v2095 = vpop.f32.mrf.mxu0
    %v2096 = vadd.f32 %v2018, %v2095
    %v2097 = vpop.f32.mrf.mxu0
    %v2098 = vadd.f32 %v2022, %v2097
    %2099 = vdwg.mxu0
    %v2100 = vld [vmem:[%s4 + $0xc0] sm:$0xff]
    %v2101 = vld [vmem:[%s4 + $0xd0] sm:$0xff]
    %v2102 = vld [vmem:[%s4 + $0xe0] sm:$0xff]
    %v2103 = vld [vmem:[%s4 + $0xf0] sm:$0xff]
    %v2104 = vld [vmem:[%s4 + $0x100] ss:$0 sm:$0xff]
    %v2105 = vld [vmem:[%s4 + $0x110] sm:$0xff]
    %v2106 = vld [vmem:[%s4 + $0x120] sm:$0xff]
    %v2107 = vld [vmem:[%s4 + $0x130] sm:$0xff]
    %v2108 = vld [vmem:[%s4 + $0x140] sm:$0xff]
    %v2109 = vld [vmem:[%s4 + $0x150] ss:$0 sm:$0xff]
    %v2111 = vsel %vm778, 0.0, 0
    %2113 = vmatprep.subr.mxu0 0.0
    %2114 = vmatpush1.msra.mxu0 0.0
    %2115 = vmatprep.subr.mxu0 0.0
    %2116 = vmatpush1.msra.mxu0 0.0
    %2117 = vmatprep.subr.mxu0 0.0
    %2118 = vmatpush1.msra.mxu0 0.0
    %2119 = vmatprep.subr.mxu0 0.0
    %2120 = vmatpush1.msra.mxu0 0.0
    %2121 = vmatprep.subr.mxu0 0.0
    %2122 = vmatpush1.msra.mxu0 0.0
    %2123 = vmatprep.subr.mxu0 0.0
    %2124 = vmatpush1.msra.mxu0 0.0
    %2125 = vmatprep.subr.mxu0 0.0
    %2126 = vmatpush1.msra.mxu0 0.0
    %2127 = vmatprep.subr.mxu0 0.0
    %2128 = vmatpush1.msra.mxu0 0.0
    %2129 = vmatprep.subr.mxu0 0.0
    %2130 = vmatpush1.msra.mxu0 0.0
    %2131 = vmatprep.subr.mxu0 0.0
    %2132 = vmatpush1.msra.mxu0 0.0
    %2133 = vmatprep.subr.mxu0 0.0
    %2134 = vmatpush1.msra.mxu0 0.0
    %2135 = vmatprep.subr.mxu0 0.0
    %2136 = vmatpush1.msra.mxu0 0.0
    %2137 = vmatprep.subr.mxu0 0.0
    %2138 = vmatpush1.msra.mxu0 %v2103
    %2139 = vmatprep.subr.mxu0 0.0
    %2140 = vmatpush1.msra.mxu0 %v2102
    %2141 = vmatprep.subr.mxu0 0.0
    %2142 = vmatpush1.msra.mxu0 %v2101
    %2143 = vmatprep.subr.mxu0 0.0
    %2144 = vmatpush1.msra.mxu0 %v2100
    %2145 = vmatprep.subr.mxu0 0.0
    %2146 = vmatpush2.msra.mxu0 0.0
    %2147 = vmatprep.subr.mxu0 0.0
    %2148 = vmatpush2.msra.mxu0 0.0
    %2149 = vmatprep.subr.mxu0 0.0
    %2150 = vmatpush2.msra.mxu0 0.0
    %2151 = vmatprep.subr.mxu0 0.0
    %2152 = vmatpush2.msra.mxu0 0.0
    %2153 = vmatprep.subr.mxu0 0.0
    %2154 = vmatpush2.msra.mxu0 0.0
    %2155 = vmatprep.subr.mxu0 0.0
    %2156 = vmatpush2.msra.mxu0 0.0
    %2157 = vmatprep.subr.mxu0 0.0
    %2158 = vmatpush2.msra.mxu0 0.0
    %2159 = vmatprep.subr.mxu0 0.0
    %2160 = vmatpush2.msra.mxu0 0.0
    %2161 = vmatprep.subr.mxu0 0.0
    %2162 = vmatpush2.msra.mxu0 0.0
    %2163 = vmatprep.subr.mxu0 0.0
    %2164 = vmatpush2.msra.mxu0 0.0
    %2165 = vmatprep.subr.mxu0 0.0
    %2166 = vmatpush2.msra.mxu0 0.0
    %2167 = vmatprep.subr.mxu0 0.0
    %2168 = vmatpush2.msra.mxu0 0.0
    %2169 = vmatprep.subr.mxu0 0.0
    %2170 = vmatpush2.msra.mxu0 0.0
    %2171 = vmatprep.subr.mxu0 0.0
    %2172 = vmatpush2.msra.mxu0 0.0
    %2173 = vmatprep.subr.mxu0 0.0
    %2174 = vmatpush2.msra.mxu0 0.0
    %2175 = vmatprep.subr.mxu0 0.0
    %2176 = vmatpush2.msra.mxu0 0.0
    %2177 = vmatprep.mubr.f32.mxu0 0.0
    %2178 = vmatmul.mubr.f32.gmra.mxu0 %v2111
    %v2179 = vpop.f32.mrf.mxu0
    %v2180 = vadd.f32 %v2104, %v2179
    %v2181 = vpop.f32.mrf.mxu0
    %2182 = vdwg.mxu0
    %2183 = vmatprep.subr.mxu0 0.0
    %2184 = vmatpush1.msra.mxu0 0.0
    %2185 = vmatprep.subr.mxu0 0.0
    %2186 = vmatpush1.msra.mxu0 0.0
    %2187 = vmatprep.subr.mxu0 0.0
    %2188 = vmatpush1.msra.mxu0 0.0
    %2189 = vmatprep.subr.mxu0 0.0
    %2190 = vmatpush1.msra.mxu0 0.0
    %2191 = vmatprep.subr.mxu0 0.0
    %2192 = vmatpush1.msra.mxu0 0.0
    %2193 = vmatprep.subr.mxu0 0.0
    %2194 = vmatpush1.msra.mxu0 0.0
    %2195 = vmatprep.subr.mxu0 0.0
    %2196 = vmatpush1.msra.mxu0 0.0
    %2197 = vmatprep.subr.mxu0 0.0
    %2198 = vmatpush1.msra.mxu0 0.0
    %2199 = vmatprep.subr.mxu0 0.0
    %2200 = vmatpush1.msra.mxu0 0.0
    %2201 = vmatprep.subr.mxu0 0.0
    %2202 = vmatpush1.msra.mxu0 0.0
    %2203 = vmatprep.subr.mxu0 0.0
    %2204 = vmatpush1.msra.mxu0 0.0
    %2205 = vmatprep.subr.mxu0 0.0
    %2206 = vmatpush1.msra.mxu0 0.0
    %2207 = vmatprep.subr.mxu0 0.0
    %2208 = vmatpush1.msra.mxu0 %v2108
    %2209 = vmatprep.subr.mxu0 0.0
    %2210 = vmatpush1.msra.mxu0 %v2107
    %2211 = vmatprep.subr.mxu0 0.0
    %2212 = vmatpush1.msra.mxu0 %v2106
    %2213 = vmatprep.subr.mxu0 0.0
    %2214 = vmatpush1.msra.mxu0 %v2105
    %2215 = vmatprep.subr.mxu0 0.0
    %2216 = vmatpush2.msra.mxu0 0.0
    %2217 = vmatprep.subr.mxu0 0.0
    %2218 = vmatpush2.msra.mxu0 0.0
    %2219 = vmatprep.subr.mxu0 0.0
    %2220 = vmatpush2.msra.mxu0 0.0
    %2221 = vmatprep.subr.mxu0 0.0
    %2222 = vmatpush2.msra.mxu0 0.0
    %2223 = vmatprep.subr.mxu0 0.0
    %2224 = vmatpush2.msra.mxu0 0.0
    %2225 = vmatprep.subr.mxu0 0.0
    %2226 = vmatpush2.msra.mxu0 0.0
    %2227 = vmatprep.subr.mxu0 0.0
    %2228 = vmatpush2.msra.mxu0 0.0
    %2229 = vmatprep.subr.mxu0 0.0
    %2230 = vmatpush2.msra.mxu0 0.0
    %2231 = vmatprep.subr.mxu0 0.0
    %2232 = vmatpush2.msra.mxu0 0.0
    %2233 = vmatprep.subr.mxu0 0.0
    %2234 = vmatpush2.msra.mxu0 0.0
    %2235 = vmatprep.subr.mxu0 0.0
    %2236 = vmatpush2.msra.mxu0 0.0
    %2237 = vmatprep.subr.mxu0 0.0
    %2238 = vmatpush2.msra.mxu0 0.0
    %2239 = vmatprep.subr.mxu0 0.0
    %2240 = vmatpush2.msra.mxu0 0.0
    %2241 = vmatprep.subr.mxu0 0.0
    %2242 = vmatpush2.msra.mxu0 0.0
    %2243 = vmatprep.subr.mxu0 0.0
    %2244 = vmatpush2.msra.mxu0 0.0
    %2245 = vmatprep.subr.mxu0 0.0
    %2246 = vmatpush2.msra.mxu0 0.0
    %2247 = vmatprep.mubr.f32.mxu0 0.0
    %2248 = vmatmul.mubr.f32.gmra.mxu0 %v2111
    %v2249 = vpop.f32.mrf.mxu0
    %v2250 = vadd.f32 %v2109, %v2249
    %v2251 = vpop.f32.mrf.mxu0
    %2252 = vdwg.mxu0
    %v2253 = vadd.f32 %v2096, %v2180
    %v2254 = vxor.u32 %v2253, 2147483648
    %v2255 = vmul.f32 %v2254, 1.442695
    %v2256 = vpow.pop %v2255
    %v2257 = vadd.f32 %v2256, 1.0
    %v2258 = vrcp.pop %v2257
    %v2259 = vmul.f32 1.0, %v2258
    %2261 = vrot.lane.b32.xlu0 %v2180, 64
    %v2262 = vpop.permute.xlu0 %2261
    %v2264 = vmul.f32 %v2259, %v2262
    %2266 = vrot.lane.b32.xlu0 %v2264, 64
    %v2267 = vpop.permute.xlu0 %2266
    %v2269 = vadd.f32 %v2096, %v2267
    %v2270 = vtanh.pop %v2269
    %v2271 = vsub.f32 1.0, %v2259
    %2273 = vrot.lane.b32.xlu0 %v2270, 96
    %v2274 = vpop.permute.xlu0 %2273
    %v2276 = vmul.f32 %v2271, %v2274
    %v2277 = vmul.f32 %v2259, 0.0
    %v2278 = vadd.f32 %v2276, %v2277
    %v2280 = vrot.slane %v2250, 1
    %2281 = vrot.lane.b32.xlu0 %v2280, 96
    %v2282 = vpop.permute.xlu0 %2281
    %v2284 = vadd.f32 %v2096, %v2282
    %v2285 = vadd.f32 %v2098, %v2282
    %v2286 = vxor.u32 %v2284, 2147483648
    %v2287 = vmul.f32 %v2286, 1.442695
    %v2288 = vpow.pop %v2287
    %v2289 = vadd.f32 %v2288, 1.0
    %v2290 = vrcp.pop %v2289
    %v2291 = vmul.f32 1.0, %v2290
    %v2292 = vxor.u32 %v2285, 2147483648
    %v2293 = vmul.f32 %v2292, 1.442695
    %v2294 = vpow.pop %v2293
    %v2295 = vadd.f32 %v2294, 1.0
    %v2296 = vrcp.pop %v2295
    %v2297 = vmul.f32 1.0, %v2296
    %2298 = vrot.lane.b32.xlu0 %v2280, 32
    %v2299 = vpop.permute.xlu0 %2298
    %v2301 = vmul.f32 %v2291, %v2299
    %2303 = vrot.lane.b32.xlu0 %v2301, 64
    %v2304 = vpop.permute.xlu0 %2303
    %v2306 = vadd.f32 %v2098, %v2304
    %v2307 = vtanh.pop %v2306
    %v2308 = vsub.f32 1.0, %v2297
    %2310 = vrot.lane.b32.xlu0 %v2307, 96
    %v2311 = vpop.permute.xlu0 %2310
    %v2313 = vmul.f32 %v2308, %v2311
    %v2314 = vmul.f32 %v2297, 0.0
    %v2315 = vadd.f32 %v2313, %v2314
    %2317 = vrot.lane.b32.xlu0 %v2278, 96
    %v2318 = vpop.permute.xlu0 %2317
    %vm2320 = vcmask 253952
    %2321 = vst.msk [vmem:[#allocation2] sm:$0x1] %vm2320, %v2318
    %vm2322 = vcmask 261127
    %2323 = vst.msk [vmem:[#allocation3] sm:$0x80] %vm2322, %v2315
    %v2324 = vsel %vm778, %v2318, 0
    %2326 = vmatprep.subr.mxu0 0.0
    %2327 = vmatpush1.msra.mxu0 0.0
    %2328 = vmatprep.subr.mxu0 0.0
    %2329 = vmatpush1.msra.mxu0 0.0
    %2330 = vmatprep.subr.mxu0 0.0
    %2331 = vmatpush1.msra.mxu0 0.0
    %2332 = vmatprep.subr.mxu0 0.0
    %2333 = vmatpush1.msra.mxu0 0.0
    %2334 = vmatprep.subr.mxu0 0.0
    %2335 = vmatpush1.msra.mxu0 0.0
    %2336 = vmatprep.subr.mxu0 0.0
    %2337 = vmatpush1.msra.mxu0 0.0
    %2338 = vmatprep.subr.mxu0 0.0
    %2339 = vmatpush1.msra.mxu0 0.0
    %2340 = vmatprep.subr.mxu0 0.0
    %2341 = vmatpush1.msra.mxu0 0.0
    %2342 = vmatprep.subr.mxu0 0.0
    %2343 = vmatpush1.msra.mxu0 0.0
    %2344 = vmatprep.subr.mxu0 0.0
    %2345 = vmatpush1.msra.mxu0 0.0
    %2346 = vmatprep.subr.mxu0 0.0
    %2347 = vmatpush1.msra.mxu0 0.0
    %2348 = vmatprep.subr.mxu0 0.0
    %2349 = vmatpush1.msra.mxu0 0.0
    %2350 = vmatprep.subr.mxu0 0.0
    %2351 = vmatpush1.msra.mxu0 %v2103
    %2352 = vmatprep.subr.mxu0 0.0
    %2353 = vmatpush1.msra.mxu0 %v2102
    %2354 = vmatprep.subr.mxu0 0.0
    %2355 = vmatpush1.msra.mxu0 %v2101
    %2356 = vmatprep.subr.mxu0 0.0
    %2357 = vmatpush1.msra.mxu0 %v2100
    %2358 = vmatprep.subr.mxu0 0.0
    %2359 = vmatpush2.msra.mxu0 0.0
    %2360 = vmatprep.subr.mxu0 0.0
    %2361 = vmatpush2.msra.mxu0 0.0
    %2362 = vmatprep.subr.mxu0 0.0
    %2363 = vmatpush2.msra.mxu0 0.0
    %2364 = vmatprep.subr.mxu0 0.0
    %2365 = vmatpush2.msra.mxu0 0.0
    %2366 = vmatprep.subr.mxu0 0.0
    %2367 = vmatpush2.msra.mxu0 0.0
    %2368 = vmatprep.subr.mxu0 0.0
    %2369 = vmatpush2.msra.mxu0 0.0
    %2370 = vmatprep.subr.mxu0 0.0
    %2371 = vmatpush2.msra.mxu0 0.0
    %2372 = vmatprep.subr.mxu0 0.0
    %2373 = vmatpush2.msra.mxu0 0.0
    %2374 = vmatprep.subr.mxu0 0.0
    %2375 = vmatpush2.msra.mxu0 0.0
    %2376 = vmatprep.subr.mxu0 0.0
    %2377 = vmatpush2.msra.mxu0 0.0
    %2378 = vmatprep.subr.mxu0 0.0
    %2379 = vmatpush2.msra.mxu0 0.0
    %2380 = vmatprep.subr.mxu0 0.0
    %2381 = vmatpush2.msra.mxu0 0.0
    %2382 = vmatprep.subr.mxu0 0.0
    %2383 = vmatpush2.msra.mxu0 0.0
    %2384 = vmatprep.subr.mxu0 0.0
    %2385 = vmatpush2.msra.mxu0 0.0
    %2386 = vmatprep.subr.mxu0 0.0
    %2387 = vmatpush2.msra.mxu0 0.0
    %2388 = vmatprep.subr.mxu0 0.0
    %2389 = vmatpush2.msra.mxu0 0.0
    %2390 = vmatprep.mubr.f32.mxu0 0.0
    %2391 = vmatmul.mubr.f32.gmra.mxu0 %v2324
    %v2392 = vpop.f32.mrf.mxu0
    %v2393 = vadd.f32 %v2104, %v2392
    %v2394 = vpop.f32.mrf.mxu0
    %2395 = vdwg.mxu0
    %v2397 = vrot.slane %v2315, 7
    %v2398 = vsel %vm778, %v2397, 0
    %2400 = vmatprep.subr.mxu0 0.0
    %2401 = vmatpush1.msra.mxu0 0.0
    %2402 = vmatprep.subr.mxu0 0.0
    %2403 = vmatpush1.msra.mxu0 0.0
    %2404 = vmatprep.subr.mxu0 0.0
    %2405 = vmatpush1.msra.mxu0 0.0
    %2406 = vmatprep.subr.mxu0 0.0
    %2407 = vmatpush1.msra.mxu0 0.0
    %2408 = vmatprep.subr.mxu0 0.0
    %2409 = vmatpush1.msra.mxu0 0.0
    %2410 = vmatprep.subr.mxu0 0.0
    %2411 = vmatpush1.msra.mxu0 0.0
    %2412 = vmatprep.subr.mxu0 0.0
    %2413 = vmatpush1.msra.mxu0 0.0
    %2414 = vmatprep.subr.mxu0 0.0
    %2415 = vmatpush1.msra.mxu0 0.0
    %2416 = vmatprep.subr.mxu0 0.0
    %2417 = vmatpush1.msra.mxu0 0.0
    %2418 = vmatprep.subr.mxu0 0.0
    %2419 = vmatpush1.msra.mxu0 0.0
    %2420 = vmatprep.subr.mxu0 0.0
    %2421 = vmatpush1.msra.mxu0 0.0
    %2422 = vmatprep.subr.mxu0 0.0
    %2423 = vmatpush1.msra.mxu0 0.0
    %2424 = vmatprep.subr.mxu0 0.0
    %2425 = vmatpush1.msra.mxu0 %v2108
    %2426 = vmatprep.subr.mxu0 0.0
    %2427 = vmatpush1.msra.mxu0 %v2107
    %2428 = vmatprep.subr.mxu0 0.0
    %2429 = vmatpush1.msra.mxu0 %v2106
    %2430 = vmatprep.subr.mxu0 0.0
    %2431 = vmatpush1.msra.mxu0 %v2105
    %2432 = vmatprep.subr.mxu0 0.0
    %2433 = vmatpush2.msra.mxu0 0.0
    %2434 = vmatprep.subr.mxu0 0.0
    %2435 = vmatpush2.msra.mxu0 0.0
    %2436 = vmatprep.subr.mxu0 0.0
    %2437 = vmatpush2.msra.mxu0 0.0
    %2438 = vmatprep.subr.mxu0 0.0
    %2439 = vmatpush2.msra.mxu0 0.0
    %2440 = vmatprep.subr.mxu0 0.0
    %2441 = vmatpush2.msra.mxu0 0.0
    %2442 = vmatprep.subr.mxu0 0.0
    %2443 = vmatpush2.msra.mxu0 0.0
    %2444 = vmatprep.subr.mxu0 0.0
    %2445 = vmatpush2.msra.mxu0 0.0
    %2446 = vmatprep.subr.mxu0 0.0
    %2447 = vmatpush2.msra.mxu0 0.0
    %2448 = vmatprep.subr.mxu0 0.0
    %2449 = vmatpush2.msra.mxu0 0.0
    %2450 = vmatprep.subr.mxu0 0.0
    %2451 = vmatpush2.msra.mxu0 0.0
    %2452 = vmatprep.subr.mxu0 0.0
    %2453 = vmatpush2.msra.mxu0 0.0
    %2454 = vmatprep.subr.mxu0 0.0
    %2455 = vmatpush2.msra.mxu0 0.0
    %2456 = vmatprep.subr.mxu0 0.0
    %2457 = vmatpush2.msra.mxu0 0.0
    %2458 = vmatprep.subr.mxu0 0.0
    %2459 = vmatpush2.msra.mxu0 0.0
    %2460 = vmatprep.subr.mxu0 0.0
    %2461 = vmatpush2.msra.mxu0 0.0
    %2462 = vmatprep.subr.mxu0 0.0
    %2463 = vmatpush2.msra.mxu0 0.0
    %2464 = vmatprep.mubr.f32.mxu0 0.0
    %2465 = vmatmul.mubr.f32.gmra.mxu0 %v2398
    %v2466 = vpop.f32.mrf.mxu0
    %v2467 = vadd.f32 %v2109, %v2466
    %v2468 = vpop.f32.mrf.mxu0
    %2469 = vdwg.mxu0
    %v2471 = vrot.slane %v2393, 7
    %v2473 = vadd.f32 %v2096, %v2471
    %v2474 = vxor.u32 %v2473, 2147483648
    %v2475 = vmul.f32 %v2474, 1.442695
    %v2476 = vpow.pop %v2475
    %v2477 = vadd.f32 %v2476, 1.0
    %v2478 = vrcp.pop %v2477
    %v2479 = vmul.f32 1.0, %v2478
    %2480 = vrot.lane.b32.xlu0 %v2471, 64
    %v2481 = vpop.permute.xlu0 %2480
    %v2483 = vmul.f32 %v2479, %v2481
    %2485 = vrot.lane.b32.xlu0 %v2483, 64
    %v2486 = vpop.permute.xlu0 %2485
    %v2488 = vadd.f32 %v2096, %v2486
    %v2489 = vtanh.pop %v2488
    %v2490 = vsub.f32 1.0, %v2479
    %2492 = vrot.lane.b32.xlu0 %v2489, 96
    %v2493 = vpop.permute.xlu0 %2492
    %v2495 = vmul.f32 %v2490, %v2493
    %v2496 = vrot.slane %v2278, 7
    %v2498 = vmul.f32 %v2479, %v2496
    %v2499 = vadd.f32 %v2495, %v2498
    %v2501 = vrot.slane %v2467, 2
    %2502 = vrot.lane.b32.xlu0 %v2501, 96
    %v2503 = vpop.permute.xlu0 %2502
    %v2505 = vadd.f32 %v2096, %v2503
    %v2506 = vadd.f32 %v2098, %v2503
    %v2507 = vxor.u32 %v2505, 2147483648
    %v2508 = vmul.f32 %v2507, 1.442695
    %v2509 = vpow.pop %v2508
    %v2510 = vadd.f32 %v2509, 1.0
    %v2511 = vrcp.pop %v2510
    %v2512 = vmul.f32 1.0, %v2511
    %v2513 = vxor.u32 %v2506, 2147483648
    %v2514 = vmul.f32 %v2513, 1.442695
    %v2515 = vpow.pop %v2514
    %v2516 = vadd.f32 %v2515, 1.0
    %v2517 = vrcp.pop %v2516
    %v2518 = vmul.f32 1.0, %v2517
    %2519 = vrot.lane.b32.xlu0 %v2501, 32
    %v2520 = vpop.permute.xlu0 %2519
    %v2522 = vmul.f32 %v2512, %v2520
    %2524 = vrot.lane.b32.xlu0 %v2522, 64
    %v2525 = vpop.permute.xlu0 %2524
    %v2527 = vadd.f32 %v2098, %v2525
    %v2528 = vtanh.pop %v2527
    %v2529 = vsub.f32 1.0, %v2518
    %2531 = vrot.lane.b32.xlu0 %v2528, 96
    %v2532 = vpop.permute.xlu0 %2531
    %v2534 = vmul.f32 %v2529, %v2532
    %v2535 = vrot.slane %v2315, 1
    %v2537 = vmul.f32 %v2518, %v2535
    %v2538 = vadd.f32 %v2534, %v2537
    %2540 = vrot.lane.b32.xlu0 %v2499, 96
    %v2541 = vpop.permute.xlu0 %2540
    %vm2543 = vcmask 254977
    %2544 = vst.msk [vmem:[#allocation2] sm:$0x2] %vm2543, %v2541
    %vm2545 = vcmask 260102
    %2546 = vst.msk [vmem:[#allocation3] sm:$0x40] %vm2545, %v2538
    %v2547 = vrot.slane %v2499, 1
    %2548 = vrot.lane.b32.xlu0 %v2547, 96
    %v2549 = vpop.permute.xlu0 %2548
    %v2550 = vsel %vm778, %v2549, 0
    %2552 = vmatprep.subr.mxu0 0.0
    %2553 = vmatpush1.msra.mxu0 0.0
    %2554 = vmatprep.subr.mxu0 0.0
    %2555 = vmatpush1.msra.mxu0 0.0
    %2556 = vmatprep.subr.mxu0 0.0
    %2557 = vmatpush1.msra.mxu0 0.0
    %2558 = vmatprep.subr.mxu0 0.0
    %2559 = vmatpush1.msra.mxu0 0.0
    %2560 = vmatprep.subr.mxu0 0.0
    %2561 = vmatpush1.msra.mxu0 0.0
    %2562 = vmatprep.subr.mxu0 0.0
    %2563 = vmatpush1.msra.mxu0 0.0
    %2564 = vmatprep.subr.mxu0 0.0
    %2565 = vmatpush1.msra.mxu0 0.0
    %2566 = vmatprep.subr.mxu0 0.0
    %2567 = vmatpush1.msra.mxu0 0.0
    %2568 = vmatprep.subr.mxu0 0.0
    %2569 = vmatpush1.msra.mxu0 0.0
    %2570 = vmatprep.subr.mxu0 0.0
    %2571 = vmatpush1.msra.mxu0 0.0
    %2572 = vmatprep.subr.mxu0 0.0
    %2573 = vmatpush1.msra.mxu0 0.0
    %2574 = vmatprep.subr.mxu0 0.0
    %2575 = vmatpush1.msra.mxu0 0.0
    %2576 = vmatprep.subr.mxu0 0.0
    %2577 = vmatpush1.msra.mxu0 %v2103
    %2578 = vmatprep.subr.mxu0 0.0
    %2579 = vmatpush1.msra.mxu0 %v2102
    %2580 = vmatprep.subr.mxu0 0.0
    %2581 = vmatpush1.msra.mxu0 %v2101
    %2582 = vmatprep.subr.mxu0 0.0
    %2583 = vmatpush1.msra.mxu0 %v2100
    %2584 = vmatprep.subr.mxu0 0.0
    %2585 = vmatpush2.msra.mxu0 0.0
    %2586 = vmatprep.subr.mxu0 0.0
    %2587 = vmatpush2.msra.mxu0 0.0
    %2588 = vmatprep.subr.mxu0 0.0
    %2589 = vmatpush2.msra.mxu0 0.0
    %2590 = vmatprep.subr.mxu0 0.0
    %2591 = vmatpush2.msra.mxu0 0.0
    %2592 = vmatprep.subr.mxu0 0.0
    %2593 = vmatpush2.msra.mxu0 0.0
    %2594 = vmatprep.subr.mxu0 0.0
    %2595 = vmatpush2.msra.mxu0 0.0
    %2596 = vmatprep.subr.mxu0 0.0
    %2597 = vmatpush2.msra.mxu0 0.0
    %2598 = vmatprep.subr.mxu0 0.0
    %2599 = vmatpush2.msra.mxu0 0.0
    %2600 = vmatprep.subr.mxu0 0.0
    %2601 = vmatpush2.msra.mxu0 0.0
    %2602 = vmatprep.subr.mxu0 0.0
    %2603 = vmatpush2.msra.mxu0 0.0
    %2604 = vmatprep.subr.mxu0 0.0
    %2605 = vmatpush2.msra.mxu0 0.0
    %2606 = vmatprep.subr.mxu0 0.0
    %2607 = vmatpush2.msra.mxu0 0.0
    %2608 = vmatprep.subr.mxu0 0.0
    %2609 = vmatpush2.msra.mxu0 0.0
    %2610 = vmatprep.subr.mxu0 0.0
    %2611 = vmatpush2.msra.mxu0 0.0
    %2612 = vmatprep.subr.mxu0 0.0
    %2613 = vmatpush2.msra.mxu0 0.0
    %2614 = vmatprep.subr.mxu0 0.0
    %2615 = vmatpush2.msra.mxu0 0.0
    %2616 = vmatprep.mubr.f32.mxu0 0.0
    %2617 = vmatmul.mubr.f32.gmra.mxu0 %v2550
    %v2618 = vpop.f32.mrf.mxu0
    %v2619 = vadd.f32 %v2104, %v2618
    %v2620 = vpop.f32.mrf.mxu0
    %2621 = vdwg.mxu0
    %v2623 = vrot.slane %v2538, 6
    %v2624 = vsel %vm778, %v2623, 0
    %2626 = vmatprep.subr.mxu0 0.0
    %2627 = vmatpush1.msra.mxu0 0.0
    %2628 = vmatprep.subr.mxu0 0.0
    %2629 = vmatpush1.msra.mxu0 0.0
    %2630 = vmatprep.subr.mxu0 0.0
    %2631 = vmatpush1.msra.mxu0 0.0
    %2632 = vmatprep.subr.mxu0 0.0
    %2633 = vmatpush1.msra.mxu0 0.0
    %2634 = vmatprep.subr.mxu0 0.0
    %2635 = vmatpush1.msra.mxu0 0.0
    %2636 = vmatprep.subr.mxu0 0.0
    %2637 = vmatpush1.msra.mxu0 0.0
    %2638 = vmatprep.subr.mxu0 0.0
    %2639 = vmatpush1.msra.mxu0 0.0
    %2640 = vmatprep.subr.mxu0 0.0
    %2641 = vmatpush1.msra.mxu0 0.0
    %2642 = vmatprep.subr.mxu0 0.0
    %2643 = vmatpush1.msra.mxu0 0.0
    %2644 = vmatprep.subr.mxu0 0.0
    %2645 = vmatpush1.msra.mxu0 0.0
    %2646 = vmatprep.subr.mxu0 0.0
    %2647 = vmatpush1.msra.mxu0 0.0
    %2648 = vmatprep.subr.mxu0 0.0
    %2649 = vmatpush1.msra.mxu0 0.0
    %2650 = vmatprep.subr.mxu0 0.0
    %2651 = vmatpush1.msra.mxu0 %v2108
    %2652 = vmatprep.subr.mxu0 0.0
    %2653 = vmatpush1.msra.mxu0 %v2107
    %2654 = vmatprep.subr.mxu0 0.0
    %2655 = vmatpush1.msra.mxu0 %v2106
    %2656 = vmatprep.subr.mxu0 0.0
    %2657 = vmatpush1.msra.mxu0 %v2105
    %2658 = vmatprep.subr.mxu0 0.0
    %2659 = vmatpush2.msra.mxu0 0.0
    %2660 = vmatprep.subr.mxu0 0.0
    %2661 = vmatpush2.msra.mxu0 0.0
    %2662 = vmatprep.subr.mxu0 0.0
    %2663 = vmatpush2.msra.mxu0 0.0
    %2664 = vmatprep.subr.mxu0 0.0
    %2665 = vmatpush2.msra.mxu0 0.0
    %2666 = vmatprep.subr.mxu0 0.0
    %2667 = vmatpush2.msra.mxu0 0.0
    %2668 = vmatprep.subr.mxu0 0.0
    %2669 = vmatpush2.msra.mxu0 0.0
    %2670 = vmatprep.subr.mxu0 0.0
    %2671 = vmatpush2.msra.mxu0 0.0
    %2672 = vmatprep.subr.mxu0 0.0
    %2673 = vmatpush2.msra.mxu0 0.0
    %2674 = vmatprep.subr.mxu0 0.0
    %2675 = vmatpush2.msra.mxu0 0.0
    %2676 = vmatprep.subr.mxu0 0.0
    %2677 = vmatpush2.msra.mxu0 0.0
    %2678 = vmatprep.subr.mxu0 0.0
    %2679 = vmatpush2.msra.mxu0 0.0
    %2680 = vmatprep.subr.mxu0 0.0
    %2681 = vmatpush2.msra.mxu0 0.0
    %2682 = vmatprep.subr.mxu0 0.0
    %2683 = vmatpush2.msra.mxu0 0.0
    %2684 = vmatprep.subr.mxu0 0.0
    %2685 = vmatpush2.msra.mxu0 0.0
    %2686 = vmatprep.subr.mxu0 0.0
    %2687 = vmatpush2.msra.mxu0 0.0
    %2688 = vmatprep.subr.mxu0 0.0
    %2689 = vmatpush2.msra.mxu0 0.0
    %2690 = vmatprep.mubr.f32.mxu0 0.0
    %2691 = vmatmul.mubr.f32.gmra.mxu0 %v2624
    %v2692 = vpop.f32.mrf.mxu0
    %v2693 = vadd.f32 %v2109, %v2692
    %v2694 = vpop.f32.mrf.mxu0
    %2695 = vdwg.mxu0
    %v2697 = vrot.slane %v2619, 6
    %v2699 = vadd.f32 %v2096, %v2697
    %v2700 = vxor.u32 %v2699, 2147483648
    %v2701 = vmul.f32 %v2700, 1.442695
    %v2702 = vpow.pop %v2701
    %v2703 = vadd.f32 %v2702, 1.0
    %v2704 = vrcp.pop %v2703
    %v2705 = vmul.f32 1.0, %v2704
    %2706 = vrot.lane.b32.xlu0 %v2697, 64
    %v2707 = vpop.permute.xlu0 %2706
    %v2709 = vmul.f32 %v2705, %v2707
    %2711 = vrot.lane.b32.xlu0 %v2709, 64
    %v2712 = vpop.permute.xlu0 %2711
    %v2714 = vadd.f32 %v2096, %v2712
    %v2715 = vtanh.pop %v2714
    %v2716 = vsub.f32 1.0, %v2705
    %2718 = vrot.lane.b32.xlu0 %v2715, 96
    %v2719 = vpop.permute.xlu0 %2718
    %v2721 = vmul.f32 %v2716, %v2719
    %v2722 = vrot.slane %v2499, 7
    %v2724 = vmul.f32 %v2705, %v2722
    %v2725 = vadd.f32 %v2721, %v2724
    %v2727 = vrot.slane %v2693, 3
    %2728 = vrot.lane.b32.xlu0 %v2727, 96
    %v2729 = vpop.permute.xlu0 %2728
    %v2731 = vadd.f32 %v2096, %v2729
    %v2732 = vadd.f32 %v2098, %v2729
    %v2733 = vxor.u32 %v2731, 2147483648
    %v2734 = vmul.f32 %v2733, 1.442695
    %v2735 = vpow.pop %v2734
    %v2736 = vadd.f32 %v2735, 1.0
    %v2737 = vrcp.pop %v2736
    %v2738 = vmul.f32 1.0, %v2737
    %v2739 = vxor.u32 %v2732, 2147483648
    %v2740 = vmul.f32 %v2739, 1.442695
    %v2741 = vpow.pop %v2740
    %v2742 = vadd.f32 %v2741, 1.0
    %v2743 = vrcp.pop %v2742
    %v2744 = vmul.f32 1.0, %v2743
    %2745 = vrot.lane.b32.xlu0 %v2727, 32
    %v2746 = vpop.permute.xlu0 %2745
    %v2748 = vmul.f32 %v2738, %v2746
    %2750 = vrot.lane.b32.xlu0 %v2748, 64
    %v2751 = vpop.permute.xlu0 %2750
    %v2753 = vadd.f32 %v2098, %v2751
    %v2754 = vtanh.pop %v2753
    %v2755 = vsub.f32 1.0, %v2744
    %2757 = vrot.lane.b32.xlu0 %v2754, 96
    %v2758 = vpop.permute.xlu0 %2757
    %v2760 = vmul.f32 %v2755, %v2758
    %v2761 = vrot.slane %v2538, 1
    %v2763 = vmul.f32 %v2744, %v2761
    %v2764 = vadd.f32 %v2760, %v2763
    %2766 = vrot.lane.b32.xlu0 %v2725, 96
    %v2767 = vpop.permute.xlu0 %2766
    %vm2769 = vcmask 256002
    %2770 = vst.msk [vmem:[#allocation2] sm:$0x4] %vm2769, %v2767
    %vm2771 = vcmask 259077
    %2772 = vst.msk [vmem:[#allocation3] sm:$0x20] %vm2771, %v2764
    %v2773 = vrot.slane %v2725, 2
    %2774 = vrot.lane.b32.xlu0 %v2773, 96
    %v2775 = vpop.permute.xlu0 %2774
    %v2776 = vsel %vm778, %v2775, 0
    %2778 = vmatprep.subr.mxu0 0.0
    %2779 = vmatpush1.msra.mxu0 0.0
    %2780 = vmatprep.subr.mxu0 0.0
    %2781 = vmatpush1.msra.mxu0 0.0
    %2782 = vmatprep.subr.mxu0 0.0
    %2783 = vmatpush1.msra.mxu0 0.0
    %2784 = vmatprep.subr.mxu0 0.0
    %2785 = vmatpush1.msra.mxu0 0.0
    %2786 = vmatprep.subr.mxu0 0.0
    %2787 = vmatpush1.msra.mxu0 0.0
    %2788 = vmatprep.subr.mxu0 0.0
    %2789 = vmatpush1.msra.mxu0 0.0
    %2790 = vmatprep.subr.mxu0 0.0
    %2791 = vmatpush1.msra.mxu0 0.0
    %2792 = vmatprep.subr.mxu0 0.0
    %2793 = vmatpush1.msra.mxu0 0.0
    %2794 = vmatprep.subr.mxu0 0.0
    %2795 = vmatpush1.msra.mxu0 0.0
    %2796 = vmatprep.subr.mxu0 0.0
    %2797 = vmatpush1.msra.mxu0 0.0
    %2798 = vmatprep.subr.mxu0 0.0
    %2799 = vmatpush1.msra.mxu0 0.0
    %2800 = vmatprep.subr.mxu0 0.0
    %2801 = vmatpush1.msra.mxu0 0.0
    %2802 = vmatprep.subr.mxu0 0.0
    %2803 = vmatpush1.msra.mxu0 %v2103
    %2804 = vmatprep.subr.mxu0 0.0
    %2805 = vmatpush1.msra.mxu0 %v2102
    %2806 = vmatprep.subr.mxu0 0.0
    %2807 = vmatpush1.msra.mxu0 %v2101
    %2808 = vmatprep.subr.mxu0 0.0
    %2809 = vmatpush1.msra.mxu0 %v2100
    %2810 = vmatprep.subr.mxu0 0.0
    %2811 = vmatpush2.msra.mxu0 0.0
    %2812 = vmatprep.subr.mxu0 0.0
    %2813 = vmatpush2.msra.mxu0 0.0
    %2814 = vmatprep.subr.mxu0 0.0
    %2815 = vmatpush2.msra.mxu0 0.0
    %2816 = vmatprep.subr.mxu0 0.0
    %2817 = vmatpush2.msra.mxu0 0.0
    %2818 = vmatprep.subr.mxu0 0.0
    %2819 = vmatpush2.msra.mxu0 0.0
    %2820 = vmatprep.subr.mxu0 0.0
    %2821 = vmatpush2.msra.mxu0 0.0
    %2822 = vmatprep.subr.mxu0 0.0
    %2823 = vmatpush2.msra.mxu0 0.0
    %2824 = vmatprep.subr.mxu0 0.0
    %2825 = vmatpush2.msra.mxu0 0.0
    %2826 = vmatprep.subr.mxu0 0.0
    %2827 = vmatpush2.msra.mxu0 0.0
    %2828 = vmatprep.subr.mxu0 0.0
    %2829 = vmatpush2.msra.mxu0 0.0
    %2830 = vmatprep.subr.mxu0 0.0
    %2831 = vmatpush2.msra.mxu0 0.0
    %2832 = vmatprep.subr.mxu0 0.0
    %2833 = vmatpush2.msra.mxu0 0.0
    %2834 = vmatprep.subr.mxu0 0.0
    %2835 = vmatpush2.msra.mxu0 0.0
    %2836 = vmatprep.subr.mxu0 0.0
    %2837 = vmatpush2.msra.mxu0 0.0
    %2838 = vmatprep.subr.mxu0 0.0
    %2839 = vmatpush2.msra.mxu0 0.0
    %2840 = vmatprep.subr.mxu0 0.0
    %2841 = vmatpush2.msra.mxu0 0.0
    %2842 = vmatprep.mubr.f32.mxu0 0.0
    %2843 = vmatmul.mubr.f32.gmra.mxu0 %v2776
    %v2844 = vpop.f32.mrf.mxu0
    %v2845 = vadd.f32 %v2104, %v2844
    %v2846 = vpop.f32.mrf.mxu0
    %2847 = vdwg.mxu0
    %v2849 = vrot.slane %v2764, 5
    %v2850 = vsel %vm778, %v2849, 0
    %2852 = vmatprep.subr.mxu0 0.0
    %2853 = vmatpush1.msra.mxu0 0.0
    %2854 = vmatprep.subr.mxu0 0.0
    %2855 = vmatpush1.msra.mxu0 0.0
    %2856 = vmatprep.subr.mxu0 0.0
    %2857 = vmatpush1.msra.mxu0 0.0
    %2858 = vmatprep.subr.mxu0 0.0
    %2859 = vmatpush1.msra.mxu0 0.0
    %2860 = vmatprep.subr.mxu0 0.0
    %2861 = vmatpush1.msra.mxu0 0.0
    %2862 = vmatprep.subr.mxu0 0.0
    %2863 = vmatpush1.msra.mxu0 0.0
    %2864 = vmatprep.subr.mxu0 0.0
    %2865 = vmatpush1.msra.mxu0 0.0
    %2866 = vmatprep.subr.mxu0 0.0
    %2867 = vmatpush1.msra.mxu0 0.0
    %2868 = vmatprep.subr.mxu0 0.0
    %2869 = vmatpush1.msra.mxu0 0.0
    %2870 = vmatprep.subr.mxu0 0.0
    %2871 = vmatpush1.msra.mxu0 0.0
    %2872 = vmatprep.subr.mxu0 0.0
    %2873 = vmatpush1.msra.mxu0 0.0
    %2874 = vmatprep.subr.mxu0 0.0
    %2875 = vmatpush1.msra.mxu0 0.0
    %2876 = vmatprep.subr.mxu0 0.0
    %2877 = vmatpush1.msra.mxu0 %v2108
    %2878 = vmatprep.subr.mxu0 0.0
    %2879 = vmatpush1.msra.mxu0 %v2107
    %2880 = vmatprep.subr.mxu0 0.0
    %2881 = vmatpush1.msra.mxu0 %v2106
    %2882 = vmatprep.subr.mxu0 0.0
    %2883 = vmatpush1.msra.mxu0 %v2105
    %2884 = vmatprep.subr.mxu0 0.0
    %2885 = vmatpush2.msra.mxu0 0.0
    %2886 = vmatprep.subr.mxu0 0.0
    %2887 = vmatpush2.msra.mxu0 0.0
    %2888 = vmatprep.subr.mxu0 0.0
    %2889 = vmatpush2.msra.mxu0 0.0
    %2890 = vmatprep.subr.mxu0 0.0
    %2891 = vmatpush2.msra.mxu0 0.0
    %2892 = vmatprep.subr.mxu0 0.0
    %2893 = vmatpush2.msra.mxu0 0.0
    %2894 = vmatprep.subr.mxu0 0.0
    %2895 = vmatpush2.msra.mxu0 0.0
    %2896 = vmatprep.subr.mxu0 0.0
    %2897 = vmatpush2.msra.mxu0 0.0
    %2898 = vmatprep.subr.mxu0 0.0
    %2899 = vmatpush2.msra.mxu0 0.0
    %2900 = vmatprep.subr.mxu0 0.0
    %2901 = vmatpush2.msra.mxu0 0.0
    %2902 = vmatprep.subr.mxu0 0.0
    %2903 = vmatpush2.msra.mxu0 0.0
    %2904 = vmatprep.subr.mxu0 0.0
    %2905 = vmatpush2.msra.mxu0 0.0
    %2906 = vmatprep.subr.mxu0 0.0
    %2907 = vmatpush2.msra.mxu0 0.0
    %2908 = vmatprep.subr.mxu0 0.0
    %2909 = vmatpush2.msra.mxu0 0.0
    %2910 = vmatprep.subr.mxu0 0.0
    %2911 = vmatpush2.msra.mxu0 0.0
    %2912 = vmatprep.subr.mxu0 0.0
    %2913 = vmatpush2.msra.mxu0 0.0
    %2914 = vmatprep.subr.mxu0 0.0
    %2915 = vmatpush2.msra.mxu0 0.0
    %2916 = vmatprep.mubr.f32.mxu0 0.0
    %2917 = vmatmul.mubr.f32.gmra.mxu0 %v2850
    %v2918 = vpop.f32.mrf.mxu0
    %v2919 = vadd.f32 %v2109, %v2918
    %v2920 = vpop.f32.mrf.mxu0
    %2921 = vdwg.mxu0
    %v2923 = vrot.slane %v2845, 5
    %v2925 = vadd.f32 %v2096, %v2923
    %v2926 = vxor.u32 %v2925, 2147483648
    %v2927 = vmul.f32 %v2926, 1.442695
    %v2928 = vpow.pop %v2927
    %v2929 = vadd.f32 %v2928, 1.0
    %v2930 = vrcp.pop %v2929
    %v2931 = vmul.f32 1.0, %v2930
    %2932 = vrot.lane.b32.xlu0 %v2923, 64
    %v2933 = vpop.permute.xlu0 %2932
    %v2935 = vmul.f32 %v2931, %v2933
    %2937 = vrot.lane.b32.xlu0 %v2935, 64
    %v2938 = vpop.permute.xlu0 %2937
    %v2940 = vadd.f32 %v2096, %v2938
    %v2941 = vtanh.pop %v2940
    %v2942 = vsub.f32 1.0, %v2931
    %2944 = vrot.lane.b32.xlu0 %v2941, 96
    %v2945 = vpop.permute.xlu0 %2944
    %v2947 = vmul.f32 %v2942, %v2945
    %v2948 = vrot.slane %v2725, 7
    %v2950 = vmul.f32 %v2931, %v2948
    %v2951 = vadd.f32 %v2947, %v2950
    %v2953 = vrot.slane %v2919, 4
    %2954 = vrot.lane.b32.xlu0 %v2953, 96
    %v2955 = vpop.permute.xlu0 %2954
    %v2957 = vadd.f32 %v2096, %v2955
    %v2958 = vadd.f32 %v2098, %v2955
    %v2959 = vxor.u32 %v2957, 2147483648
    %v2960 = vmul.f32 %v2959, 1.442695
    %v2961 = vpow.pop %v2960
    %v2962 = vadd.f32 %v2961, 1.0
    %v2963 = vrcp.pop %v2962
    %v2964 = vmul.f32 1.0, %v2963
    %v2965 = vxor.u32 %v2958, 2147483648
    %v2966 = vmul.f32 %v2965, 1.442695
    %v2967 = vpow.pop %v2966
    %v2968 = vadd.f32 %v2967, 1.0
    %v2969 = vrcp.pop %v2968
    %v2970 = vmul.f32 1.0, %v2969
    %2971 = vrot.lane.b32.xlu0 %v2953, 32
    %v2972 = vpop.permute.xlu0 %2971
    %v2974 = vmul.f32 %v2964, %v2972
    %2976 = vrot.lane.b32.xlu0 %v2974, 64
    %v2977 = vpop.permute.xlu0 %2976
    %v2979 = vadd.f32 %v2098, %v2977
    %v2980 = vtanh.pop %v2979
    %v2981 = vsub.f32 1.0, %v2970
    %2983 = vrot.lane.b32.xlu0 %v2980, 96
    %v2984 = vpop.permute.xlu0 %2983
    %v2986 = vmul.f32 %v2981, %v2984
    %v2987 = vrot.slane %v2764, 1
    %v2989 = vmul.f32 %v2970, %v2987
    %v2990 = vadd.f32 %v2986, %v2989
    %2992 = vrot.lane.b32.xlu0 %v2951, 96
    %v2993 = vpop.permute.xlu0 %2992
    %vm2995 = vcmask 257027
    %2996 = vst.msk [vmem:[#allocation2] sm:$0x8] %vm2995, %v2993
    %vm2997 = vcmask 258052
    %2998 = vst.msk [vmem:[#allocation3] sm:$0x10] %vm2997, %v2990
    %v2999 = vrot.slane %v2951, 3
    %3000 = vrot.lane.b32.xlu0 %v2999, 96
    %v3001 = vpop.permute.xlu0 %3000
    %v3002 = vsel %vm778, %v3001, 0
    %3004 = vmatprep.subr.mxu0 0.0
    %3005 = vmatpush1.msra.mxu0 0.0
    %3006 = vmatprep.subr.mxu0 0.0
    %3007 = vmatpush1.msra.mxu0 0.0
    %3008 = vmatprep.subr.mxu0 0.0
    %3009 = vmatpush1.msra.mxu0 0.0
    %3010 = vmatprep.subr.mxu0 0.0
    %3011 = vmatpush1.msra.mxu0 0.0
    %3012 = vmatprep.subr.mxu0 0.0
    %3013 = vmatpush1.msra.mxu0 0.0
    %3014 = vmatprep.subr.mxu0 0.0
    %3015 = vmatpush1.msra.mxu0 0.0
    %3016 = vmatprep.subr.mxu0 0.0
    %3017 = vmatpush1.msra.mxu0 0.0
    %3018 = vmatprep.subr.mxu0 0.0
    %3019 = vmatpush1.msra.mxu0 0.0
    %3020 = vmatprep.subr.mxu0 0.0
    %3021 = vmatpush1.msra.mxu0 0.0
    %3022 = vmatprep.subr.mxu0 0.0
    %3023 = vmatpush1.msra.mxu0 0.0
    %3024 = vmatprep.subr.mxu0 0.0
    %3025 = vmatpush1.msra.mxu0 0.0
    %3026 = vmatprep.subr.mxu0 0.0
    %3027 = vmatpush1.msra.mxu0 0.0
    %3028 = vmatprep.subr.mxu0 0.0
    %3029 = vmatpush1.msra.mxu0 %v2103
    %3030 = vmatprep.subr.mxu0 0.0
    %3031 = vmatpush1.msra.mxu0 %v2102
    %3032 = vmatprep.subr.mxu0 0.0
    %3033 = vmatpush1.msra.mxu0 %v2101
    %3034 = vmatprep.subr.mxu0 0.0
    %3035 = vmatpush1.msra.mxu0 %v2100
    %3036 = vmatprep.subr.mxu0 0.0
    %3037 = vmatpush2.msra.mxu0 0.0
    %3038 = vmatprep.subr.mxu0 0.0
    %3039 = vmatpush2.msra.mxu0 0.0
    %3040 = vmatprep.subr.mxu0 0.0
    %3041 = vmatpush2.msra.mxu0 0.0
    %3042 = vmatprep.subr.mxu0 0.0
    %3043 = vmatpush2.msra.mxu0 0.0
    %3044 = vmatprep.subr.mxu0 0.0
    %3045 = vmatpush2.msra.mxu0 0.0
    %3046 = vmatprep.subr.mxu0 0.0
    %3047 = vmatpush2.msra.mxu0 0.0
    %3048 = vmatprep.subr.mxu0 0.0
    %3049 = vmatpush2.msra.mxu0 0.0
    %3050 = vmatprep.subr.mxu0 0.0
    %3051 = vmatpush2.msra.mxu0 0.0
    %3052 = vmatprep.subr.mxu0 0.0
    %3053 = vmatpush2.msra.mxu0 0.0
    %3054 = vmatprep.subr.mxu0 0.0
    %3055 = vmatpush2.msra.mxu0 0.0
    %3056 = vmatprep.subr.mxu0 0.0
    %3057 = vmatpush2.msra.mxu0 0.0
    %3058 = vmatprep.subr.mxu0 0.0
    %3059 = vmatpush2.msra.mxu0 0.0
    %3060 = vmatprep.subr.mxu0 0.0
    %3061 = vmatpush2.msra.mxu0 0.0
    %3062 = vmatprep.subr.mxu0 0.0
    %3063 = vmatpush2.msra.mxu0 0.0
    %3064 = vmatprep.subr.mxu0 0.0
    %3065 = vmatpush2.msra.mxu0 0.0
    %3066 = vmatprep.subr.mxu0 0.0
    %3067 = vmatpush2.msra.mxu0 0.0
    %3068 = vmatprep.mubr.f32.mxu0 0.0
    %3069 = vmatmul.mubr.f32.gmra.mxu0 %v3002
    %v3070 = vpop.f32.mrf.mxu0
    %v3071 = vadd.f32 %v2104, %v3070
    %v3072 = vpop.f32.mrf.mxu0
    %3073 = vdwg.mxu0
    %v3075 = vrot.slane %v2990, 4
    %v3076 = vsel %vm778, %v3075, 0
    %3078 = vmatprep.subr.mxu0 0.0
    %3079 = vmatpush1.msra.mxu0 0.0
    %3080 = vmatprep.subr.mxu0 0.0
    %3081 = vmatpush1.msra.mxu0 0.0
    %3082 = vmatprep.subr.mxu0 0.0
    %3083 = vmatpush1.msra.mxu0 0.0
    %3084 = vmatprep.subr.mxu0 0.0
    %3085 = vmatpush1.msra.mxu0 0.0
    %3086 = vmatprep.subr.mxu0 0.0
    %3087 = vmatpush1.msra.mxu0 0.0
    %3088 = vmatprep.subr.mxu0 0.0
    %3089 = vmatpush1.msra.mxu0 0.0
    %3090 = vmatprep.subr.mxu0 0.0
    %3091 = vmatpush1.msra.mxu0 0.0
    %3092 = vmatprep.subr.mxu0 0.0
    %3093 = vmatpush1.msra.mxu0 0.0
    %3094 = vmatprep.subr.mxu0 0.0
    %3095 = vmatpush1.msra.mxu0 0.0
    %3096 = vmatprep.subr.mxu0 0.0
    %3097 = vmatpush1.msra.mxu0 0.0
    %3098 = vmatprep.subr.mxu0 0.0
    %3099 = vmatpush1.msra.mxu0 0.0
    %3100 = vmatprep.subr.mxu0 0.0
    %3101 = vmatpush1.msra.mxu0 0.0
    %3102 = vmatprep.subr.mxu0 0.0
    %3103 = vmatpush1.msra.mxu0 %v2108
    %3104 = vmatprep.subr.mxu0 0.0
    %3105 = vmatpush1.msra.mxu0 %v2107
    %3106 = vmatprep.subr.mxu0 0.0
    %3107 = vmatpush1.msra.mxu0 %v2106
    %3108 = vmatprep.subr.mxu0 0.0
    %3109 = vmatpush1.msra.mxu0 %v2105
    %3110 = vmatprep.subr.mxu0 0.0
    %3111 = vmatpush2.msra.mxu0 0.0
    %3112 = vmatprep.subr.mxu0 0.0
    %3113 = vmatpush2.msra.mxu0 0.0
    %3114 = vmatprep.subr.mxu0 0.0
    %3115 = vmatpush2.msra.mxu0 0.0
    %3116 = vmatprep.subr.mxu0 0.0
    %3117 = vmatpush2.msra.mxu0 0.0
    %3118 = vmatprep.subr.mxu0 0.0
    %3119 = vmatpush2.msra.mxu0 0.0
    %3120 = vmatprep.subr.mxu0 0.0
    %3121 = vmatpush2.msra.mxu0 0.0
    %3122 = vmatprep.subr.mxu0 0.0
    %3123 = vmatpush2.msra.mxu0 0.0
    %3124 = vmatprep.subr.mxu0 0.0
    %3125 = vmatpush2.msra.mxu0 0.0
    %3126 = vmatprep.subr.mxu0 0.0
    %3127 = vmatpush2.msra.mxu0 0.0
    %3128 = vmatprep.subr.mxu0 0.0
    %3129 = vmatpush2.msra.mxu0 0.0
    %3130 = vmatprep.subr.mxu0 0.0
    %3131 = vmatpush2.msra.mxu0 0.0
    %3132 = vmatprep.subr.mxu0 0.0
    %3133 = vmatpush2.msra.mxu0 0.0
    %3134 = vmatprep.subr.mxu0 0.0
    %3135 = vmatpush2.msra.mxu0 0.0
    %3136 = vmatprep.subr.mxu0 0.0
    %3137 = vmatpush2.msra.mxu0 0.0
    %3138 = vmatprep.subr.mxu0 0.0
    %3139 = vmatpush2.msra.mxu0 0.0
    %3140 = vmatprep.subr.mxu0 0.0
    %3141 = vmatpush2.msra.mxu0 0.0
    %3142 = vmatprep.mubr.f32.mxu0 0.0
    %3143 = vmatmul.mubr.f32.gmra.mxu0 %v3076
    %v3144 = vpop.f32.mrf.mxu0
    %v3145 = vadd.f32 %v2109, %v3144
    %v3146 = vpop.f32.mrf.mxu0
    %3147 = vdwg.mxu0
    %v3149 = vrot.slane %v3071, 4
    %v3151 = vadd.f32 %v2096, %v3149
    %v3152 = vxor.u32 %v3151, 2147483648
    %v3153 = vmul.f32 %v3152, 1.442695
    %v3154 = vpow.pop %v3153
    %v3155 = vadd.f32 %v3154, 1.0
    %v3156 = vrcp.pop %v3155
    %v3157 = vmul.f32 1.0, %v3156
    %3158 = vrot.lane.b32.xlu0 %v3149, 64
    %v3159 = vpop.permute.xlu0 %3158
    %v3161 = vmul.f32 %v3157, %v3159
    %3163 = vrot.lane.b32.xlu0 %v3161, 64
    %v3164 = vpop.permute.xlu0 %3163
    %v3166 = vadd.f32 %v2096, %v3164
    %v3167 = vtanh.pop %v3166
    %v3168 = vsub.f32 1.0, %v3157
    %3170 = vrot.lane.b32.xlu0 %v3167, 96
    %v3171 = vpop.permute.xlu0 %3170
    %v3173 = vmul.f32 %v3168, %v3171
    %v3174 = vrot.slane %v2951, 7
    %v3176 = vmul.f32 %v3157, %v3174
    %v3177 = vadd.f32 %v3173, %v3176
    %v3179 = vrot.slane %v3145, 5
    %3180 = vrot.lane.b32.xlu0 %v3179, 96
    %v3181 = vpop.permute.xlu0 %3180
    %v3183 = vadd.f32 %v2096, %v3181
    %v3184 = vadd.f32 %v2098, %v3181
    %v3185 = vxor.u32 %v3183, 2147483648
    %v3186 = vmul.f32 %v3185, 1.442695
    %v3187 = vpow.pop %v3186
    %v3188 = vadd.f32 %v3187, 1.0
    %v3189 = vrcp.pop %v3188
    %v3190 = vmul.f32 1.0, %v3189
    %v3191 = vxor.u32 %v3184, 2147483648
    %v3192 = vmul.f32 %v3191, 1.442695
    %v3193 = vpow.pop %v3192
    %v3194 = vadd.f32 %v3193, 1.0
    %v3195 = vrcp.pop %v3194
    %v3196 = vmul.f32 1.0, %v3195
    %3197 = vrot.lane.b32.xlu0 %v3179, 32
    %v3198 = vpop.permute.xlu0 %3197
    %v3200 = vmul.f32 %v3190, %v3198
    %3202 = vrot.lane.b32.xlu0 %v3200, 64
    %v3203 = vpop.permute.xlu0 %3202
    %v3205 = vadd.f32 %v2098, %v3203
    %v3206 = vtanh.pop %v3205
    %v3207 = vsub.f32 1.0, %v3196
    %3209 = vrot.lane.b32.xlu0 %v3206, 96
    %v3210 = vpop.permute.xlu0 %3209
    %v3212 = vmul.f32 %v3207, %v3210
    %v3213 = vrot.slane %v2990, 1
    %v3215 = vmul.f32 %v3196, %v3213
    %v3216 = vadd.f32 %v3212, %v3215
    %3218 = vrot.lane.b32.xlu0 %v3177, 96
    %v3219 = vpop.permute.xlu0 %3218
    %3221 = vst.msk [vmem:[#allocation2] sm:$0x10] %vm2997, %v3219
    %3222 = vst.msk [vmem:[#allocation3] sm:$0x8] %vm2995, %v3216
    %v3223 = vrot.slane %v3177, 4
    %3224 = vrot.lane.b32.xlu0 %v3223, 96
    %v3225 = vpop.permute.xlu0 %3224
    %v3226 = vsel %vm778, %v3225, 0
    %3228 = vmatprep.subr.mxu0 0.0
    %3229 = vmatpush1.msra.mxu0 0.0
    %3230 = vmatprep.subr.mxu0 0.0
    %3231 = vmatpush1.msra.mxu0 0.0
    %3232 = vmatprep.subr.mxu0 0.0
    %3233 = vmatpush1.msra.mxu0 0.0
    %3234 = vmatprep.subr.mxu0 0.0
    %3235 = vmatpush1.msra.mxu0 0.0
    %3236 = vmatprep.subr.mxu0 0.0
    %3237 = vmatpush1.msra.mxu0 0.0
    %3238 = vmatprep.subr.mxu0 0.0
    %3239 = vmatpush1.msra.mxu0 0.0
    %3240 = vmatprep.subr.mxu0 0.0
    %3241 = vmatpush1.msra.mxu0 0.0
    %3242 = vmatprep.subr.mxu0 0.0
    %3243 = vmatpush1.msra.mxu0 0.0
    %3244 = vmatprep.subr.mxu0 0.0
    %3245 = vmatpush1.msra.mxu0 0.0
    %3246 = vmatprep.subr.mxu0 0.0
    %3247 = vmatpush1.msra.mxu0 0.0
    %3248 = vmatprep.subr.mxu0 0.0
    %3249 = vmatpush1.msra.mxu0 0.0
    %3250 = vmatprep.subr.mxu0 0.0
    %3251 = vmatpush1.msra.mxu0 0.0
    %3252 = vmatprep.subr.mxu0 0.0
    %3253 = vmatpush1.msra.mxu0 %v2103
    %3254 = vmatprep.subr.mxu0 0.0
    %3255 = vmatpush1.msra.mxu0 %v2102
    %3256 = vmatprep.subr.mxu0 0.0
    %3257 = vmatpush1.msra.mxu0 %v2101
    %3258 = vmatprep.subr.mxu0 0.0
    %3259 = vmatpush1.msra.mxu0 %v2100
    %3260 = vmatprep.subr.mxu0 0.0
    %3261 = vmatpush2.msra.mxu0 0.0
    %3262 = vmatprep.subr.mxu0 0.0
    %3263 = vmatpush2.msra.mxu0 0.0
    %3264 = vmatprep.subr.mxu0 0.0
    %3265 = vmatpush2.msra.mxu0 0.0
    %3266 = vmatprep.subr.mxu0 0.0
    %3267 = vmatpush2.msra.mxu0 0.0
    %3268 = vmatprep.subr.mxu0 0.0
    %3269 = vmatpush2.msra.mxu0 0.0
    %3270 = vmatprep.subr.mxu0 0.0
    %3271 = vmatpush2.msra.mxu0 0.0
    %3272 = vmatprep.subr.mxu0 0.0
    %3273 = vmatpush2.msra.mxu0 0.0
    %3274 = vmatprep.subr.mxu0 0.0
    %3275 = vmatpush2.msra.mxu0 0.0
    %3276 = vmatprep.subr.mxu0 0.0
    %3277 = vmatpush2.msra.mxu0 0.0
    %3278 = vmatprep.subr.mxu0 0.0
    %3279 = vmatpush2.msra.mxu0 0.0
    %3280 = vmatprep.subr.mxu0 0.0
    %3281 = vmatpush2.msra.mxu0 0.0
    %3282 = vmatprep.subr.mxu0 0.0
    %3283 = vmatpush2.msra.mxu0 0.0
    %3284 = vmatprep.subr.mxu0 0.0
    %3285 = vmatpush2.msra.mxu0 0.0
    %3286 = vmatprep.subr.mxu0 0.0
    %3287 = vmatpush2.msra.mxu0 0.0
    %3288 = vmatprep.subr.mxu0 0.0
    %3289 = vmatpush2.msra.mxu0 0.0
    %3290 = vmatprep.subr.mxu0 0.0
    %3291 = vmatpush2.msra.mxu0 0.0
    %3292 = vmatprep.mubr.f32.mxu0 0.0
    %3293 = vmatmul.mubr.f32.gmra.mxu0 %v3226
    %v3294 = vpop.f32.mrf.mxu0
    %v3295 = vadd.f32 %v2104, %v3294
    %v3296 = vpop.f32.mrf.mxu0
    %3297 = vdwg.mxu0
    %v3299 = vrot.slane %v3216, 3
    %v3300 = vsel %vm778, %v3299, 0
    %3302 = vmatprep.subr.mxu0 0.0
    %3303 = vmatpush1.msra.mxu0 0.0
    %3304 = vmatprep.subr.mxu0 0.0
    %3305 = vmatpush1.msra.mxu0 0.0
    %3306 = vmatprep.subr.mxu0 0.0
    %3307 = vmatpush1.msra.mxu0 0.0
    %3308 = vmatprep.subr.mxu0 0.0
    %3309 = vmatpush1.msra.mxu0 0.0
    %3310 = vmatprep.subr.mxu0 0.0
    %3311 = vmatpush1.msra.mxu0 0.0
    %3312 = vmatprep.subr.mxu0 0.0
    %3313 = vmatpush1.msra.mxu0 0.0
    %3314 = vmatprep.subr.mxu0 0.0
    %3315 = vmatpush1.msra.mxu0 0.0
    %3316 = vmatprep.subr.mxu0 0.0
    %3317 = vmatpush1.msra.mxu0 0.0
    %3318 = vmatprep.subr.mxu0 0.0
    %3319 = vmatpush1.msra.mxu0 0.0
    %3320 = vmatprep.subr.mxu0 0.0
    %3321 = vmatpush1.msra.mxu0 0.0
    %3322 = vmatprep.subr.mxu0 0.0
    %3323 = vmatpush1.msra.mxu0 0.0
    %3324 = vmatprep.subr.mxu0 0.0
    %3325 = vmatpush1.msra.mxu0 0.0
    %3326 = vmatprep.subr.mxu0 0.0
    %3327 = vmatpush1.msra.mxu0 %v2108
    %3328 = vmatprep.subr.mxu0 0.0
    %3329 = vmatpush1.msra.mxu0 %v2107
    %3330 = vmatprep.subr.mxu0 0.0
    %3331 = vmatpush1.msra.mxu0 %v2106
    %3332 = vmatprep.subr.mxu0 0.0
    %3333 = vmatpush1.msra.mxu0 %v2105
    %3334 = vmatprep.subr.mxu0 0.0
    %3335 = vmatpush2.msra.mxu0 0.0
    %3336 = vmatprep.subr.mxu0 0.0
    %3337 = vmatpush2.msra.mxu0 0.0
    %3338 = vmatprep.subr.mxu0 0.0
    %3339 = vmatpush2.msra.mxu0 0.0
    %3340 = vmatprep.subr.mxu0 0.0
    %3341 = vmatpush2.msra.mxu0 0.0
    %3342 = vmatprep.subr.mxu0 0.0
    %3343 = vmatpush2.msra.mxu0 0.0
    %3344 = vmatprep.subr.mxu0 0.0
    %3345 = vmatpush2.msra.mxu0 0.0
    %3346 = vmatprep.subr.mxu0 0.0
    %3347 = vmatpush2.msra.mxu0 0.0
    %3348 = vmatprep.subr.mxu0 0.0
    %3349 = vmatpush2.msra.mxu0 0.0
    %3350 = vmatprep.subr.mxu0 0.0
    %3351 = vmatpush2.msra.mxu0 0.0
    %3352 = vmatprep.subr.mxu0 0.0
    %3353 = vmatpush2.msra.mxu0 0.0
    %3354 = vmatprep.subr.mxu0 0.0
    %3355 = vmatpush2.msra.mxu0 0.0
    %3356 = vmatprep.subr.mxu0 0.0
    %3357 = vmatpush2.msra.mxu0 0.0
    %3358 = vmatprep.subr.mxu0 0.0
    %3359 = vmatpush2.msra.mxu0 0.0
    %3360 = vmatprep.subr.mxu0 0.0
    %3361 = vmatpush2.msra.mxu0 0.0
    %3362 = vmatprep.subr.mxu0 0.0
    %3363 = vmatpush2.msra.mxu0 0.0
    %3364 = vmatprep.subr.mxu0 0.0
    %3365 = vmatpush2.msra.mxu0 0.0
    %3366 = vmatprep.mubr.f32.mxu0 0.0
    %3367 = vmatmul.mubr.f32.gmra.mxu0 %v3300
    %v3368 = vpop.f32.mrf.mxu0
    %v3369 = vadd.f32 %v2109, %v3368
    %v3370 = vpop.f32.mrf.mxu0
    %3371 = vdwg.mxu0
    %v3373 = vrot.slane %v3295, 3
    %v3375 = vadd.f32 %v2096, %v3373
    %v3376 = vxor.u32 %v3375, 2147483648
    %v3377 = vmul.f32 %v3376, 1.442695
    %v3378 = vpow.pop %v3377
    %v3379 = vadd.f32 %v3378, 1.0
    %v3380 = vrcp.pop %v3379
    %v3381 = vmul.f32 1.0, %v3380
    %3382 = vrot.lane.b32.xlu0 %v3373, 64
    %v3383 = vpop.permute.xlu0 %3382
    %v3385 = vmul.f32 %v3381, %v3383
    %3387 = vrot.lane.b32.xlu0 %v3385, 64
    %v3388 = vpop.permute.xlu0 %3387
    %v3390 = vadd.f32 %v2096, %v3388
    %v3391 = vtanh.pop %v3390
    %v3392 = vsub.f32 1.0, %v3381
    %3394 = vrot.lane.b32.xlu0 %v3391, 96
    %v3395 = vpop.permute.xlu0 %3394
    %v3397 = vmul.f32 %v3392, %v3395
    %v3398 = vrot.slane %v3177, 7
    %v3400 = vmul.f32 %v3381, %v3398
    %v3401 = vadd.f32 %v3397, %v3400
    %v3403 = vrot.slane %v3369, 6
    %3404 = vrot.lane.b32.xlu0 %v3403, 96
    %v3405 = vpop.permute.xlu0 %3404
    %v3407 = vadd.f32 %v2096, %v3405
    %v3408 = vadd.f32 %v2098, %v3405
    %v3409 = vxor.u32 %v3407, 2147483648
    %v3410 = vmul.f32 %v3409, 1.442695
    %v3411 = vpow.pop %v3410
    %v3412 = vadd.f32 %v3411, 1.0
    %v3413 = vrcp.pop %v3412
    %v3414 = vmul.f32 1.0, %v3413
    %v3415 = vxor.u32 %v3408, 2147483648
    %v3416 = vmul.f32 %v3415, 1.442695
    %v3417 = vpow.pop %v3416
    %v3418 = vadd.f32 %v3417, 1.0
    %v3419 = vrcp.pop %v3418
    %v3420 = vmul.f32 1.0, %v3419
    %3421 = vrot.lane.b32.xlu0 %v3403, 32
    %v3422 = vpop.permute.xlu0 %3421
    %v3424 = vmul.f32 %v3414, %v3422
    %3426 = vrot.lane.b32.xlu0 %v3424, 64
    %v3427 = vpop.permute.xlu0 %3426
    %v3429 = vadd.f32 %v2098, %v3427
    %v3430 = vtanh.pop %v3429
    %v3431 = vsub.f32 1.0, %v3420
    %3433 = vrot.lane.b32.xlu0 %v3430, 96
    %v3434 = vpop.permute.xlu0 %3433
    %v3436 = vmul.f32 %v3431, %v3434
    %v3437 = vrot.slane %v3216, 1
    %v3439 = vmul.f32 %v3420, %v3437
    %v3440 = vadd.f32 %v3436, %v3439
    %3442 = vrot.lane.b32.xlu0 %v3401, 96
    %v3443 = vpop.permute.xlu0 %3442
    %3445 = vst.msk [vmem:[#allocation2] sm:$0x20] %vm2771, %v3443
    %3446 = vst.msk [vmem:[#allocation3] sm:$0x4] %vm2769, %v3440
    %v3447 = vrot.slane %v3401, 5
    %3448 = vrot.lane.b32.xlu0 %v3447, 96
    %v3449 = vpop.permute.xlu0 %3448
    %v3450 = vsel %vm778, %v3449, 0
    %3452 = vmatprep.subr.mxu0 0.0
    %3453 = vmatpush1.msra.mxu0 0.0
    %3454 = vmatprep.subr.mxu0 0.0
    %3455 = vmatpush1.msra.mxu0 0.0
    %3456 = vmatprep.subr.mxu0 0.0
    %3457 = vmatpush1.msra.mxu0 0.0
    %3458 = vmatprep.subr.mxu0 0.0
    %3459 = vmatpush1.msra.mxu0 0.0
    %3460 = vmatprep.subr.mxu0 0.0
    %3461 = vmatpush1.msra.mxu0 0.0
    %3462 = vmatprep.subr.mxu0 0.0
    %3463 = vmatpush1.msra.mxu0 0.0
    %3464 = vmatprep.subr.mxu0 0.0
    %3465 = vmatpush1.msra.mxu0 0.0
    %3466 = vmatprep.subr.mxu0 0.0
    %3467 = vmatpush1.msra.mxu0 0.0
    %3468 = vmatprep.subr.mxu0 0.0
    %3469 = vmatpush1.msra.mxu0 0.0
    %3470 = vmatprep.subr.mxu0 0.0
    %3471 = vmatpush1.msra.mxu0 0.0
    %3472 = vmatprep.subr.mxu0 0.0
    %3473 = vmatpush1.msra.mxu0 0.0
    %3474 = vmatprep.subr.mxu0 0.0
    %3475 = vmatpush1.msra.mxu0 0.0
    %3476 = vmatprep.subr.mxu0 0.0
    %3477 = vmatpush1.msra.mxu0 %v2103
    %3478 = vmatprep.subr.mxu0 0.0
    %3479 = vmatpush1.msra.mxu0 %v2102
    %3480 = vmatprep.subr.mxu0 0.0
    %3481 = vmatpush1.msra.mxu0 %v2101
    %3482 = vmatprep.subr.mxu0 0.0
    %3483 = vmatpush1.msra.mxu0 %v2100
    %3484 = vmatprep.subr.mxu0 0.0
    %3485 = vmatpush2.msra.mxu0 0.0
    %3486 = vmatprep.subr.mxu0 0.0
    %3487 = vmatpush2.msra.mxu0 0.0
    %3488 = vmatprep.subr.mxu0 0.0
    %3489 = vmatpush2.msra.mxu0 0.0
    %3490 = vmatprep.subr.mxu0 0.0
    %3491 = vmatpush2.msra.mxu0 0.0
    %3492 = vmatprep.subr.mxu0 0.0
    %3493 = vmatpush2.msra.mxu0 0.0
    %3494 = vmatprep.subr.mxu0 0.0
    %3495 = vmatpush2.msra.mxu0 0.0
    %3496 = vmatprep.subr.mxu0 0.0
    %3497 = vmatpush2.msra.mxu0 0.0
    %3498 = vmatprep.subr.mxu0 0.0
    %3499 = vmatpush2.msra.mxu0 0.0
    %3500 = vmatprep.subr.mxu0 0.0
    %3501 = vmatpush2.msra.mxu0 0.0
    %3502 = vmatprep.subr.mxu0 0.0
    %3503 = vmatpush2.msra.mxu0 0.0
    %3504 = vmatprep.subr.mxu0 0.0
    %3505 = vmatpush2.msra.mxu0 0.0
    %3506 = vmatprep.subr.mxu0 0.0
    %3507 = vmatpush2.msra.mxu0 0.0
    %3508 = vmatprep.subr.mxu0 0.0
    %3509 = vmatpush2.msra.mxu0 0.0
    %3510 = vmatprep.subr.mxu0 0.0
    %3511 = vmatpush2.msra.mxu0 0.0
    %3512 = vmatprep.subr.mxu0 0.0
    %3513 = vmatpush2.msra.mxu0 0.0
    %3514 = vmatprep.subr.mxu0 0.0
    %3515 = vmatpush2.msra.mxu0 0.0
    %3516 = vmatprep.mubr.f32.mxu0 0.0
    %3517 = vmatmul.mubr.f32.gmra.mxu0 %v3450
    %v3518 = vpop.f32.mrf.mxu0
    %v3519 = vadd.f32 %v2104, %v3518
    %v3520 = vpop.f32.mrf.mxu0
    %3521 = vdwg.mxu0
    %v3523 = vrot.slane %v3440, 2
    %v3524 = vsel %vm778, %v3523, 0
    %3526 = vmatprep.subr.mxu0 0.0
    %3527 = vmatpush1.msra.mxu0 0.0
    %3528 = vmatprep.subr.mxu0 0.0
    %3529 = vmatpush1.msra.mxu0 0.0
    %3530 = vmatprep.subr.mxu0 0.0
    %3531 = vmatpush1.msra.mxu0 0.0
    %3532 = vmatprep.subr.mxu0 0.0
    %3533 = vmatpush1.msra.mxu0 0.0
    %3534 = vmatprep.subr.mxu0 0.0
    %3535 = vmatpush1.msra.mxu0 0.0
    %3536 = vmatprep.subr.mxu0 0.0
    %3537 = vmatpush1.msra.mxu0 0.0
    %3538 = vmatprep.subr.mxu0 0.0
    %3539 = vmatpush1.msra.mxu0 0.0
    %3540 = vmatprep.subr.mxu0 0.0
    %3541 = vmatpush1.msra.mxu0 0.0
    %3542 = vmatprep.subr.mxu0 0.0
    %3543 = vmatpush1.msra.mxu0 0.0
    %3544 = vmatprep.subr.mxu0 0.0
    %3545 = vmatpush1.msra.mxu0 0.0
    %3546 = vmatprep.subr.mxu0 0.0
    %3547 = vmatpush1.msra.mxu0 0.0
    %3548 = vmatprep.subr.mxu0 0.0
    %3549 = vmatpush1.msra.mxu0 0.0
    %3550 = vmatprep.subr.mxu0 0.0
    %3551 = vmatpush1.msra.mxu0 %v2108
    %3552 = vmatprep.subr.mxu0 0.0
    %3553 = vmatpush1.msra.mxu0 %v2107
    %3554 = vmatprep.subr.mxu0 0.0
    %3555 = vmatpush1.msra.mxu0 %v2106
    %3556 = vmatprep.subr.mxu0 0.0
    %3557 = vmatpush1.msra.mxu0 %v2105
    %3558 = vmatprep.subr.mxu0 0.0
    %3559 = vmatpush2.msra.mxu0 0.0
    %3560 = vmatprep.subr.mxu0 0.0
    %3561 = vmatpush2.msra.mxu0 0.0
    %3562 = vmatprep.subr.mxu0 0.0
    %3563 = vmatpush2.msra.mxu0 0.0
    %3564 = vmatprep.subr.mxu0 0.0
    %3565 = vmatpush2.msra.mxu0 0.0
    %3566 = vmatprep.subr.mxu0 0.0
    %3567 = vmatpush2.msra.mxu0 0.0
    %3568 = vmatprep.subr.mxu0 0.0
    %3569 = vmatpush2.msra.mxu0 0.0
    %3570 = vmatprep.subr.mxu0 0.0
    %3571 = vmatpush2.msra.mxu0 0.0
    %3572 = vmatprep.subr.mxu0 0.0
    %3573 = vmatpush2.msra.mxu0 0.0
    %3574 = vmatprep.subr.mxu0 0.0
    %3575 = vmatpush2.msra.mxu0 0.0
    %3576 = vmatprep.subr.mxu0 0.0
    %3577 = vmatpush2.msra.mxu0 0.0
    %3578 = vmatprep.subr.mxu0 0.0
    %3579 = vmatpush2.msra.mxu0 0.0
    %3580 = vmatprep.subr.mxu0 0.0
    %3581 = vmatpush2.msra.mxu0 0.0
    %3582 = vmatprep.subr.mxu0 0.0
    %3583 = vmatpush2.msra.mxu0 0.0
    %3584 = vmatprep.subr.mxu0 0.0
    %3585 = vmatpush2.msra.mxu0 0.0
    %3586 = vmatprep.subr.mxu0 0.0
    %3587 = vmatpush2.msra.mxu0 0.0
    %3588 = vmatprep.subr.mxu0 0.0
    %3589 = vmatpush2.msra.mxu0 0.0
    %3590 = vmatprep.mubr.f32.mxu0 0.0
    %3591 = vmatmul.mubr.f32.gmra.mxu0 %v3524
    %v3592 = vpop.f32.mrf.mxu0
    %v3593 = vadd.f32 %v2109, %v3592
    %v3594 = vpop.f32.mrf.mxu0
    %3595 = vdwg.mxu0
    %v3597 = vrot.slane %v3519, 2
    %v3599 = vadd.f32 %v2096, %v3597
    %v3600 = vxor.u32 %v3599, 2147483648
    %v3601 = vmul.f32 %v3600, 1.442695
    %v3602 = vpow.pop %v3601
    %v3603 = vadd.f32 %v3602, 1.0
    %v3604 = vrcp.pop %v3603
    %v3605 = vmul.f32 1.0, %v3604
    %3606 = vrot.lane.b32.xlu0 %v3597, 64
    %v3607 = vpop.permute.xlu0 %3606
    %v3609 = vmul.f32 %v3605, %v3607
    %3611 = vrot.lane.b32.xlu0 %v3609, 64
    %v3612 = vpop.permute.xlu0 %3611
    %v3614 = vadd.f32 %v2096, %v3612
    %v3615 = vtanh.pop %v3614
    %v3616 = vsub.f32 1.0, %v3605
    %3618 = vrot.lane.b32.xlu0 %v3615, 96
    %v3619 = vpop.permute.xlu0 %3618
    %v3621 = vmul.f32 %v3616, %v3619
    %v3622 = vrot.slane %v3401, 7
    %v3624 = vmul.f32 %v3605, %v3622
    %v3625 = vadd.f32 %v3621, %v3624
    %v3627 = vrot.slane %v3593, 7
    %3628 = vrot.lane.b32.xlu0 %v3627, 96
    %v3629 = vpop.permute.xlu0 %3628
    %v3631 = vadd.f32 %v2096, %v3629
    %v3632 = vadd.f32 %v2098, %v3629
    %v3633 = vxor.u32 %v3631, 2147483648
    %v3634 = vmul.f32 %v3633, 1.442695
    %v3635 = vpow.pop %v3634
    %v3636 = vadd.f32 %v3635, 1.0
    %v3637 = vrcp.pop %v3636
    %v3638 = vmul.f32 1.0, %v3637
    %v3639 = vxor.u32 %v3632, 2147483648
    %v3640 = vmul.f32 %v3639, 1.442695
    %v3641 = vpow.pop %v3640
    %v3642 = vadd.f32 %v3641, 1.0
    %v3643 = vrcp.pop %v3642
    %v3644 = vmul.f32 1.0, %v3643
    %3645 = vrot.lane.b32.xlu0 %v3627, 32
    %v3646 = vpop.permute.xlu0 %3645
    %v3648 = vmul.f32 %v3638, %v3646
    %3650 = vrot.lane.b32.xlu0 %v3648, 64
    %v3651 = vpop.permute.xlu0 %3650
    %v3653 = vadd.f32 %v2098, %v3651
    %v3654 = vtanh.pop %v3653
    %v3655 = vsub.f32 1.0, %v3644
    %3657 = vrot.lane.b32.xlu0 %v3654, 96
    %v3658 = vpop.permute.xlu0 %3657
    %v3660 = vmul.f32 %v3655, %v3658
    %v3661 = vrot.slane %v3440, 1
    %v3663 = vmul.f32 %v3644, %v3661
    %v3664 = vadd.f32 %v3660, %v3663
    %3666 = vrot.lane.b32.xlu0 %v3625, 96
    %v3667 = vpop.permute.xlu0 %3666
    %3669 = vst.msk [vmem:[#allocation2] sm:$0x40] %vm2545, %v3667
    %3670 = vst.msk [vmem:[#allocation3] sm:$0x2] %vm2543, %v3664
    %v3671 = vrot.slane %v3625, 6
    %3672 = vrot.lane.b32.xlu0 %v3671, 96
    %v3673 = vpop.permute.xlu0 %3672
    %v3674 = vsel %vm778, %v3673, 0
    %3676 = vmatprep.subr.mxu0 0.0
    %3677 = vmatpush1.msra.mxu0 0.0
    %3678 = vmatprep.subr.mxu0 0.0
    %3679 = vmatpush1.msra.mxu0 0.0
    %3680 = vmatprep.subr.mxu0 0.0
    %3681 = vmatpush1.msra.mxu0 0.0
    %3682 = vmatprep.subr.mxu0 0.0
    %3683 = vmatpush1.msra.mxu0 0.0
    %3684 = vmatprep.subr.mxu0 0.0
    %3685 = vmatpush1.msra.mxu0 0.0
    %3686 = vmatprep.subr.mxu0 0.0
    %3687 = vmatpush1.msra.mxu0 0.0
    %3688 = vmatprep.subr.mxu0 0.0
    %3689 = vmatpush1.msra.mxu0 0.0
    %3690 = vmatprep.subr.mxu0 0.0
    %3691 = vmatpush1.msra.mxu0 0.0
    %3692 = vmatprep.subr.mxu0 0.0
    %3693 = vmatpush1.msra.mxu0 0.0
    %3694 = vmatprep.subr.mxu0 0.0
    %3695 = vmatpush1.msra.mxu0 0.0
    %3696 = vmatprep.subr.mxu0 0.0
    %3697 = vmatpush1.msra.mxu0 0.0
    %3698 = vmatprep.subr.mxu0 0.0
    %3699 = vmatpush1.msra.mxu0 0.0
    %3700 = vmatprep.subr.mxu0 0.0
    %3701 = vmatpush1.msra.mxu0 %v2103
    %3702 = vmatprep.subr.mxu0 0.0
    %3703 = vmatpush1.msra.mxu0 %v2102
    %3704 = vmatprep.subr.mxu0 0.0
    %3705 = vmatpush1.msra.mxu0 %v2101
    %3706 = vmatprep.subr.mxu0 0.0
    %3707 = vmatpush1.msra.mxu0 %v2100
    %3708 = vmatprep.subr.mxu0 0.0
    %3709 = vmatpush2.msra.mxu0 0.0
    %3710 = vmatprep.subr.mxu0 0.0
    %3711 = vmatpush2.msra.mxu0 0.0
    %3712 = vmatprep.subr.mxu0 0.0
    %3713 = vmatpush2.msra.mxu0 0.0
    %3714 = vmatprep.subr.mxu0 0.0
    %3715 = vmatpush2.msra.mxu0 0.0
    %3716 = vmatprep.subr.mxu0 0.0
    %3717 = vmatpush2.msra.mxu0 0.0
    %3718 = vmatprep.subr.mxu0 0.0
    %3719 = vmatpush2.msra.mxu0 0.0
    %3720 = vmatprep.subr.mxu0 0.0
    %3721 = vmatpush2.msra.mxu0 0.0
    %3722 = vmatprep.subr.mxu0 0.0
    %3723 = vmatpush2.msra.mxu0 0.0
    %3724 = vmatprep.subr.mxu0 0.0
    %3725 = vmatpush2.msra.mxu0 0.0
    %3726 = vmatprep.subr.mxu0 0.0
    %3727 = vmatpush2.msra.mxu0 0.0
    %3728 = vmatprep.subr.mxu0 0.0
    %3729 = vmatpush2.msra.mxu0 0.0
    %3730 = vmatprep.subr.mxu0 0.0
    %3731 = vmatpush2.msra.mxu0 0.0
    %3732 = vmatprep.subr.mxu0 0.0
    %3733 = vmatpush2.msra.mxu0 0.0
    %3734 = vmatprep.subr.mxu0 0.0
    %3735 = vmatpush2.msra.mxu0 0.0
    %3736 = vmatprep.subr.mxu0 0.0
    %3737 = vmatpush2.msra.mxu0 0.0
    %3738 = vmatprep.subr.mxu0 0.0
    %3739 = vmatpush2.msra.mxu0 0.0
    %3740 = vmatprep.mubr.f32.mxu0 0.0
    %3741 = vmatmul.mubr.f32.gmra.mxu0 %v3674
    %v3742 = vpop.f32.mrf.mxu0
    %v3743 = vadd.f32 %v2104, %v3742
    %v3744 = vpop.f32.mrf.mxu0
    %3745 = vdwg.mxu0
    %v3747 = vrot.slane %v3664, 1
    %v3748 = vsel %vm778, %v3747, 0
    %3750 = vmatprep.subr.mxu0 0.0
    %3751 = vmatpush1.msra.mxu0 0.0
    %3752 = vmatprep.subr.mxu0 0.0
    %3753 = vmatpush1.msra.mxu0 0.0
    %3754 = vmatprep.subr.mxu0 0.0
    %3755 = vmatpush1.msra.mxu0 0.0
    %3756 = vmatprep.subr.mxu0 0.0
    %3757 = vmatpush1.msra.mxu0 0.0
    %3758 = vmatprep.subr.mxu0 0.0
    %3759 = vmatpush1.msra.mxu0 0.0
    %3760 = vmatprep.subr.mxu0 0.0
    %3761 = vmatpush1.msra.mxu0 0.0
    %3762 = vmatprep.subr.mxu0 0.0
    %3763 = vmatpush1.msra.mxu0 0.0
    %3764 = vmatprep.subr.mxu0 0.0
    %3765 = vmatpush1.msra.mxu0 0.0
    %3766 = vmatprep.subr.mxu0 0.0
    %3767 = vmatpush1.msra.mxu0 0.0
    %3768 = vmatprep.subr.mxu0 0.0
    %3769 = vmatpush1.msra.mxu0 0.0
    %3770 = vmatprep.subr.mxu0 0.0
    %3771 = vmatpush1.msra.mxu0 0.0
    %3772 = vmatprep.subr.mxu0 0.0
    %3773 = vmatpush1.msra.mxu0 0.0
    %3774 = vmatprep.subr.mxu0 0.0
    %3775 = vmatpush1.msra.mxu0 %v2108
    %3776 = vmatprep.subr.mxu0 0.0
    %3777 = vmatpush1.msra.mxu0 %v2107
    %3778 = vmatprep.subr.mxu0 0.0
    %3779 = vmatpush1.msra.mxu0 %v2106
    %3780 = vmatprep.subr.mxu0 0.0
    %3781 = vmatpush1.msra.mxu0 %v2105
    %3782 = vmatprep.subr.mxu0 0.0
    %3783 = vmatpush2.msra.mxu0 0.0
    %3784 = vmatprep.subr.mxu0 0.0
    %3785 = vmatpush2.msra.mxu0 0.0
    %3786 = vmatprep.subr.mxu0 0.0
    %3787 = vmatpush2.msra.mxu0 0.0
    %3788 = vmatprep.subr.mxu0 0.0
    %3789 = vmatpush2.msra.mxu0 0.0
    %3790 = vmatprep.subr.mxu0 0.0
    %3791 = vmatpush2.msra.mxu0 0.0
    %3792 = vmatprep.subr.mxu0 0.0
    %3793 = vmatpush2.msra.mxu0 0.0
    %3794 = vmatprep.subr.mxu0 0.0
    %3795 = vmatpush2.msra.mxu0 0.0
    %3796 = vmatprep.subr.mxu0 0.0
    %3797 = vmatpush2.msra.mxu0 0.0
    %3798 = vmatprep.subr.mxu0 0.0
    %3799 = vmatpush2.msra.mxu0 0.0
    %3800 = vmatprep.subr.mxu0 0.0
    %3801 = vmatpush2.msra.mxu0 0.0
    %3802 = vmatprep.subr.mxu0 0.0
    %3803 = vmatpush2.msra.mxu0 0.0
    %3804 = vmatprep.subr.mxu0 0.0
    %3805 = vmatpush2.msra.mxu0 0.0
    %3806 = vmatprep.subr.mxu0 0.0
    %3807 = vmatpush2.msra.mxu0 0.0
    %3808 = vmatprep.subr.mxu0 0.0
    %3809 = vmatpush2.msra.mxu0 0.0
    %3810 = vmatprep.subr.mxu0 0.0
    %3811 = vmatpush2.msra.mxu0 0.0
    %3812 = vmatprep.subr.mxu0 0.0
    %3813 = vmatpush2.msra.mxu0 0.0
    %3814 = vmatprep.mubr.f32.mxu0 0.0
    %3815 = vmatmul.mubr.f32.gmra.mxu0 %v3748
    %v3816 = vpop.f32.mrf.mxu0
    %v3817 = vadd.f32 %v2109, %v3816
    %v3818 = vpop.f32.mrf.mxu0
    %3819 = vdwg.mxu0
    %v3821 = vrot.slane %v3743, 1
    %v3823 = vadd.f32 %v2096, %v3821
    %v3824 = vxor.u32 %v3823, 2147483648
    %v3825 = vmul.f32 %v3824, 1.442695
    %v3826 = vpow.pop %v3825
    %v3827 = vadd.f32 %v3826, 1.0
    %v3828 = vrcp.pop %v3827
    %v3829 = vmul.f32 1.0, %v3828
    %3830 = vrot.lane.b32.xlu0 %v3821, 64
    %v3831 = vpop.permute.xlu0 %3830
    %v3833 = vmul.f32 %v3829, %v3831
    %3835 = vrot.lane.b32.xlu0 %v3833, 64
    %v3836 = vpop.permute.xlu0 %3835
    %v3838 = vadd.f32 %v2096, %v3836
    %v3839 = vtanh.pop %v3838
    %v3840 = vsub.f32 1.0, %v3829
    %3842 = vrot.lane.b32.xlu0 %v3839, 96
    %v3843 = vpop.permute.xlu0 %3842
    %v3845 = vmul.f32 %v3840, %v3843
    %v3846 = vrot.slane %v3625, 7
    %v3848 = vmul.f32 %v3829, %v3846
    %v3849 = vadd.f32 %v3845, %v3848
    %3851 = vrot.lane.b32.xlu0 %v3817, 96
    %v3852 = vpop.permute.xlu0 %3851
    %v3854 = vadd.f32 %v2096, %v3852
    %v3855 = vadd.f32 %v2098, %v3852
    %v3856 = vxor.u32 %v3854, 2147483648
    %v3857 = vmul.f32 %v3856, 1.442695
    %v3858 = vpow.pop %v3857
    %v3859 = vadd.f32 %v3858, 1.0
    %v3860 = vrcp.pop %v3859
    %v3861 = vmul.f32 1.0, %v3860
    %v3862 = vxor.u32 %v3855, 2147483648
    %v3863 = vmul.f32 %v3862, 1.442695
    %v3864 = vpow.pop %v3863
    %v3865 = vadd.f32 %v3864, 1.0
    %v3866 = vrcp.pop %v3865
    %v3867 = vmul.f32 1.0, %v3866
    %3868 = vrot.lane.b32.xlu0 %v3817, 32
    %v3869 = vpop.permute.xlu0 %3868
    %v3871 = vmul.f32 %v3861, %v3869
    %3873 = vrot.lane.b32.xlu0 %v3871, 64
    %v3874 = vpop.permute.xlu0 %3873
    %v3876 = vadd.f32 %v2098, %v3874
    %v3877 = vtanh.pop %v3876
    %v3878 = vsub.f32 1.0, %v3867
    %3880 = vrot.lane.b32.xlu0 %v3877, 96
    %v3881 = vpop.permute.xlu0 %3880
    %v3883 = vmul.f32 %v3878, %v3881
    %v3885 = vmul.f32 %v3867, %v3747
    %v3886 = vadd.f32 %v3883, %v3885
    %3888 = vrot.lane.b32.xlu0 %v3849, 96
    %v3889 = vpop.permute.xlu0 %3888
    %3891 = vst.msk [vmem:[#allocation2] sm:$0x80] %vm2322, %v3889
    %3892 = vst.msk [vmem:[#allocation3] sm:$0x1] %vm2320, %v3886
    %v3893 = vld [vmem:[#allocation2] sm:$0xff]
    %v3894 = vld [vmem:[#allocation3] sm:$0xff]
    %v3895 = vld [vmem:[%s4 + $0x160] sm:$0xff]
    %v3896 = vld [vmem:[%s4 + $0x170] sm:$0xff]
    %v3897 = vld [vmem:[%s4 + $0x180] sm:$0xff]
    %v3898 = vld [vmem:[%s4 + $0x190] sm:$0xff]
    %v3899 = vld [vmem:[%s4 + $0x1a0] sm:$0xff]
    %v3900 = vld [vmem:[%s4 + $0x1b0] sm:$0xff]
    %v3901 = vld [vmem:[%s4 + $0x1c0] sm:$0xff]
    %v3902 = vld [vmem:[%s4 + $0x1d0] sm:$0xff]
    %v3904 = vsel %vm778, %v3894, 0
    %3906 = vmatprep.subr.mxu0 0.0
    %3907 = vmatpush1.msra.mxu0 0.0
    %3908 = vmatprep.subr.mxu0 0.0
    %3909 = vmatpush1.msra.mxu0 0.0
    %3910 = vmatprep.subr.mxu0 0.0
    %3911 = vmatpush1.msra.mxu0 0.0
    %3912 = vmatprep.subr.mxu0 0.0
    %3913 = vmatpush1.msra.mxu0 0.0
    %3914 = vmatprep.subr.mxu0 0.0
    %3915 = vmatpush1.msra.mxu0 0.0
    %3916 = vmatprep.subr.mxu0 0.0
    %3917 = vmatpush1.msra.mxu0 0.0
    %3918 = vmatprep.subr.mxu0 0.0
    %3919 = vmatpush1.msra.mxu0 0.0
    %3920 = vmatprep.subr.mxu0 0.0
    %3921 = vmatpush1.msra.mxu0 0.0
    %3922 = vmatprep.subr.mxu0 0.0
    %3923 = vmatpush1.msra.mxu0 0.0
    %3924 = vmatprep.subr.mxu0 0.0
    %3925 = vmatpush1.msra.mxu0 0.0
    %3926 = vmatprep.subr.mxu0 0.0
    %3927 = vmatpush1.msra.mxu0 0.0
    %3928 = vmatprep.subr.mxu0 0.0
    %3929 = vmatpush1.msra.mxu0 0.0
    %3930 = vmatprep.subr.mxu0 0.0
    %3931 = vmatpush1.msra.mxu0 %v3902
    %3932 = vmatprep.subr.mxu0 0.0
    %3933 = vmatpush1.msra.mxu0 %v3901
    %3934 = vmatprep.subr.mxu0 0.0
    %3935 = vmatpush1.msra.mxu0 %v3900
    %3936 = vmatprep.subr.mxu0 0.0
    %3937 = vmatpush1.msra.mxu0 %v3899
    %3938 = vmatprep.subr.mxu0 0.0
    %3939 = vmatpush2.msra.mxu0 0.0
    %3940 = vmatprep.subr.mxu0 0.0
    %3941 = vmatpush2.msra.mxu0 0.0
    %3942 = vmatprep.subr.mxu0 0.0
    %3943 = vmatpush2.msra.mxu0 0.0
    %3944 = vmatprep.subr.mxu0 0.0
    %3945 = vmatpush2.msra.mxu0 0.0
    %3946 = vmatprep.subr.mxu0 0.0
    %3947 = vmatpush2.msra.mxu0 0.0
    %3948 = vmatprep.subr.mxu0 0.0
    %3949 = vmatpush2.msra.mxu0 0.0
    %3950 = vmatprep.subr.mxu0 0.0
    %3951 = vmatpush2.msra.mxu0 0.0
    %3952 = vmatprep.subr.mxu0 0.0
    %3953 = vmatpush2.msra.mxu0 0.0
    %3954 = vmatprep.subr.mxu0 0.0
    %3955 = vmatpush2.msra.mxu0 0.0
    %3956 = vmatprep.subr.mxu0 0.0
    %3957 = vmatpush2.msra.mxu0 0.0
    %3958 = vmatprep.subr.mxu0 0.0
    %3959 = vmatpush2.msra.mxu0 0.0
    %3960 = vmatprep.subr.mxu0 0.0
    %3961 = vmatpush2.msra.mxu0 0.0
    %3962 = vmatprep.subr.mxu0 0.0
    %3963 = vmatpush2.msra.mxu0 0.0
    %3964 = vmatprep.subr.mxu0 0.0
    %3965 = vmatpush2.msra.mxu0 0.0
    %3966 = vmatprep.subr.mxu0 0.0
    %3967 = vmatpush2.msra.mxu0 0.0
    %3968 = vmatprep.subr.mxu0 0.0
    %3969 = vmatpush2.msra.mxu0 0.0
    %3970 = vmatprep.mubr.f32.mxu0 0.0
    %3971 = vmatmul.mubr.f32.gmra.mxu0 %v3904
    %v3972 = vpop.f32.mrf.mxu0
    %v3973 = vadd.f32 0.0, %v3972
    %v3974 = vpop.f32.mrf.mxu0
    %3975 = vdwg.mxu0
    %v3977 = vsel %vm778, %v3893, 0
    %3979 = vmatprep.subr.mxu0 0.0
    %3980 = vmatpush1.msra.mxu0 0.0
    %3981 = vmatprep.subr.mxu0 0.0
    %3982 = vmatpush1.msra.mxu0 0.0
    %3983 = vmatprep.subr.mxu0 0.0
    %3984 = vmatpush1.msra.mxu0 0.0
    %3985 = vmatprep.subr.mxu0 0.0
    %3986 = vmatpush1.msra.mxu0 0.0
    %3987 = vmatprep.subr.mxu0 0.0
    %3988 = vmatpush1.msra.mxu0 0.0
    %3989 = vmatprep.subr.mxu0 0.0
    %3990 = vmatpush1.msra.mxu0 0.0
    %3991 = vmatprep.subr.mxu0 0.0
    %3992 = vmatpush1.msra.mxu0 0.0
    %3993 = vmatprep.subr.mxu0 0.0
    %3994 = vmatpush1.msra.mxu0 0.0
    %3995 = vmatprep.subr.mxu0 0.0
    %3996 = vmatpush1.msra.mxu0 0.0
    %3997 = vmatprep.subr.mxu0 0.0
    %3998 = vmatpush1.msra.mxu0 0.0
    %3999 = vmatprep.subr.mxu0 0.0
    %4000 = vmatpush1.msra.mxu0 0.0
    %4001 = vmatprep.subr.mxu0 0.0
    %4002 = vmatpush1.msra.mxu0 0.0
    %4003 = vmatprep.subr.mxu0 0.0
    %4004 = vmatpush1.msra.mxu0 %v3898
    %4005 = vmatprep.subr.mxu0 0.0
    %4006 = vmatpush1.msra.mxu0 %v3897
    %4007 = vmatprep.subr.mxu0 0.0
    %4008 = vmatpush1.msra.mxu0 %v3896
    %4009 = vmatprep.subr.mxu0 0.0
    %4010 = vmatpush1.msra.mxu0 %v3895
    %4011 = vmatprep.subr.mxu0 0.0
    %4012 = vmatpush2.msra.mxu0 0.0
    %4013 = vmatprep.subr.mxu0 0.0
    %4014 = vmatpush2.msra.mxu0 0.0
    %4015 = vmatprep.subr.mxu0 0.0
    %4016 = vmatpush2.msra.mxu0 0.0
    %4017 = vmatprep.subr.mxu0 0.0
    %4018 = vmatpush2.msra.mxu0 0.0
    %4019 = vmatprep.subr.mxu0 0.0
    %4020 = vmatpush2.msra.mxu0 0.0
    %4021 = vmatprep.subr.mxu0 0.0
    %4022 = vmatpush2.msra.mxu0 0.0
    %4023 = vmatprep.subr.mxu0 0.0
    %4024 = vmatpush2.msra.mxu0 0.0
    %4025 = vmatprep.subr.mxu0 0.0
    %4026 = vmatpush2.msra.mxu0 0.0
    %4027 = vmatprep.subr.mxu0 0.0
    %4028 = vmatpush2.msra.mxu0 0.0
    %4029 = vmatprep.subr.mxu0 0.0
    %4030 = vmatpush2.msra.mxu0 0.0
    %4031 = vmatprep.subr.mxu0 0.0
    %4032 = vmatpush2.msra.mxu0 0.0
    %4033 = vmatprep.subr.mxu0 0.0
    %4034 = vmatpush2.msra.mxu0 0.0
    %4035 = vmatprep.subr.mxu0 0.0
    %4036 = vmatpush2.msra.mxu0 0.0
    %4037 = vmatprep.subr.mxu0 0.0
    %4038 = vmatpush2.msra.mxu0 0.0
    %4039 = vmatprep.subr.mxu0 0.0
    %4040 = vmatpush2.msra.mxu0 0.0
    %4041 = vmatprep.subr.mxu0 0.0
    %4042 = vmatpush2.msra.mxu0 0.0
    %4043 = vmatprep.mubr.f32.mxu0 0.0
    %4044 = vmatmul.mubr.f32.gmra.mxu0 %v3977
    %v4045 = vpop.f32.mrf.mxu0
    %v4046 = vadd.f32 %v3973, %v4045
    %v4047 = vpop.f32.mrf.mxu0
    %4048 = vdwg.mxu0
    %v4049 = vld [vmem:[%s4 + $0x1e0] ss:$0 sm:$0xff]
    %v4050 = vadd.f32 %v4046, %v4049
    %v4051 = vsel %vm1480, %v4050, -inf
    %v4052 = vrot.slane %v4051, 4
    %v4053 = vmax.f32 %v4051, %v4052
    %v4054 = vrot.slane %v4053, 2
    %v4055 = vmax.f32 %v4053, %v4054
    %v4056 = vrot.slane %v4055, 1
    %v4057 = vmax.f32 %v4055, %v4056
    %v4058 = vsub.f32 %v4050, %v4057
    %v4059 = vmul.f32 %v4058, 1.442695
    %v4060 = vpow.pop %v4059
    %v4061 = vsel %vm1480, %v4060, 0.0
    %v4062 = vrot.slane %v4061, 4
    %v4063 = vadd.f32 %v4061, %v4062
    %v4064 = vrot.slane %v4063, 2
    %v4065 = vadd.f32 %v4063, %v4064
    %v4066 = vrot.slane %v4065, 1
    %v4067 = vadd.f32 %v4065, %v4066
    %v4068 = vrcp.pop %v4067
    %v4069 = vmul.f32 %v4060, %v4068
    %4071 = vset.pattern.permute.xlu0 0
    %4072 = vperm.xlu0 %4071, %v4069
    %v4073 = vpop.permute.xlu0 %4072
    %v4075 = vmul.f32 %v4073, %v3893
    %v4076 = vsel %vm778, %v4075, 0.0
    %v4077 = vrot.slane %v4076, 4
    %v4078 = vadd.f32 %v4076, %v4077
    %v4079 = vrot.slane %v4078, 2
    %v4080 = vadd.f32 %v4078, %v4079
    %v4081 = vrot.slane %v4080, 1
    %v4082 = vadd.f32 %v4080, %v4081
    %v4083 = vmul.f32 %v4073, %v3894
    %v4084 = vsel %vm778, %v4083, 0.0
    %v4085 = vrot.slane %v4084, 4
    %v4086 = vadd.f32 %v4084, %v4085
    %v4087 = vrot.slane %v4086, 2
    %v4088 = vadd.f32 %v4086, %v4087
    %v4089 = vrot.slane %v4088, 1
    %v4090 = vadd.f32 %v4088, %v4089
    %4092 = vrot.lane.b32.xlu0 %v4090, 32
    %v4093 = vpop.permute.xlu0 %4092
    %v4095 = vsel %vm778, %v4082, %v4093
    %vm4096 = vcmask 516096
    %4097 = vst.msk [vmem:[#allocation4] sm:$0x1] %vm4096, %v4095
    // Predicated region
    $region22: #{tpu_custom_call.1} parent=1 // pred_check
      _
    $region23: #{tpu_custom_call.1} parent=1 // pred_check_branch
      %4099 = sbr.rel (0) target = $region25
    $region24: #{tpu_custom_call.1} parent=1 // pred_region
      %s4101 = ssub.s32 16, 16
      %4102 = vsyncadd [#allocation5], %s4101
      %s4104 = sshll.u32 [#allocation4], 4
      %s4105 = int_to_ptr.vmem [resolvable:$true] %s4104
      %4107 = dma.vmem_to_hbm [thread:$0]  %s4105, 16, %s5, [#allocation5]
    $region25: #{tpu_custom_call.1} parent=1 // pred_fallthru
      _
    // Predicated region
    $region26: #{tpu_custom_call.1} parent=1 // pred_check
      _
    $region27: #{tpu_custom_call.1} parent=1 // pred_check_branch
      %4109 = sbr.rel (0) target = $region29
    $region28: #{tpu_custom_call.1} parent=1 // pred_region
      %4110 = dma.done [#allocation5], 16
    $region29: #{tpu_custom_call.1} parent=1 // pred_fallthru
      _
    %4111 = vsyncpa [#allocation5], 1

</llo_original>
